<compile_context>
chip_gen: v7x
topology: tpu7x:2x2x1
jax: 0.10.0
libtpu: 0.0.40
codegen_flags: <defaults>
</compile_context>

<pallas_src>
import jax
import jax.numpy as jnp
from jax import lax
from jax.experimental import pallas as pl
from jax.experimental.pallas import tpu as pltpu

LANES = 128        # samples per lane row (vreg lane width)
HIDDEN = 64        # fc1 output / fc2 input width
CHUNK_ROWS = 64    # rows per in-kernel chunk: 8 vregs per operand, acc stays vreg-resident


def _round_up(a, b):
    return ((a + b - 1) // b) * b


def simple_nn_forward(x, w1, b1, w2, b2, *, block_rows=256):
    """Forward pass of SimpleNN.

    x: (N, 1) f32.  Params in torch layout: w1 (64,1), b1 (64,), w2 (1,64), b2 (1,).
    Params must be concrete (not jit-traced): the kernel is specialized on sign(w2)
    at build time so each hidden unit costs 4 VPU ops instead of 5.
    """
    n = x.shape[0]

    # ---- Parameter prep (tiny, done once per call) --------------------------------
    w1v = w1.reshape(HIDDEN).astype(jnp.float32)
    b1v = b1.reshape(HIDDEN).astype(jnp.float32)
    w2v = w2.reshape(HIDDEN).astype(jnp.float32)
    b2v = b2.reshape(1).astype(jnp.float32)

    # Fold fc2 weight into the pre-activation:
    #   relu(w1*x + b1) * w2 == max(p*x + q, 0)  if w2 >= 0
    #                        == min(p*x + q, 0)  if w2 <  0
    # Partition units by sign(w2) so the fully-unrolled kernel picks max/min statically.
    pos_mask = w2v >= 0.0
    order = jnp.argsort(~pos_mask)               # w2>=0 units first, then w2<0 units
    n_pos = int(jnp.sum(pos_mask))               # concrete split index (kernel-build time)
    p = (w1v * w2v)[order]
    q = (b1v * w2v)[order]

    # ---- Lane-dense batch layout ---------------------------------------------------
    rows = pl.cdiv(n, LANES)
    xf = x.reshape(n).astype(jnp.float32)
    pad = rows * LANES - n
    if pad:                                      # pad only when not already lane-aligned
        xf = jnp.pad(xf, (0, pad))
    x2 = xf.reshape(rows, LANES)

    # Block sizing: a multiple of CHUNK_ROWS; the partial final block (if any) is
    # handled by Pallas' boundary masking, so no block-multiple padding of x in HBM.
    block_rows = max(CHUNK_ROWS, min(block_rows, _round_up(rows, CHUNK_ROWS)))
    num_chunks = block_rows // CHUNK_ROWS
    grid = (pl.cdiv(rows, block_rows),)

    def kernel(p_ref, q_ref, b2_ref, x_ref, o_ref):
        # One (block_rows, 128) tile per grid step; process it in CHUNK_ROWS-row chunks
        # so x and the accumulator stay vreg-resident across all 64 hidden units.
        @pl.loop(0, num_chunks)
        def _(c):
            row0 = pl.multiple_of(c * CHUNK_ROWS, CHUNK_ROWS)
            xc = x_ref[pl.ds(row0, CHUNK_ROWS), :]
            acc0 = jnp.full_like(xc, b2_ref[0])            # fc2 bias folded into the init

            def pos_unit(j, acc):                          # units with w2[j] >= 0
                return acc + jnp.maximum(xc * p_ref[j] + q_ref[j], 0.0)

            def neg_unit(j, acc):                          # units with w2[j] < 0
                return acc + jnp.minimum(xc * p_ref[j] + q_ref[j], 0.0)

            acc = lax.fori_loop(0, n_pos, pos_unit, acc0, unroll=True)
            acc = lax.fori_loop(n_pos, HIDDEN, neg_unit, acc, unroll=True)
            o_ref[pl.ds(row0, CHUNK_ROWS), :] = acc

    smem = pl.BlockSpec(memory_space=pltpu.MemorySpace.SMEM)
    out2 = pl.pallas_call(
        kernel,
        out_shape=jax.ShapeDtypeStruct((rows, LANES), jnp.float32),
        grid=grid,
        in_specs=[smem, smem, smem,                        # p, q, b2 (grid-invariant scalars)
                  pl.BlockSpec((block_rows, LANES), lambda i: (i, 0))],
        out_specs=pl.BlockSpec((block_rows, LANES), lambda i: (i, 0)),
        compiler_params=pltpu.CompilerParams(
            dimension_semantics=("parallel",),             # v7x: 2 TensorCores split the batch
        ),
    )(p, q, b2v, x2)

    # Drop padded samples, restore the (N, 1) layout of the PyTorch module.
    return out2.reshape(rows * LANES)[:n].reshape(n, 1)


def init_params(key):
    # Torch-shaped params with nn.Linear default init: U(-1/sqrt(fan_in), +1/sqrt(fan_in)).
    k1, k2, k3, k4 = jax.random.split(key, 4)
    bound1 = 1.0                       # fc1 fan_in = 1
    bound2 = 1.0 / jnp.sqrt(64.0)      # fc2 fan_in = 64
    w1 = jax.random.uniform(k1, (HIDDEN, 1), jnp.float32, -bound1, bound1)  # fc1.weight
    b1 = jax.random.uniform(k2, (HIDDEN,),   jnp.float32, -bound1, bound1)  # fc1.bias
    w2 = jax.random.uniform(k3, (1, HIDDEN), jnp.float32, -bound2, bound2)  # fc2.weight
    b2 = jax.random.uniform(k4, (1,),        jnp.float32, -bound2, bound2)  # fc2.bias
    return w1, b1, w2, b2


if __name__ == "__main__":
    key = jax.random.PRNGKey(0)
    kx, kp = jax.random.split(key)

    # Small, deliberately ragged batch: exercises the lane-pad path and the
    # Pallas-masked partial final block (1000 samples -> 8 lane-rows, one partial tile).
    N = 1000
    x = jax.random.normal(kx, (N, 1), jnp.float32)
    w1, b1, w2, b2 = init_params(kp)

    out = simple_nn_forward(x, w1, b1, w2, b2)
    out = jax.block_until_ready(out)

    # Reference in plain JAX with the exact PyTorch forward semantics.
    ref = jnp.maximum(x @ w1.T + b1, 0.0) @ w2.T + b2
    assert out.shape == (N, 1)
    assert jnp.allclose(out, ref, atol=1e-5, rtol=1e-5)

    print("KERNEL_OK")
</pallas_src>

<mosaic_0001>
module attributes {stable_mosaic.version = 11 : i64} {
  func.func @kernel(%arg0: i32, %arg1: memref<64xf32, #tpu.memory_space<smem>>, %arg2: memref<64xf32, #tpu.memory_space<smem>>, %arg3: memref<1xf32, #tpu.memory_space<smem>>, %arg4: memref<64x128xf32, #tpu.memory_space<vmem>>, %arg5: memref<64x128xf32, #tpu.memory_space<vmem>>) attributes {dimension_semantics = [#tpu.dimension_semantics<parallel>], iteration_bounds = array<i64: 1>, scalar_prefetch = 0 : i64, scratch_operands = 0 : i64, tpu.core_type = #tpu.core_type<tc>, window_params = [{transform_indices = @transform_0, window_bounds = array<i64: 64>}, {transform_indices = @transform_1, window_bounds = array<i64: 64>}, {transform_indices = @transform_2, window_bounds = array<i64: 1>}, {transform_indices = @transform_3, window_bounds = array<i64: 64, 128>}, {transform_indices = @transform_4, window_bounds = array<i64: 64, 128>}]} {
    %c0_i32 = arith.constant 0 : i32
    %c1_i32 = arith.constant 1 : i32
    %0 = arith.muli %c0_i32, %c1_i32 : i32
    %c0_i32_0 = arith.constant 0 : i32
    %1 = arith.addi %c0_i32_0, %0 : i32
    %c64_i32 = arith.constant 64 : i32
    %2 = arith.muli %1, %c64_i32 : i32
    %3 = tpu.assume_multiple %2, 64 : i32
    %4 = arith.index_cast %3 : i32 to index
    %c0 = arith.constant 0 : index
    %5 = vector.load %arg4[%4, %c0] : memref<64x128xf32, #tpu.memory_space<vmem>>, vector<64x128xf32>
    %c0_1 = arith.constant 0 : index
    %6 = memref.load %arg3[%c0_1] : memref<1xf32, #tpu.memory_space<smem>>
    %7 = vector.broadcast %6 : f32 to vector<64x128xf32>
    %c0_i32_2 = arith.constant 0 : i32
    %8 = arith.index_cast %c0_i32_2 : i32 to index
    %9 = memref.load %arg1[%8] : memref<64xf32, #tpu.memory_space<smem>>
    %10 = vector.broadcast %9 : f32 to vector<64x128xf32>
    %11 = arith.mulf %5, %10 : vector<64x128xf32>
    %12 = arith.index_cast %c0_i32_2 : i32 to index
    %13 = memref.load %arg2[%12] : memref<64xf32, #tpu.memory_space<smem>>
    %14 = vector.broadcast %13 : f32 to vector<64x128xf32>
    %15 = arith.addf %11, %14 : vector<64x128xf32>
    %cst = arith.constant 0.000000e+00 : f32
    %16 = vector.broadcast %cst : f32 to vector<64x128xf32>
    %17 = arith.maximumf %15, %16 : vector<64x128xf32>
    %18 = arith.addf %7, %17 : vector<64x128xf32>
    %c1_i32_3 = arith.constant 1 : i32
    %19 = arith.index_cast %c1_i32_3 : i32 to index
    %20 = memref.load %arg1[%19] : memref<64xf32, #tpu.memory_space<smem>>
    %21 = vector.broadcast %20 : f32 to vector<64x128xf32>
    %22 = arith.mulf %5, %21 : vector<64x128xf32>
    %23 = arith.index_cast %c1_i32_3 : i32 to index
    %24 = memref.load %arg2[%23] : memref<64xf32, #tpu.memory_space<smem>>
    %25 = vector.broadcast %24 : f32 to vector<64x128xf32>
    %26 = arith.addf %22, %25 : vector<64x128xf32>
    %cst_4 = arith.constant 0.000000e+00 : f32
    %27 = vector.broadcast %cst_4 : f32 to vector<64x128xf32>
    %28 = arith.maximumf %26, %27 : vector<64x128xf32>
    %29 = arith.addf %18, %28 : vector<64x128xf32>
    %c2_i32 = arith.constant 2 : i32
    %30 = arith.index_cast %c2_i32 : i32 to index
    %31 = memref.load %arg1[%30] : memref<64xf32, #tpu.memory_space<smem>>
    %32 = vector.broadcast %31 : f32 to vector<64x128xf32>
    %33 = arith.mulf %5, %32 : vector<64x128xf32>
    %34 = arith.index_cast %c2_i32 : i32 to index
    %35 = memref.load %arg2[%34] : memref<64xf32, #tpu.memory_space<smem>>
    %36 = vector.broadcast %35 : f32 to vector<64x128xf32>
    %37 = arith.addf %33, %36 : vector<64x128xf32>
    %cst_5 = arith.constant 0.000000e+00 : f32
    %38 = vector.broadcast %cst_5 : f32 to vector<64x128xf32>
    %39 = arith.maximumf %37, %38 : vector<64x128xf32>
    %40 = arith.addf %29, %39 : vector<64x128xf32>
    %c3_i32 = arith.constant 3 : i32
    %41 = arith.index_cast %c3_i32 : i32 to index
    %42 = memref.load %arg1[%41] : memref<64xf32, #tpu.memory_space<smem>>
    %43 = vector.broadcast %42 : f32 to vector<64x128xf32>
    %44 = arith.mulf %5, %43 : vector<64x128xf32>
    %45 = arith.index_cast %c3_i32 : i32 to index
    %46 = memref.load %arg2[%45] : memref<64xf32, #tpu.memory_space<smem>>
    %47 = vector.broadcast %46 : f32 to vector<64x128xf32>
    %48 = arith.addf %44, %47 : vector<64x128xf32>
    %cst_6 = arith.constant 0.000000e+00 : f32
    %49 = vector.broadcast %cst_6 : f32 to vector<64x128xf32>
    %50 = arith.maximumf %48, %49 : vector<64x128xf32>
    %51 = arith.addf %40, %50 : vector<64x128xf32>
    %c4_i32 = arith.constant 4 : i32
    %52 = arith.index_cast %c4_i32 : i32 to index
    %53 = memref.load %arg1[%52] : memref<64xf32, #tpu.memory_space<smem>>
    %54 = vector.broadcast %53 : f32 to vector<64x128xf32>
    %55 = arith.mulf %5, %54 : vector<64x128xf32>
    %56 = arith.index_cast %c4_i32 : i32 to index
    %57 = memref.load %arg2[%56] : memref<64xf32, #tpu.memory_space<smem>>
    %58 = vector.broadcast %57 : f32 to vector<64x128xf32>
    %59 = arith.addf %55, %58 : vector<64x128xf32>
    %cst_7 = arith.constant 0.000000e+00 : f32
    %60 = vector.broadcast %cst_7 : f32 to vector<64x128xf32>
    %61 = arith.maximumf %59, %60 : vector<64x128xf32>
    %62 = arith.addf %51, %61 : vector<64x128xf32>
    %c5_i32 = arith.constant 5 : i32
    %63 = arith.index_cast %c5_i32 : i32 to index
    %64 = memref.load %arg1[%63] : memref<64xf32, #tpu.memory_space<smem>>
    %65 = vector.broadcast %64 : f32 to vector<64x128xf32>
    %66 = arith.mulf %5, %65 : vector<64x128xf32>
    %67 = arith.index_cast %c5_i32 : i32 to index
    %68 = memref.load %arg2[%67] : memref<64xf32, #tpu.memory_space<smem>>
    %69 = vector.broadcast %68 : f32 to vector<64x128xf32>
    %70 = arith.addf %66, %69 : vector<64x128xf32>
    %cst_8 = arith.constant 0.000000e+00 : f32
    %71 = vector.broadcast %cst_8 : f32 to vector<64x128xf32>
    %72 = arith.maximumf %70, %71 : vector<64x128xf32>
    %73 = arith.addf %62, %72 : vector<64x128xf32>
    %c6_i32 = arith.constant 6 : i32
    %74 = arith.index_cast %c6_i32 : i32 to index
    %75 = memref.load %arg1[%74] : memref<64xf32, #tpu.memory_space<smem>>
    %76 = vector.broadcast %75 : f32 to vector<64x128xf32>
    %77 = arith.mulf %5, %76 : vector<64x128xf32>
    %78 = arith.index_cast %c6_i32 : i32 to index
    %79 = memref.load %arg2[%78] : memref<64xf32, #tpu.memory_space<smem>>
    %80 = vector.broadcast %79 : f32 to vector<64x128xf32>
    %81 = arith.addf %77, %80 : vector<64x128xf32>
    %cst_9 = arith.constant 0.000000e+00 : f32
    %82 = vector.broadcast %cst_9 : f32 to vector<64x128xf32>
    %83 = arith.maximumf %81, %82 : vector<64x128xf32>
    %84 = arith.addf %73, %83 : vector<64x128xf32>
    %c7_i32 = arith.constant 7 : i32
    %85 = arith.index_cast %c7_i32 : i32 to index
    %86 = memref.load %arg1[%85] : memref<64xf32, #tpu.memory_space<smem>>
    %87 = vector.broadcast %86 : f32 to vector<64x128xf32>
    %88 = arith.mulf %5, %87 : vector<64x128xf32>
    %89 = arith.index_cast %c7_i32 : i32 to index
    %90 = memref.load %arg2[%89] : memref<64xf32, #tpu.memory_space<smem>>
    %91 = vector.broadcast %90 : f32 to vector<64x128xf32>
    %92 = arith.addf %88, %91 : vector<64x128xf32>
    %cst_10 = arith.constant 0.000000e+00 : f32
    %93 = vector.broadcast %cst_10 : f32 to vector<64x128xf32>
    %94 = arith.maximumf %92, %93 : vector<64x128xf32>
    %95 = arith.addf %84, %94 : vector<64x128xf32>
    %c8_i32 = arith.constant 8 : i32
    %96 = arith.index_cast %c8_i32 : i32 to index
    %97 = memref.load %arg1[%96] : memref<64xf32, #tpu.memory_space<smem>>
    %98 = vector.broadcast %97 : f32 to vector<64x128xf32>
    %99 = arith.mulf %5, %98 : vector<64x128xf32>
    %100 = arith.index_cast %c8_i32 : i32 to index
    %101 = memref.load %arg2[%100] : memref<64xf32, #tpu.memory_space<smem>>
    %102 = vector.broadcast %101 : f32 to vector<64x128xf32>
    %103 = arith.addf %99, %102 : vector<64x128xf32>
    %cst_11 = arith.constant 0.000000e+00 : f32
    %104 = vector.broadcast %cst_11 : f32 to vector<64x128xf32>
    %105 = arith.maximumf %103, %104 : vector<64x128xf32>
    %106 = arith.addf %95, %105 : vector<64x128xf32>
    %c9_i32 = arith.constant 9 : i32
    %107 = arith.index_cast %c9_i32 : i32 to index
    %108 = memref.load %arg1[%107] : memref<64xf32, #tpu.memory_space<smem>>
    %109 = vector.broadcast %108 : f32 to vector<64x128xf32>
    %110 = arith.mulf %5, %109 : vector<64x128xf32>
    %111 = arith.index_cast %c9_i32 : i32 to index
    %112 = memref.load %arg2[%111] : memref<64xf32, #tpu.memory_space<smem>>
    %113 = vector.broadcast %112 : f32 to vector<64x128xf32>
    %114 = arith.addf %110, %113 : vector<64x128xf32>
    %cst_12 = arith.constant 0.000000e+00 : f32
    %115 = vector.broadcast %cst_12 : f32 to vector<64x128xf32>
    %116 = arith.maximumf %114, %115 : vector<64x128xf32>
    %117 = arith.addf %106, %116 : vector<64x128xf32>
    %c10_i32 = arith.constant 10 : i32
    %118 = arith.index_cast %c10_i32 : i32 to index
    %119 = memref.load %arg1[%118] : memref<64xf32, #tpu.memory_space<smem>>
    %120 = vector.broadcast %119 : f32 to vector<64x128xf32>
    %121 = arith.mulf %5, %120 : vector<64x128xf32>
    %122 = arith.index_cast %c10_i32 : i32 to index
    %123 = memref.load %arg2[%122] : memref<64xf32, #tpu.memory_space<smem>>
    %124 = vector.broadcast %123 : f32 to vector<64x128xf32>
    %125 = arith.addf %121, %124 : vector<64x128xf32>
    %cst_13 = arith.constant 0.000000e+00 : f32
    %126 = vector.broadcast %cst_13 : f32 to vector<64x128xf32>
    %127 = arith.maximumf %125, %126 : vector<64x128xf32>
    %128 = arith.addf %117, %127 : vector<64x128xf32>
    %c11_i32 = arith.constant 11 : i32
    %129 = arith.index_cast %c11_i32 : i32 to index
    %130 = memref.load %arg1[%129] : memref<64xf32, #tpu.memory_space<smem>>
    %131 = vector.broadcast %130 : f32 to vector<64x128xf32>
    %132 = arith.mulf %5, %131 : vector<64x128xf32>
    %133 = arith.index_cast %c11_i32 : i32 to index
    %134 = memref.load %arg2[%133] : memref<64xf32, #tpu.memory_space<smem>>
    %135 = vector.broadcast %134 : f32 to vector<64x128xf32>
    %136 = arith.addf %132, %135 : vector<64x128xf32>
    %cst_14 = arith.constant 0.000000e+00 : f32
    %137 = vector.broadcast %cst_14 : f32 to vector<64x128xf32>
    %138 = arith.maximumf %136, %137 : vector<64x128xf32>
    %139 = arith.addf %128, %138 : vector<64x128xf32>
    %c12_i32 = arith.constant 12 : i32
    %140 = arith.index_cast %c12_i32 : i32 to index
    %141 = memref.load %arg1[%140] : memref<64xf32, #tpu.memory_space<smem>>
    %142 = vector.broadcast %141 : f32 to vector<64x128xf32>
    %143 = arith.mulf %5, %142 : vector<64x128xf32>
    %144 = arith.index_cast %c12_i32 : i32 to index
    %145 = memref.load %arg2[%144] : memref<64xf32, #tpu.memory_space<smem>>
    %146 = vector.broadcast %145 : f32 to vector<64x128xf32>
    %147 = arith.addf %143, %146 : vector<64x128xf32>
    %cst_15 = arith.constant 0.000000e+00 : f32
    %148 = vector.broadcast %cst_15 : f32 to vector<64x128xf32>
    %149 = arith.maximumf %147, %148 : vector<64x128xf32>
    %150 = arith.addf %139, %149 : vector<64x128xf32>
    %c13_i32 = arith.constant 13 : i32
    %151 = arith.index_cast %c13_i32 : i32 to index
    %152 = memref.load %arg1[%151] : memref<64xf32, #tpu.memory_space<smem>>
    %153 = vector.broadcast %152 : f32 to vector<64x128xf32>
    %154 = arith.mulf %5, %153 : vector<64x128xf32>
    %155 = arith.index_cast %c13_i32 : i32 to index
    %156 = memref.load %arg2[%155] : memref<64xf32, #tpu.memory_space<smem>>
    %157 = vector.broadcast %156 : f32 to vector<64x128xf32>
    %158 = arith.addf %154, %157 : vector<64x128xf32>
    %cst_16 = arith.constant 0.000000e+00 : f32
    %159 = vector.broadcast %cst_16 : f32 to vector<64x128xf32>
    %160 = arith.maximumf %158, %159 : vector<64x128xf32>
    %161 = arith.addf %150, %160 : vector<64x128xf32>
    %c14_i32 = arith.constant 14 : i32
    %162 = arith.index_cast %c14_i32 : i32 to index
    %163 = memref.load %arg1[%162] : memref<64xf32, #tpu.memory_space<smem>>
    %164 = vector.broadcast %163 : f32 to vector<64x128xf32>
    %165 = arith.mulf %5, %164 : vector<64x128xf32>
    %166 = arith.index_cast %c14_i32 : i32 to index
    %167 = memref.load %arg2[%166] : memref<64xf32, #tpu.memory_space<smem>>
    %168 = vector.broadcast %167 : f32 to vector<64x128xf32>
    %169 = arith.addf %165, %168 : vector<64x128xf32>
    %cst_17 = arith.constant 0.000000e+00 : f32
    %170 = vector.broadcast %cst_17 : f32 to vector<64x128xf32>
    %171 = arith.maximumf %169, %170 : vector<64x128xf32>
    %172 = arith.addf %161, %171 : vector<64x128xf32>
    %c15_i32 = arith.constant 15 : i32
    %173 = arith.index_cast %c15_i32 : i32 to index
    %174 = memref.load %arg1[%173] : memref<64xf32, #tpu.memory_space<smem>>
    %175 = vector.broadcast %174 : f32 to vector<64x128xf32>
    %176 = arith.mulf %5, %175 : vector<64x128xf32>
    %177 = arith.index_cast %c15_i32 : i32 to index
    %178 = memref.load %arg2[%177] : memref<64xf32, #tpu.memory_space<smem>>
    %179 = vector.broadcast %178 : f32 to vector<64x128xf32>
    %180 = arith.addf %176, %179 : vector<64x128xf32>
    %cst_18 = arith.constant 0.000000e+00 : f32
    %181 = vector.broadcast %cst_18 : f32 to vector<64x128xf32>
    %182 = arith.maximumf %180, %181 : vector<64x128xf32>
    %183 = arith.addf %172, %182 : vector<64x128xf32>
    %c16_i32 = arith.constant 16 : i32
    %184 = arith.index_cast %c16_i32 : i32 to index
    %185 = memref.load %arg1[%184] : memref<64xf32, #tpu.memory_space<smem>>
    %186 = vector.broadcast %185 : f32 to vector<64x128xf32>
    %187 = arith.mulf %5, %186 : vector<64x128xf32>
    %188 = arith.index_cast %c16_i32 : i32 to index
    %189 = memref.load %arg2[%188] : memref<64xf32, #tpu.memory_space<smem>>
    %190 = vector.broadcast %189 : f32 to vector<64x128xf32>
    %191 = arith.addf %187, %190 : vector<64x128xf32>
    %cst_19 = arith.constant 0.000000e+00 : f32
    %192 = vector.broadcast %cst_19 : f32 to vector<64x128xf32>
    %193 = arith.maximumf %191, %192 : vector<64x128xf32>
    %194 = arith.addf %183, %193 : vector<64x128xf32>
    %c17_i32 = arith.constant 17 : i32
    %195 = arith.index_cast %c17_i32 : i32 to index
    %196 = memref.load %arg1[%195] : memref<64xf32, #tpu.memory_space<smem>>
    %197 = vector.broadcast %196 : f32 to vector<64x128xf32>
    %198 = arith.mulf %5, %197 : vector<64x128xf32>
    %199 = arith.index_cast %c17_i32 : i32 to index
    %200 = memref.load %arg2[%199] : memref<64xf32, #tpu.memory_space<smem>>
    %201 = vector.broadcast %200 : f32 to vector<64x128xf32>
    %202 = arith.addf %198, %201 : vector<64x128xf32>
    %cst_20 = arith.constant 0.000000e+00 : f32
    %203 = vector.broadcast %cst_20 : f32 to vector<64x128xf32>
    %204 = arith.maximumf %202, %203 : vector<64x128xf32>
    %205 = arith.addf %194, %204 : vector<64x128xf32>
    %c18_i32 = arith.constant 18 : i32
    %206 = arith.index_cast %c18_i32 : i32 to index
    %207 = memref.load %arg1[%206] : memref<64xf32, #tpu.memory_space<smem>>
    %208 = vector.broadcast %207 : f32 to vector<64x128xf32>
    %209 = arith.mulf %5, %208 : vector<64x128xf32>
    %210 = arith.index_cast %c18_i32 : i32 to index
    %211 = memref.load %arg2[%210] : memref<64xf32, #tpu.memory_space<smem>>
    %212 = vector.broadcast %211 : f32 to vector<64x128xf32>
    %213 = arith.addf %209, %212 : vector<64x128xf32>
    %cst_21 = arith.constant 0.000000e+00 : f32
    %214 = vector.broadcast %cst_21 : f32 to vector<64x128xf32>
    %215 = arith.maximumf %213, %214 : vector<64x128xf32>
    %216 = arith.addf %205, %215 : vector<64x128xf32>
    %c19_i32 = arith.constant 19 : i32
    %217 = arith.index_cast %c19_i32 : i32 to index
    %218 = memref.load %arg1[%217] : memref<64xf32, #tpu.memory_space<smem>>
    %219 = vector.broadcast %218 : f32 to vector<64x128xf32>
    %220 = arith.mulf %5, %219 : vector<64x128xf32>
    %221 = arith.index_cast %c19_i32 : i32 to index
    %222 = memref.load %arg2[%221] : memref<64xf32, #tpu.memory_space<smem>>
    %223 = vector.broadcast %222 : f32 to vector<64x128xf32>
    %224 = arith.addf %220, %223 : vector<64x128xf32>
    %cst_22 = arith.constant 0.000000e+00 : f32
    %225 = vector.broadcast %cst_22 : f32 to vector<64x128xf32>
    %226 = arith.maximumf %224, %225 : vector<64x128xf32>
    %227 = arith.addf %216, %226 : vector<64x128xf32>
    %c20_i32 = arith.constant 20 : i32
    %228 = arith.index_cast %c20_i32 : i32 to index
    %229 = memref.load %arg1[%228] : memref<64xf32, #tpu.memory_space<smem>>
    %230 = vector.broadcast %229 : f32 to vector<64x128xf32>
    %231 = arith.mulf %5, %230 : vector<64x128xf32>
    %232 = arith.index_cast %c20_i32 : i32 to index
    %233 = memref.load %arg2[%232] : memref<64xf32, #tpu.memory_space<smem>>
    %234 = vector.broadcast %233 : f32 to vector<64x128xf32>
    %235 = arith.addf %231, %234 : vector<64x128xf32>
    %cst_23 = arith.constant 0.000000e+00 : f32
    %236 = vector.broadcast %cst_23 : f32 to vector<64x128xf32>
    %237 = arith.maximumf %235, %236 : vector<64x128xf32>
    %238 = arith.addf %227, %237 : vector<64x128xf32>
    %c21_i32 = arith.constant 21 : i32
    %239 = arith.index_cast %c21_i32 : i32 to index
    %240 = memref.load %arg1[%239] : memref<64xf32, #tpu.memory_space<smem>>
    %241 = vector.broadcast %240 : f32 to vector<64x128xf32>
    %242 = arith.mulf %5, %241 : vector<64x128xf32>
    %243 = arith.index_cast %c21_i32 : i32 to index
    %244 = memref.load %arg2[%243] : memref<64xf32, #tpu.memory_space<smem>>
    %245 = vector.broadcast %244 : f32 to vector<64x128xf32>
    %246 = arith.addf %242, %245 : vector<64x128xf32>
    %cst_24 = arith.constant 0.000000e+00 : f32
    %247 = vector.broadcast %cst_24 : f32 to vector<64x128xf32>
    %248 = arith.maximumf %246, %247 : vector<64x128xf32>
    %249 = arith.addf %238, %248 : vector<64x128xf32>
    %c22_i32 = arith.constant 22 : i32
    %250 = arith.index_cast %c22_i32 : i32 to index
    %251 = memref.load %arg1[%250] : memref<64xf32, #tpu.memory_space<smem>>
    %252 = vector.broadcast %251 : f32 to vector<64x128xf32>
    %253 = arith.mulf %5, %252 : vector<64x128xf32>
    %254 = arith.index_cast %c22_i32 : i32 to index
    %255 = memref.load %arg2[%254] : memref<64xf32, #tpu.memory_space<smem>>
    %256 = vector.broadcast %255 : f32 to vector<64x128xf32>
    %257 = arith.addf %253, %256 : vector<64x128xf32>
    %cst_25 = arith.constant 0.000000e+00 : f32
    %258 = vector.broadcast %cst_25 : f32 to vector<64x128xf32>
    %259 = arith.maximumf %257, %258 : vector<64x128xf32>
    %260 = arith.addf %249, %259 : vector<64x128xf32>
    %c23_i32 = arith.constant 23 : i32
    %261 = arith.index_cast %c23_i32 : i32 to index
    %262 = memref.load %arg1[%261] : memref<64xf32, #tpu.memory_space<smem>>
    %263 = vector.broadcast %262 : f32 to vector<64x128xf32>
    %264 = arith.mulf %5, %263 : vector<64x128xf32>
    %265 = arith.index_cast %c23_i32 : i32 to index
    %266 = memref.load %arg2[%265] : memref<64xf32, #tpu.memory_space<smem>>
    %267 = vector.broadcast %266 : f32 to vector<64x128xf32>
    %268 = arith.addf %264, %267 : vector<64x128xf32>
    %cst_26 = arith.constant 0.000000e+00 : f32
    %269 = vector.broadcast %cst_26 : f32 to vector<64x128xf32>
    %270 = arith.maximumf %268, %269 : vector<64x128xf32>
    %271 = arith.addf %260, %270 : vector<64x128xf32>
    %c24_i32 = arith.constant 24 : i32
    %272 = arith.index_cast %c24_i32 : i32 to index
    %273 = memref.load %arg1[%272] : memref<64xf32, #tpu.memory_space<smem>>
    %274 = vector.broadcast %273 : f32 to vector<64x128xf32>
    %275 = arith.mulf %5, %274 : vector<64x128xf32>
    %276 = arith.index_cast %c24_i32 : i32 to index
    %277 = memref.load %arg2[%276] : memref<64xf32, #tpu.memory_space<smem>>
    %278 = vector.broadcast %277 : f32 to vector<64x128xf32>
    %279 = arith.addf %275, %278 : vector<64x128xf32>
    %cst_27 = arith.constant 0.000000e+00 : f32
    %280 = vector.broadcast %cst_27 : f32 to vector<64x128xf32>
    %281 = arith.maximumf %279, %280 : vector<64x128xf32>
    %282 = arith.addf %271, %281 : vector<64x128xf32>
    %c25_i32 = arith.constant 25 : i32
    %283 = arith.index_cast %c25_i32 : i32 to index
    %284 = memref.load %arg1[%283] : memref<64xf32, #tpu.memory_space<smem>>
    %285 = vector.broadcast %284 : f32 to vector<64x128xf32>
    %286 = arith.mulf %5, %285 : vector<64x128xf32>
    %287 = arith.index_cast %c25_i32 : i32 to index
    %288 = memref.load %arg2[%287] : memref<64xf32, #tpu.memory_space<smem>>
    %289 = vector.broadcast %288 : f32 to vector<64x128xf32>
    %290 = arith.addf %286, %289 : vector<64x128xf32>
    %cst_28 = arith.constant 0.000000e+00 : f32
    %291 = vector.broadcast %cst_28 : f32 to vector<64x128xf32>
    %292 = arith.maximumf %290, %291 : vector<64x128xf32>
    %293 = arith.addf %282, %292 : vector<64x128xf32>
    %c26_i32 = arith.constant 26 : i32
    %294 = arith.index_cast %c26_i32 : i32 to index
    %295 = memref.load %arg1[%294] : memref<64xf32, #tpu.memory_space<smem>>
    %296 = vector.broadcast %295 : f32 to vector<64x128xf32>
    %297 = arith.mulf %5, %296 : vector<64x128xf32>
    %298 = arith.index_cast %c26_i32 : i32 to index
    %299 = memref.load %arg2[%298] : memref<64xf32, #tpu.memory_space<smem>>
    %300 = vector.broadcast %299 : f32 to vector<64x128xf32>
    %301 = arith.addf %297, %300 : vector<64x128xf32>
    %cst_29 = arith.constant 0.000000e+00 : f32
    %302 = vector.broadcast %cst_29 : f32 to vector<64x128xf32>
    %303 = arith.maximumf %301, %302 : vector<64x128xf32>
    %304 = arith.addf %293, %303 : vector<64x128xf32>
    %c27_i32 = arith.constant 27 : i32
    %305 = arith.index_cast %c27_i32 : i32 to index
    %306 = memref.load %arg1[%305] : memref<64xf32, #tpu.memory_space<smem>>
    %307 = vector.broadcast %306 : f32 to vector<64x128xf32>
    %308 = arith.mulf %5, %307 : vector<64x128xf32>
    %309 = arith.index_cast %c27_i32 : i32 to index
    %310 = memref.load %arg2[%309] : memref<64xf32, #tpu.memory_space<smem>>
    %311 = vector.broadcast %310 : f32 to vector<64x128xf32>
    %312 = arith.addf %308, %311 : vector<64x128xf32>
    %cst_30 = arith.constant 0.000000e+00 : f32
    %313 = vector.broadcast %cst_30 : f32 to vector<64x128xf32>
    %314 = arith.maximumf %312, %313 : vector<64x128xf32>
    %315 = arith.addf %304, %314 : vector<64x128xf32>
    %c28_i32 = arith.constant 28 : i32
    %316 = arith.index_cast %c28_i32 : i32 to index
    %317 = memref.load %arg1[%316] : memref<64xf32, #tpu.memory_space<smem>>
    %318 = vector.broadcast %317 : f32 to vector<64x128xf32>
    %319 = arith.mulf %5, %318 : vector<64x128xf32>
    %320 = arith.index_cast %c28_i32 : i32 to index
    %321 = memref.load %arg2[%320] : memref<64xf32, #tpu.memory_space<smem>>
    %322 = vector.broadcast %321 : f32 to vector<64x128xf32>
    %323 = arith.addf %319, %322 : vector<64x128xf32>
    %cst_31 = arith.constant 0.000000e+00 : f32
    %324 = vector.broadcast %cst_31 : f32 to vector<64x128xf32>
    %325 = arith.maximumf %323, %324 : vector<64x128xf32>
    %326 = arith.addf %315, %325 : vector<64x128xf32>
    %c29_i32 = arith.constant 29 : i32
    %c29_i32_32 = arith.constant 29 : i32
    %327 = arith.index_cast %c29_i32_32 : i32 to index
    %328 = memref.load %arg1[%327] : memref<64xf32, #tpu.memory_space<smem>>
    %329 = vector.broadcast %328 : f32 to vector<64x128xf32>
    %330 = arith.mulf %5, %329 : vector<64x128xf32>
    %331 = arith.index_cast %c29_i32_32 : i32 to index
    %332 = memref.load %arg2[%331] : memref<64xf32, #tpu.memory_space<smem>>
    %333 = vector.broadcast %332 : f32 to vector<64x128xf32>
    %334 = arith.addf %330, %333 : vector<64x128xf32>
    %cst_33 = arith.constant 0.000000e+00 : f32
    %335 = vector.broadcast %cst_33 : f32 to vector<64x128xf32>
    %336 = arith.minimumf %334, %335 : vector<64x128xf32>
    %337 = arith.addf %326, %336 : vector<64x128xf32>
    %c30_i32 = arith.constant 30 : i32
    %338 = arith.index_cast %c30_i32 : i32 to index
    %339 = memref.load %arg1[%338] : memref<64xf32, #tpu.memory_space<smem>>
    %340 = vector.broadcast %339 : f32 to vector<64x128xf32>
    %341 = arith.mulf %5, %340 : vector<64x128xf32>
    %342 = arith.index_cast %c30_i32 : i32 to index
    %343 = memref.load %arg2[%342] : memref<64xf32, #tpu.memory_space<smem>>
    %344 = vector.broadcast %343 : f32 to vector<64x128xf32>
    %345 = arith.addf %341, %344 : vector<64x128xf32>
    %cst_34 = arith.constant 0.000000e+00 : f32
    %346 = vector.broadcast %cst_34 : f32 to vector<64x128xf32>
    %347 = arith.minimumf %345, %346 : vector<64x128xf32>
    %348 = arith.addf %337, %347 : vector<64x128xf32>
    %c31_i32 = arith.constant 31 : i32
    %349 = arith.index_cast %c31_i32 : i32 to index
    %350 = memref.load %arg1[%349] : memref<64xf32, #tpu.memory_space<smem>>
    %351 = vector.broadcast %350 : f32 to vector<64x128xf32>
    %352 = arith.mulf %5, %351 : vector<64x128xf32>
    %353 = arith.index_cast %c31_i32 : i32 to index
    %354 = memref.load %arg2[%353] : memref<64xf32, #tpu.memory_space<smem>>
    %355 = vector.broadcast %354 : f32 to vector<64x128xf32>
    %356 = arith.addf %352, %355 : vector<64x128xf32>
    %cst_35 = arith.constant 0.000000e+00 : f32
    %357 = vector.broadcast %cst_35 : f32 to vector<64x128xf32>
    %358 = arith.minimumf %356, %357 : vector<64x128xf32>
    %359 = arith.addf %348, %358 : vector<64x128xf32>
    %c32_i32 = arith.constant 32 : i32
    %360 = arith.index_cast %c32_i32 : i32 to index
    %361 = memref.load %arg1[%360] : memref<64xf32, #tpu.memory_space<smem>>
    %362 = vector.broadcast %361 : f32 to vector<64x128xf32>
    %363 = arith.mulf %5, %362 : vector<64x128xf32>
    %364 = arith.index_cast %c32_i32 : i32 to index
    %365 = memref.load %arg2[%364] : memref<64xf32, #tpu.memory_space<smem>>
    %366 = vector.broadcast %365 : f32 to vector<64x128xf32>
    %367 = arith.addf %363, %366 : vector<64x128xf32>
    %cst_36 = arith.constant 0.000000e+00 : f32
    %368 = vector.broadcast %cst_36 : f32 to vector<64x128xf32>
    %369 = arith.minimumf %367, %368 : vector<64x128xf32>
    %370 = arith.addf %359, %369 : vector<64x128xf32>
    %c33_i32 = arith.constant 33 : i32
    %371 = arith.index_cast %c33_i32 : i32 to index
    %372 = memref.load %arg1[%371] : memref<64xf32, #tpu.memory_space<smem>>
    %373 = vector.broadcast %372 : f32 to vector<64x128xf32>
    %374 = arith.mulf %5, %373 : vector<64x128xf32>
    %375 = arith.index_cast %c33_i32 : i32 to index
    %376 = memref.load %arg2[%375] : memref<64xf32, #tpu.memory_space<smem>>
    %377 = vector.broadcast %376 : f32 to vector<64x128xf32>
    %378 = arith.addf %374, %377 : vector<64x128xf32>
    %cst_37 = arith.constant 0.000000e+00 : f32
    %379 = vector.broadcast %cst_37 : f32 to vector<64x128xf32>
    %380 = arith.minimumf %378, %379 : vector<64x128xf32>
    %381 = arith.addf %370, %380 : vector<64x128xf32>
    %c34_i32 = arith.constant 34 : i32
    %382 = arith.index_cast %c34_i32 : i32 to index
    %383 = memref.load %arg1[%382] : memref<64xf32, #tpu.memory_space<smem>>
    %384 = vector.broadcast %383 : f32 to vector<64x128xf32>
    %385 = arith.mulf %5, %384 : vector<64x128xf32>
    %386 = arith.index_cast %c34_i32 : i32 to index
    %387 = memref.load %arg2[%386] : memref<64xf32, #tpu.memory_space<smem>>
    %388 = vector.broadcast %387 : f32 to vector<64x128xf32>
    %389 = arith.addf %385, %388 : vector<64x128xf32>
    %cst_38 = arith.constant 0.000000e+00 : f32
    %390 = vector.broadcast %cst_38 : f32 to vector<64x128xf32>
    %391 = arith.minimumf %389, %390 : vector<64x128xf32>
    %392 = arith.addf %381, %391 : vector<64x128xf32>
    %c35_i32 = arith.constant 35 : i32
    %393 = arith.index_cast %c35_i32 : i32 to index
    %394 = memref.load %arg1[%393] : memref<64xf32, #tpu.memory_space<smem>>
    %395 = vector.broadcast %394 : f32 to vector<64x128xf32>
    %396 = arith.mulf %5, %395 : vector<64x128xf32>
    %397 = arith.index_cast %c35_i32 : i32 to index
    %398 = memref.load %arg2[%397] : memref<64xf32, #tpu.memory_space<smem>>
    %399 = vector.broadcast %398 : f32 to vector<64x128xf32>
    %400 = arith.addf %396, %399 : vector<64x128xf32>
    %cst_39 = arith.constant 0.000000e+00 : f32
    %401 = vector.broadcast %cst_39 : f32 to vector<64x128xf32>
    %402 = arith.minimumf %400, %401 : vector<64x128xf32>
    %403 = arith.addf %392, %402 : vector<64x128xf32>
    %c36_i32 = arith.constant 36 : i32
    %404 = arith.index_cast %c36_i32 : i32 to index
    %405 = memref.load %arg1[%404] : memref<64xf32, #tpu.memory_space<smem>>
    %406 = vector.broadcast %405 : f32 to vector<64x128xf32>
    %407 = arith.mulf %5, %406 : vector<64x128xf32>
    %408 = arith.index_cast %c36_i32 : i32 to index
    %409 = memref.load %arg2[%408] : memref<64xf32, #tpu.memory_space<smem>>
    %410 = vector.broadcast %409 : f32 to vector<64x128xf32>
    %411 = arith.addf %407, %410 : vector<64x128xf32>
    %cst_40 = arith.constant 0.000000e+00 : f32
    %412 = vector.broadcast %cst_40 : f32 to vector<64x128xf32>
    %413 = arith.minimumf %411, %412 : vector<64x128xf32>
    %414 = arith.addf %403, %413 : vector<64x128xf32>
    %c37_i32 = arith.constant 37 : i32
    %415 = arith.index_cast %c37_i32 : i32 to index
    %416 = memref.load %arg1[%415] : memref<64xf32, #tpu.memory_space<smem>>
    %417 = vector.broadcast %416 : f32 to vector<64x128xf32>
    %418 = arith.mulf %5, %417 : vector<64x128xf32>
    %419 = arith.index_cast %c37_i32 : i32 to index
    %420 = memref.load %arg2[%419] : memref<64xf32, #tpu.memory_space<smem>>
    %421 = vector.broadcast %420 : f32 to vector<64x128xf32>
    %422 = arith.addf %418, %421 : vector<64x128xf32>
    %cst_41 = arith.constant 0.000000e+00 : f32
    %423 = vector.broadcast %cst_41 : f32 to vector<64x128xf32>
    %424 = arith.minimumf %422, %423 : vector<64x128xf32>
    %425 = arith.addf %414, %424 : vector<64x128xf32>
    %c38_i32 = arith.constant 38 : i32
    %426 = arith.index_cast %c38_i32 : i32 to index
    %427 = memref.load %arg1[%426] : memref<64xf32, #tpu.memory_space<smem>>
    %428 = vector.broadcast %427 : f32 to vector<64x128xf32>
    %429 = arith.mulf %5, %428 : vector<64x128xf32>
    %430 = arith.index_cast %c38_i32 : i32 to index
    %431 = memref.load %arg2[%430] : memref<64xf32, #tpu.memory_space<smem>>
    %432 = vector.broadcast %431 : f32 to vector<64x128xf32>
    %433 = arith.addf %429, %432 : vector<64x128xf32>
    %cst_42 = arith.constant 0.000000e+00 : f32
    %434 = vector.broadcast %cst_42 : f32 to vector<64x128xf32>
    %435 = arith.minimumf %433, %434 : vector<64x128xf32>
    %436 = arith.addf %425, %435 : vector<64x128xf32>
    %c39_i32 = arith.constant 39 : i32
    %437 = arith.index_cast %c39_i32 : i32 to index
    %438 = memref.load %arg1[%437] : memref<64xf32, #tpu.memory_space<smem>>
    %439 = vector.broadcast %438 : f32 to vector<64x128xf32>
    %440 = arith.mulf %5, %439 : vector<64x128xf32>
    %441 = arith.index_cast %c39_i32 : i32 to index
    %442 = memref.load %arg2[%441] : memref<64xf32, #tpu.memory_space<smem>>
    %443 = vector.broadcast %442 : f32 to vector<64x128xf32>
    %444 = arith.addf %440, %443 : vector<64x128xf32>
    %cst_43 = arith.constant 0.000000e+00 : f32
    %445 = vector.broadcast %cst_43 : f32 to vector<64x128xf32>
    %446 = arith.minimumf %444, %445 : vector<64x128xf32>
    %447 = arith.addf %436, %446 : vector<64x128xf32>
    %c40_i32 = arith.constant 40 : i32
    %448 = arith.index_cast %c40_i32 : i32 to index
    %449 = memref.load %arg1[%448] : memref<64xf32, #tpu.memory_space<smem>>
    %450 = vector.broadcast %449 : f32 to vector<64x128xf32>
    %451 = arith.mulf %5, %450 : vector<64x128xf32>
    %452 = arith.index_cast %c40_i32 : i32 to index
    %453 = memref.load %arg2[%452] : memref<64xf32, #tpu.memory_space<smem>>
    %454 = vector.broadcast %453 : f32 to vector<64x128xf32>
    %455 = arith.addf %451, %454 : vector<64x128xf32>
    %cst_44 = arith.constant 0.000000e+00 : f32
    %456 = vector.broadcast %cst_44 : f32 to vector<64x128xf32>
    %457 = arith.minimumf %455, %456 : vector<64x128xf32>
    %458 = arith.addf %447, %457 : vector<64x128xf32>
    %c41_i32 = arith.constant 41 : i32
    %459 = arith.index_cast %c41_i32 : i32 to index
    %460 = memref.load %arg1[%459] : memref<64xf32, #tpu.memory_space<smem>>
    %461 = vector.broadcast %460 : f32 to vector<64x128xf32>
    %462 = arith.mulf %5, %461 : vector<64x128xf32>
    %463 = arith.index_cast %c41_i32 : i32 to index
    %464 = memref.load %arg2[%463] : memref<64xf32, #tpu.memory_space<smem>>
    %465 = vector.broadcast %464 : f32 to vector<64x128xf32>
    %466 = arith.addf %462, %465 : vector<64x128xf32>
    %cst_45 = arith.constant 0.000000e+00 : f32
    %467 = vector.broadcast %cst_45 : f32 to vector<64x128xf32>
    %468 = arith.minimumf %466, %467 : vector<64x128xf32>
    %469 = arith.addf %458, %468 : vector<64x128xf32>
    %c42_i32 = arith.constant 42 : i32
    %470 = arith.index_cast %c42_i32 : i32 to index
    %471 = memref.load %arg1[%470] : memref<64xf32, #tpu.memory_space<smem>>
    %472 = vector.broadcast %471 : f32 to vector<64x128xf32>
    %473 = arith.mulf %5, %472 : vector<64x128xf32>
    %474 = arith.index_cast %c42_i32 : i32 to index
    %475 = memref.load %arg2[%474] : memref<64xf32, #tpu.memory_space<smem>>
    %476 = vector.broadcast %475 : f32 to vector<64x128xf32>
    %477 = arith.addf %473, %476 : vector<64x128xf32>
    %cst_46 = arith.constant 0.000000e+00 : f32
    %478 = vector.broadcast %cst_46 : f32 to vector<64x128xf32>
    %479 = arith.minimumf %477, %478 : vector<64x128xf32>
    %480 = arith.addf %469, %479 : vector<64x128xf32>
    %c43_i32 = arith.constant 43 : i32
    %481 = arith.index_cast %c43_i32 : i32 to index
    %482 = memref.load %arg1[%481] : memref<64xf32, #tpu.memory_space<smem>>
    %483 = vector.broadcast %482 : f32 to vector<64x128xf32>
    %484 = arith.mulf %5, %483 : vector<64x128xf32>
    %485 = arith.index_cast %c43_i32 : i32 to index
    %486 = memref.load %arg2[%485] : memref<64xf32, #tpu.memory_space<smem>>
    %487 = vector.broadcast %486 : f32 to vector<64x128xf32>
    %488 = arith.addf %484, %487 : vector<64x128xf32>
    %cst_47 = arith.constant 0.000000e+00 : f32
    %489 = vector.broadcast %cst_47 : f32 to vector<64x128xf32>
    %490 = arith.minimumf %488, %489 : vector<64x128xf32>
    %491 = arith.addf %480, %490 : vector<64x128xf32>
    %c44_i32 = arith.constant 44 : i32
    %492 = arith.index_cast %c44_i32 : i32 to index
    %493 = memref.load %arg1[%492] : memref<64xf32, #tpu.memory_space<smem>>
    %494 = vector.broadcast %493 : f32 to vector<64x128xf32>
    %495 = arith.mulf %5, %494 : vector<64x128xf32>
    %496 = arith.index_cast %c44_i32 : i32 to index
    %497 = memref.load %arg2[%496] : memref<64xf32, #tpu.memory_space<smem>>
    %498 = vector.broadcast %497 : f32 to vector<64x128xf32>
    %499 = arith.addf %495, %498 : vector<64x128xf32>
    %cst_48 = arith.constant 0.000000e+00 : f32
    %500 = vector.broadcast %cst_48 : f32 to vector<64x128xf32>
    %501 = arith.minimumf %499, %500 : vector<64x128xf32>
    %502 = arith.addf %491, %501 : vector<64x128xf32>
    %c45_i32 = arith.constant 45 : i32
    %503 = arith.index_cast %c45_i32 : i32 to index
    %504 = memref.load %arg1[%503] : memref<64xf32, #tpu.memory_space<smem>>
    %505 = vector.broadcast %504 : f32 to vector<64x128xf32>
    %506 = arith.mulf %5, %505 : vector<64x128xf32>
    %507 = arith.index_cast %c45_i32 : i32 to index
    %508 = memref.load %arg2[%507] : memref<64xf32, #tpu.memory_space<smem>>
    %509 = vector.broadcast %508 : f32 to vector<64x128xf32>
    %510 = arith.addf %506, %509 : vector<64x128xf32>
    %cst_49 = arith.constant 0.000000e+00 : f32
    %511 = vector.broadcast %cst_49 : f32 to vector<64x128xf32>
    %512 = arith.minimumf %510, %511 : vector<64x128xf32>
    %513 = arith.addf %502, %512 : vector<64x128xf32>
    %c46_i32 = arith.constant 46 : i32
    %514 = arith.index_cast %c46_i32 : i32 to index
    %515 = memref.load %arg1[%514] : memref<64xf32, #tpu.memory_space<smem>>
    %516 = vector.broadcast %515 : f32 to vector<64x128xf32>
    %517 = arith.mulf %5, %516 : vector<64x128xf32>
    %518 = arith.index_cast %c46_i32 : i32 to index
    %519 = memref.load %arg2[%518] : memref<64xf32, #tpu.memory_space<smem>>
    %520 = vector.broadcast %519 : f32 to vector<64x128xf32>
    %521 = arith.addf %517, %520 : vector<64x128xf32>
    %cst_50 = arith.constant 0.000000e+00 : f32
    %522 = vector.broadcast %cst_50 : f32 to vector<64x128xf32>
    %523 = arith.minimumf %521, %522 : vector<64x128xf32>
    %524 = arith.addf %513, %523 : vector<64x128xf32>
    %c47_i32 = arith.constant 47 : i32
    %525 = arith.index_cast %c47_i32 : i32 to index
    %526 = memref.load %arg1[%525] : memref<64xf32, #tpu.memory_space<smem>>
    %527 = vector.broadcast %526 : f32 to vector<64x128xf32>
    %528 = arith.mulf %5, %527 : vector<64x128xf32>
    %529 = arith.index_cast %c47_i32 : i32 to index
    %530 = memref.load %arg2[%529] : memref<64xf32, #tpu.memory_space<smem>>
    %531 = vector.broadcast %530 : f32 to vector<64x128xf32>
    %532 = arith.addf %528, %531 : vector<64x128xf32>
    %cst_51 = arith.constant 0.000000e+00 : f32
    %533 = vector.broadcast %cst_51 : f32 to vector<64x128xf32>
    %534 = arith.minimumf %532, %533 : vector<64x128xf32>
    %535 = arith.addf %524, %534 : vector<64x128xf32>
    %c48_i32 = arith.constant 48 : i32
    %536 = arith.index_cast %c48_i32 : i32 to index
    %537 = memref.load %arg1[%536] : memref<64xf32, #tpu.memory_space<smem>>
    %538 = vector.broadcast %537 : f32 to vector<64x128xf32>
    %539 = arith.mulf %5, %538 : vector<64x128xf32>
    %540 = arith.index_cast %c48_i32 : i32 to index
    %541 = memref.load %arg2[%540] : memref<64xf32, #tpu.memory_space<smem>>
    %542 = vector.broadcast %541 : f32 to vector<64x128xf32>
    %543 = arith.addf %539, %542 : vector<64x128xf32>
    %cst_52 = arith.constant 0.000000e+00 : f32
    %544 = vector.broadcast %cst_52 : f32 to vector<64x128xf32>
    %545 = arith.minimumf %543, %544 : vector<64x128xf32>
    %546 = arith.addf %535, %545 : vector<64x128xf32>
    %c49_i32 = arith.constant 49 : i32
    %547 = arith.index_cast %c49_i32 : i32 to index
    %548 = memref.load %arg1[%547] : memref<64xf32, #tpu.memory_space<smem>>
    %549 = vector.broadcast %548 : f32 to vector<64x128xf32>
    %550 = arith.mulf %5, %549 : vector<64x128xf32>
    %551 = arith.index_cast %c49_i32 : i32 to index
    %552 = memref.load %arg2[%551] : memref<64xf32, #tpu.memory_space<smem>>
    %553 = vector.broadcast %552 : f32 to vector<64x128xf32>
    %554 = arith.addf %550, %553 : vector<64x128xf32>
    %cst_53 = arith.constant 0.000000e+00 : f32
    %555 = vector.broadcast %cst_53 : f32 to vector<64x128xf32>
    %556 = arith.minimumf %554, %555 : vector<64x128xf32>
    %557 = arith.addf %546, %556 : vector<64x128xf32>
    %c50_i32 = arith.constant 50 : i32
    %558 = arith.index_cast %c50_i32 : i32 to index
    %559 = memref.load %arg1[%558] : memref<64xf32, #tpu.memory_space<smem>>
    %560 = vector.broadcast %559 : f32 to vector<64x128xf32>
    %561 = arith.mulf %5, %560 : vector<64x128xf32>
    %562 = arith.index_cast %c50_i32 : i32 to index
    %563 = memref.load %arg2[%562] : memref<64xf32, #tpu.memory_space<smem>>
    %564 = vector.broadcast %563 : f32 to vector<64x128xf32>
    %565 = arith.addf %561, %564 : vector<64x128xf32>
    %cst_54 = arith.constant 0.000000e+00 : f32
    %566 = vector.broadcast %cst_54 : f32 to vector<64x128xf32>
    %567 = arith.minimumf %565, %566 : vector<64x128xf32>
    %568 = arith.addf %557, %567 : vector<64x128xf32>
    %c51_i32 = arith.constant 51 : i32
    %569 = arith.index_cast %c51_i32 : i32 to index
    %570 = memref.load %arg1[%569] : memref<64xf32, #tpu.memory_space<smem>>
    %571 = vector.broadcast %570 : f32 to vector<64x128xf32>
    %572 = arith.mulf %5, %571 : vector<64x128xf32>
    %573 = arith.index_cast %c51_i32 : i32 to index
    %574 = memref.load %arg2[%573] : memref<64xf32, #tpu.memory_space<smem>>
    %575 = vector.broadcast %574 : f32 to vector<64x128xf32>
    %576 = arith.addf %572, %575 : vector<64x128xf32>
    %cst_55 = arith.constant 0.000000e+00 : f32
    %577 = vector.broadcast %cst_55 : f32 to vector<64x128xf32>
    %578 = arith.minimumf %576, %577 : vector<64x128xf32>
    %579 = arith.addf %568, %578 : vector<64x128xf32>
    %c52_i32 = arith.constant 52 : i32
    %580 = arith.index_cast %c52_i32 : i32 to index
    %581 = memref.load %arg1[%580] : memref<64xf32, #tpu.memory_space<smem>>
    %582 = vector.broadcast %581 : f32 to vector<64x128xf32>
    %583 = arith.mulf %5, %582 : vector<64x128xf32>
    %584 = arith.index_cast %c52_i32 : i32 to index
    %585 = memref.load %arg2[%584] : memref<64xf32, #tpu.memory_space<smem>>
    %586 = vector.broadcast %585 : f32 to vector<64x128xf32>
    %587 = arith.addf %583, %586 : vector<64x128xf32>
    %cst_56 = arith.constant 0.000000e+00 : f32
    %588 = vector.broadcast %cst_56 : f32 to vector<64x128xf32>
    %589 = arith.minimumf %587, %588 : vector<64x128xf32>
    %590 = arith.addf %579, %589 : vector<64x128xf32>
    %c53_i32 = arith.constant 53 : i32
    %591 = arith.index_cast %c53_i32 : i32 to index
    %592 = memref.load %arg1[%591] : memref<64xf32, #tpu.memory_space<smem>>
    %593 = vector.broadcast %592 : f32 to vector<64x128xf32>
    %594 = arith.mulf %5, %593 : vector<64x128xf32>
    %595 = arith.index_cast %c53_i32 : i32 to index
    %596 = memref.load %arg2[%595] : memref<64xf32, #tpu.memory_space<smem>>
    %597 = vector.broadcast %596 : f32 to vector<64x128xf32>
    %598 = arith.addf %594, %597 : vector<64x128xf32>
    %cst_57 = arith.constant 0.000000e+00 : f32
    %599 = vector.broadcast %cst_57 : f32 to vector<64x128xf32>
    %600 = arith.minimumf %598, %599 : vector<64x128xf32>
    %601 = arith.addf %590, %600 : vector<64x128xf32>
    %c54_i32 = arith.constant 54 : i32
    %602 = arith.index_cast %c54_i32 : i32 to index
    %603 = memref.load %arg1[%602] : memref<64xf32, #tpu.memory_space<smem>>
    %604 = vector.broadcast %603 : f32 to vector<64x128xf32>
    %605 = arith.mulf %5, %604 : vector<64x128xf32>
    %606 = arith.index_cast %c54_i32 : i32 to index
    %607 = memref.load %arg2[%606] : memref<64xf32, #tpu.memory_space<smem>>
    %608 = vector.broadcast %607 : f32 to vector<64x128xf32>
    %609 = arith.addf %605, %608 : vector<64x128xf32>
    %cst_58 = arith.constant 0.000000e+00 : f32
    %610 = vector.broadcast %cst_58 : f32 to vector<64x128xf32>
    %611 = arith.minimumf %609, %610 : vector<64x128xf32>
    %612 = arith.addf %601, %611 : vector<64x128xf32>
    %c55_i32 = arith.constant 55 : i32
    %613 = arith.index_cast %c55_i32 : i32 to index
    %614 = memref.load %arg1[%613] : memref<64xf32, #tpu.memory_space<smem>>
    %615 = vector.broadcast %614 : f32 to vector<64x128xf32>
    %616 = arith.mulf %5, %615 : vector<64x128xf32>
    %617 = arith.index_cast %c55_i32 : i32 to index
    %618 = memref.load %arg2[%617] : memref<64xf32, #tpu.memory_space<smem>>
    %619 = vector.broadcast %618 : f32 to vector<64x128xf32>
    %620 = arith.addf %616, %619 : vector<64x128xf32>
    %cst_59 = arith.constant 0.000000e+00 : f32
    %621 = vector.broadcast %cst_59 : f32 to vector<64x128xf32>
    %622 = arith.minimumf %620, %621 : vector<64x128xf32>
    %623 = arith.addf %612, %622 : vector<64x128xf32>
    %c56_i32 = arith.constant 56 : i32
    %624 = arith.index_cast %c56_i32 : i32 to index
    %625 = memref.load %arg1[%624] : memref<64xf32, #tpu.memory_space<smem>>
    %626 = vector.broadcast %625 : f32 to vector<64x128xf32>
    %627 = arith.mulf %5, %626 : vector<64x128xf32>
    %628 = arith.index_cast %c56_i32 : i32 to index
    %629 = memref.load %arg2[%628] : memref<64xf32, #tpu.memory_space<smem>>
    %630 = vector.broadcast %629 : f32 to vector<64x128xf32>
    %631 = arith.addf %627, %630 : vector<64x128xf32>
    %cst_60 = arith.constant 0.000000e+00 : f32
    %632 = vector.broadcast %cst_60 : f32 to vector<64x128xf32>
    %633 = arith.minimumf %631, %632 : vector<64x128xf32>
    %634 = arith.addf %623, %633 : vector<64x128xf32>
    %c57_i32 = arith.constant 57 : i32
    %635 = arith.index_cast %c57_i32 : i32 to index
    %636 = memref.load %arg1[%635] : memref<64xf32, #tpu.memory_space<smem>>
    %637 = vector.broadcast %636 : f32 to vector<64x128xf32>
    %638 = arith.mulf %5, %637 : vector<64x128xf32>
    %639 = arith.index_cast %c57_i32 : i32 to index
    %640 = memref.load %arg2[%639] : memref<64xf32, #tpu.memory_space<smem>>
    %641 = vector.broadcast %640 : f32 to vector<64x128xf32>
    %642 = arith.addf %638, %641 : vector<64x128xf32>
    %cst_61 = arith.constant 0.000000e+00 : f32
    %643 = vector.broadcast %cst_61 : f32 to vector<64x128xf32>
    %644 = arith.minimumf %642, %643 : vector<64x128xf32>
    %645 = arith.addf %634, %644 : vector<64x128xf32>
    %c58_i32 = arith.constant 58 : i32
    %646 = arith.index_cast %c58_i32 : i32 to index
    %647 = memref.load %arg1[%646] : memref<64xf32, #tpu.memory_space<smem>>
    %648 = vector.broadcast %647 : f32 to vector<64x128xf32>
    %649 = arith.mulf %5, %648 : vector<64x128xf32>
    %650 = arith.index_cast %c58_i32 : i32 to index
    %651 = memref.load %arg2[%650] : memref<64xf32, #tpu.memory_space<smem>>
    %652 = vector.broadcast %651 : f32 to vector<64x128xf32>
    %653 = arith.addf %649, %652 : vector<64x128xf32>
    %cst_62 = arith.constant 0.000000e+00 : f32
    %654 = vector.broadcast %cst_62 : f32 to vector<64x128xf32>
    %655 = arith.minimumf %653, %654 : vector<64x128xf32>
    %656 = arith.addf %645, %655 : vector<64x128xf32>
    %c59_i32 = arith.constant 59 : i32
    %657 = arith.index_cast %c59_i32 : i32 to index
    %658 = memref.load %arg1[%657] : memref<64xf32, #tpu.memory_space<smem>>
    %659 = vector.broadcast %658 : f32 to vector<64x128xf32>
    %660 = arith.mulf %5, %659 : vector<64x128xf32>
    %661 = arith.index_cast %c59_i32 : i32 to index
    %662 = memref.load %arg2[%661] : memref<64xf32, #tpu.memory_space<smem>>
    %663 = vector.broadcast %662 : f32 to vector<64x128xf32>
    %664 = arith.addf %660, %663 : vector<64x128xf32>
    %cst_63 = arith.constant 0.000000e+00 : f32
    %665 = vector.broadcast %cst_63 : f32 to vector<64x128xf32>
    %666 = arith.minimumf %664, %665 : vector<64x128xf32>
    %667 = arith.addf %656, %666 : vector<64x128xf32>
    %c60_i32 = arith.constant 60 : i32
    %668 = arith.index_cast %c60_i32 : i32 to index
    %669 = memref.load %arg1[%668] : memref<64xf32, #tpu.memory_space<smem>>
    %670 = vector.broadcast %669 : f32 to vector<64x128xf32>
    %671 = arith.mulf %5, %670 : vector<64x128xf32>
    %672 = arith.index_cast %c60_i32 : i32 to index
    %673 = memref.load %arg2[%672] : memref<64xf32, #tpu.memory_space<smem>>
    %674 = vector.broadcast %673 : f32 to vector<64x128xf32>
    %675 = arith.addf %671, %674 : vector<64x128xf32>
    %cst_64 = arith.constant 0.000000e+00 : f32
    %676 = vector.broadcast %cst_64 : f32 to vector<64x128xf32>
    %677 = arith.minimumf %675, %676 : vector<64x128xf32>
    %678 = arith.addf %667, %677 : vector<64x128xf32>
    %c61_i32 = arith.constant 61 : i32
    %679 = arith.index_cast %c61_i32 : i32 to index
    %680 = memref.load %arg1[%679] : memref<64xf32, #tpu.memory_space<smem>>
    %681 = vector.broadcast %680 : f32 to vector<64x128xf32>
    %682 = arith.mulf %5, %681 : vector<64x128xf32>
    %683 = arith.index_cast %c61_i32 : i32 to index
    %684 = memref.load %arg2[%683] : memref<64xf32, #tpu.memory_space<smem>>
    %685 = vector.broadcast %684 : f32 to vector<64x128xf32>
    %686 = arith.addf %682, %685 : vector<64x128xf32>
    %cst_65 = arith.constant 0.000000e+00 : f32
    %687 = vector.broadcast %cst_65 : f32 to vector<64x128xf32>
    %688 = arith.minimumf %686, %687 : vector<64x128xf32>
    %689 = arith.addf %678, %688 : vector<64x128xf32>
    %c62_i32 = arith.constant 62 : i32
    %690 = arith.index_cast %c62_i32 : i32 to index
    %691 = memref.load %arg1[%690] : memref<64xf32, #tpu.memory_space<smem>>
    %692 = vector.broadcast %691 : f32 to vector<64x128xf32>
    %693 = arith.mulf %5, %692 : vector<64x128xf32>
    %694 = arith.index_cast %c62_i32 : i32 to index
    %695 = memref.load %arg2[%694] : memref<64xf32, #tpu.memory_space<smem>>
    %696 = vector.broadcast %695 : f32 to vector<64x128xf32>
    %697 = arith.addf %693, %696 : vector<64x128xf32>
    %cst_66 = arith.constant 0.000000e+00 : f32
    %698 = vector.broadcast %cst_66 : f32 to vector<64x128xf32>
    %699 = arith.minimumf %697, %698 : vector<64x128xf32>
    %700 = arith.addf %689, %699 : vector<64x128xf32>
    %c63_i32 = arith.constant 63 : i32
    %701 = arith.index_cast %c63_i32 : i32 to index
    %702 = memref.load %arg1[%701] : memref<64xf32, #tpu.memory_space<smem>>
    %703 = vector.broadcast %702 : f32 to vector<64x128xf32>
    %704 = arith.mulf %5, %703 : vector<64x128xf32>
    %705 = arith.index_cast %c63_i32 : i32 to index
    %706 = memref.load %arg2[%705] : memref<64xf32, #tpu.memory_space<smem>>
    %707 = vector.broadcast %706 : f32 to vector<64x128xf32>
    %708 = arith.addf %704, %707 : vector<64x128xf32>
    %cst_67 = arith.constant 0.000000e+00 : f32
    %709 = vector.broadcast %cst_67 : f32 to vector<64x128xf32>
    %710 = arith.minimumf %708, %709 : vector<64x128xf32>
    %711 = arith.addf %700, %710 : vector<64x128xf32>
    %c35_i32_68 = arith.constant 35 : i32
    %712 = arith.index_cast %3 : i32 to index
    %c0_69 = arith.constant 0 : index
    %713 = vector.load %arg5[%712, %c0_69] : memref<64x128xf32, #tpu.memory_space<vmem>>, vector<64x128xf32>
    tpu.vector_store %arg5[%712, %c0_69], %711 {strides = array<i32>} : memref<64x128xf32, #tpu.memory_space<vmem>>, vector<64x128xf32>,
    %c1_i32_70 = arith.constant 1 : i32
    return
  }
  func.func @transform_0(%arg0: i32) -> i32 {
    %c0_i32 = arith.constant 0 : i32
    %c0_i32_0 = arith.constant 0 : i32
    return %c0_i32 : i32
  }
  func.func @transform_1(%arg0: i32) -> i32 {
    %c0_i32 = arith.constant 0 : i32
    %c0_i32_0 = arith.constant 0 : i32
    return %c0_i32 : i32
  }
  func.func @transform_2(%arg0: i32) -> i32 {
    %c0_i32 = arith.constant 0 : i32
    %c0_i32_0 = arith.constant 0 : i32
    return %c0_i32 : i32
  }
  func.func @transform_3(%arg0: i32) -> (i32, i32) {
    %c0_i32 = arith.constant 0 : i32
    %c0_i32_0 = arith.constant 0 : i32
    return %arg0, %c0_i32 : i32, i32
  }
  func.func @transform_4(%arg0: i32) -> (i32, i32) {
    %c0_i32 = arith.constant 0 : i32
    %c0_i32_0 = arith.constant 0 : i32
    return %arg0, %c0_i32 : i32, i32
  }
}

</mosaic_0001>

<llo_original>
// kernel: tpu_custom_call.1
$region0: #{tpu_custom_call.1}
  #allocation0 [shape = 'u32[]', space=smem, size = 0x4, offset = 0x4, fixed_abs, tag = 'smem constant byte address 0x4 - core index']
  #allocation1 [shape = 'u32[144,128]{1,0:T(1,128)}', space=vmem, size = 0x12000, scoped, tag = 'internal scratch']
  #allocation2 [shape = 'f32[1]{0:T(128)S(6)}', space=smem, size = 0x200, scoped, tag = 'scoped memory for tpu_custom_call.1']
  %s0 = inlined_call_operand.vmem [shape: f32[64], index: 0, kind: input, shape index: {}]
  %s1 = inlined_call_operand.vmem [shape: f32[64], index: 1, kind: input, shape index: {}]
  %s2 = inlined_call_operand.<no memory space> [shape: f32[1], index: 2, kind: input, shape index: {}]
  %s3 = inlined_call_operand.vmem [shape: f32[8,128], index: 3, kind: input, shape index: {}]
  %s4 = inlined_call_operand.hbm [shape: f32[8,128], index: 4, kind: output, shape index: {}]
  %s5 = sld [smem:[#allocation0]]
  $region34: #{tpu_custom_call.1} parent=0
    _
  %s7 = ssub.s32 1, %s5
  %s8 = scalar_select 0, %s7, %s5
  %9 = sst [smem:[#allocation2]] %s2
  $region1: #{tpu_custom_call.1} parent=0
    #allocation3 [shape = 'u8[512]{0}', space=smem, size = 0x200, scoped, tag = 'input window, operand 0, single buffered']
    #allocation4 [shape = 's32[1]{0}', space=sflag, size = 0x4, scoped, tag = 'scoped memory for tpu_custom_call.1']
    #allocation5 [shape = 's32[1]{0}', space=sflag, size = 0x4, scoped, tag = 'scoped memory for tpu_custom_call.1']
    #allocation6 [shape = 'u8[512]{0}', space=smem, size = 0x200, scoped, tag = 'input window, operand 1, single buffered']
    #allocation7 [shape = 's32[1]{0}', space=sflag, size = 0x4, scoped, tag = 'scoped memory for tpu_custom_call.1']
    #allocation8 [shape = 'u8[32768]{0}', space=vmem, size = 0x8000, scoped, tag = 'output window, operand 0, single buffered']
    %10 = vsyncpa [#allocation5], 0
    %11 = vsyncpa [#allocation7], 0
    %12 = vsyncpa [#allocation4], 0
    // Predicated region
    $region2: #{tpu_custom_call.1} parent=1 // pred_check
      _
    $region3: #{tpu_custom_call.1} parent=1 // pred_check_branch
      %14 = sbr.rel (0) target = $region5
    $region4: #{tpu_custom_call.1} parent=1 // pred_region
      %s16 = ssub.s32 16, 16
      %17 = vsyncadd [#allocation5], %s16
      %s19 = sshll.u32 %s0, 4
      %s20 = int_to_ptr.vmem [resolvable:$true] %s19
      %22 = dma.vmem_to_smem %s20, 16, [#allocation3], [#allocation5]
    $region5: #{tpu_custom_call.1} parent=1 // pred_fallthru
      _
    // Predicated region
    $region6: #{tpu_custom_call.1} parent=1 // pred_check
      _
    $region7: #{tpu_custom_call.1} parent=1 // pred_check_branch
      %24 = sbr.rel (0) target = $region9
    $region8: #{tpu_custom_call.1} parent=1 // pred_region
      %s26 = ssub.s32 16, 16
      %27 = vsyncadd [#allocation7], %s26
      %s29 = sshll.u32 %s1, 4
      %s30 = int_to_ptr.vmem [resolvable:$true] %s29
      %32 = dma.vmem_to_smem %s30, 16, [#allocation6], [#allocation7]
    $region9: #{tpu_custom_call.1} parent=1 // pred_fallthru
      _
    // Predicated region
    $region10: #{tpu_custom_call.1} parent=1 // pred_check
      _
    $region11: #{tpu_custom_call.1} parent=1 // pred_check_branch
      %34 = sbr.rel (0) target = $region13
    $region12: #{tpu_custom_call.1} parent=1 // pred_region
      _
    $region13: #{tpu_custom_call.1} parent=1 // pred_fallthru
      _
    // Predicated region
    $region14: #{tpu_custom_call.1} parent=1 // pred_check
      _
    $region15: #{tpu_custom_call.1} parent=1 // pred_check_branch
      %36 = sbr.rel (0) target = $region17
    $region16: #{tpu_custom_call.1} parent=1 // pred_region
      _
    $region17: #{tpu_custom_call.1} parent=1 // pred_fallthru
      _
    // Predicated region
    $region18: #{tpu_custom_call.1} parent=1 // pred_check
      _
    $region19: #{tpu_custom_call.1} parent=1 // pred_check_branch
      %38 = sbr.rel (0) target = $region21
    $region20: #{tpu_custom_call.1} parent=1 // pred_region
      %39 = dma.done [#allocation5], 16
    $region21: #{tpu_custom_call.1} parent=1 // pred_fallthru
      _
    // Predicated region
    $region22: #{tpu_custom_call.1} parent=1 // pred_check
      _
    $region23: #{tpu_custom_call.1} parent=1 // pred_check_branch
      %41 = sbr.rel (0) target = $region25
    $region24: #{tpu_custom_call.1} parent=1 // pred_region
      %42 = dma.done [#allocation7], 16
    $region25: #{tpu_custom_call.1} parent=1 // pred_fallthru
      _
    %43 = sfence
    %v44 = vld [vmem:[%s3] sm:$0xff]
    %v45 = vld [vmem:[%s3 + $0x8] sm:$0xff]
    %v46 = vld [vmem:[%s3 + $0x10] sm:$0xff]
    %v47 = vld [vmem:[%s3 + $0x18] sm:$0xff]
    %v48 = vld [vmem:[%s3 + $0x20] sm:$0xff]
    %v49 = vld [vmem:[%s3 + $0x28] sm:$0xff]
    %v50 = vld [vmem:[%s3 + $0x30] sm:$0xff]
    %v51 = vld [vmem:[%s3 + $0x38] sm:$0xff]
    %s52 = sld [smem:[#allocation2]]
    %v53 = vstv %s52
    %s54 = sld [smem:[#allocation3]]
    %v55 = vstv %s54
    %v56 = vmul.f32 %v44, %v55
    %v57 = vmul.f32 %v45, %v55
    %v58 = vmul.f32 %v46, %v55
    %v59 = vmul.f32 %v47, %v55
    %v60 = vmul.f32 %v48, %v55
    %v61 = vmul.f32 %v49, %v55
    %v62 = vmul.f32 %v50, %v55
    %v63 = vmul.f32 %v51, %v55
    %s64 = sld [smem:[#allocation6]]
    %v65 = vstv %s64
    %v66 = vadd.f32 %v56, %v65
    %v67 = vadd.f32 %v57, %v65
    %v68 = vadd.f32 %v58, %v65
    %v69 = vadd.f32 %v59, %v65
    %v70 = vadd.f32 %v60, %v65
    %v71 = vadd.f32 %v61, %v65
    %v72 = vadd.f32 %v62, %v65
    %v73 = vadd.f32 %v63, %v65
    %v74 = vmax.f32 %v66, 0.0
    %v75 = vmax.f32 %v67, 0.0
    %v76 = vmax.f32 %v68, 0.0
    %v77 = vmax.f32 %v69, 0.0
    %v78 = vmax.f32 %v70, 0.0
    %v79 = vmax.f32 %v71, 0.0
    %v80 = vmax.f32 %v72, 0.0
    %v81 = vmax.f32 %v73, 0.0
    %v82 = vadd.f32 %v53, %v74
    %v83 = vadd.f32 %v53, %v75
    %v84 = vadd.f32 %v53, %v76
    %v85 = vadd.f32 %v53, %v77
    %v86 = vadd.f32 %v53, %v78
    %v87 = vadd.f32 %v53, %v79
    %v88 = vadd.f32 %v53, %v80
    %v89 = vadd.f32 %v53, %v81
    %s90 = sld [smem:[#allocation3 + $0x1]]
    %v91 = vstv %s90
    %v92 = vmul.f32 %v44, %v91
    %v93 = vmul.f32 %v45, %v91
    %v94 = vmul.f32 %v46, %v91
    %v95 = vmul.f32 %v47, %v91
    %v96 = vmul.f32 %v48, %v91
    %v97 = vmul.f32 %v49, %v91
    %v98 = vmul.f32 %v50, %v91
    %v99 = vmul.f32 %v51, %v91
    %s100 = sld [smem:[#allocation6 + $0x1]]
    %v101 = vstv %s100
    %v102 = vadd.f32 %v92, %v101
    %v103 = vadd.f32 %v93, %v101
    %v104 = vadd.f32 %v94, %v101
    %v105 = vadd.f32 %v95, %v101
    %v106 = vadd.f32 %v96, %v101
    %v107 = vadd.f32 %v97, %v101
    %v108 = vadd.f32 %v98, %v101
    %v109 = vadd.f32 %v99, %v101
    %v110 = vmax.f32 %v102, 0.0
    %v111 = vmax.f32 %v103, 0.0
    %v112 = vmax.f32 %v104, 0.0
    %v113 = vmax.f32 %v105, 0.0
    %v114 = vmax.f32 %v106, 0.0
    %v115 = vmax.f32 %v107, 0.0
    %v116 = vmax.f32 %v108, 0.0
    %v117 = vmax.f32 %v109, 0.0
    %v118 = vadd.f32 %v82, %v110
    %v119 = vadd.f32 %v83, %v111
    %v120 = vadd.f32 %v84, %v112
    %v121 = vadd.f32 %v85, %v113
    %v122 = vadd.f32 %v86, %v114
    %v123 = vadd.f32 %v87, %v115
    %v124 = vadd.f32 %v88, %v116
    %v125 = vadd.f32 %v89, %v117
    %s126 = sld [smem:[#allocation3 + $0x2]]
    %v127 = vstv %s126
    %v128 = vmul.f32 %v44, %v127
    %v129 = vmul.f32 %v45, %v127
    %v130 = vmul.f32 %v46, %v127
    %v131 = vmul.f32 %v47, %v127
    %v132 = vmul.f32 %v48, %v127
    %v133 = vmul.f32 %v49, %v127
    %v134 = vmul.f32 %v50, %v127
    %v135 = vmul.f32 %v51, %v127
    %s136 = sld [smem:[#allocation6 + $0x2]]
    %v137 = vstv %s136
    %v138 = vadd.f32 %v128, %v137
    %v139 = vadd.f32 %v129, %v137
    %v140 = vadd.f32 %v130, %v137
    %v141 = vadd.f32 %v131, %v137
    %v142 = vadd.f32 %v132, %v137
    %v143 = vadd.f32 %v133, %v137
    %v144 = vadd.f32 %v134, %v137
    %v145 = vadd.f32 %v135, %v137
    %v146 = vmax.f32 %v138, 0.0
    %v147 = vmax.f32 %v139, 0.0
    %v148 = vmax.f32 %v140, 0.0
    %v149 = vmax.f32 %v141, 0.0
    %v150 = vmax.f32 %v142, 0.0
    %v151 = vmax.f32 %v143, 0.0
    %v152 = vmax.f32 %v144, 0.0
    %v153 = vmax.f32 %v145, 0.0
    %v154 = vadd.f32 %v118, %v146
    %v155 = vadd.f32 %v119, %v147
    %v156 = vadd.f32 %v120, %v148
    %v157 = vadd.f32 %v121, %v149
    %v158 = vadd.f32 %v122, %v150
    %v159 = vadd.f32 %v123, %v151
    %v160 = vadd.f32 %v124, %v152
    %v161 = vadd.f32 %v125, %v153
    %s162 = sld [smem:[#allocation3 + $0x3]]
    %v163 = vstv %s162
    %v164 = vmul.f32 %v44, %v163
    %v165 = vmul.f32 %v45, %v163
    %v166 = vmul.f32 %v46, %v163
    %v167 = vmul.f32 %v47, %v163
    %v168 = vmul.f32 %v48, %v163
    %v169 = vmul.f32 %v49, %v163
    %v170 = vmul.f32 %v50, %v163
    %v171 = vmul.f32 %v51, %v163
    %s172 = sld [smem:[#allocation6 + $0x3]]
    %v173 = vstv %s172
    %v174 = vadd.f32 %v164, %v173
    %v175 = vadd.f32 %v165, %v173
    %v176 = vadd.f32 %v166, %v173
    %v177 = vadd.f32 %v167, %v173
    %v178 = vadd.f32 %v168, %v173
    %v179 = vadd.f32 %v169, %v173
    %v180 = vadd.f32 %v170, %v173
    %v181 = vadd.f32 %v171, %v173
    %v182 = vmax.f32 %v174, 0.0
    %v183 = vmax.f32 %v175, 0.0
    %v184 = vmax.f32 %v176, 0.0
    %v185 = vmax.f32 %v177, 0.0
    %v186 = vmax.f32 %v178, 0.0
    %v187 = vmax.f32 %v179, 0.0
    %v188 = vmax.f32 %v180, 0.0
    %v189 = vmax.f32 %v181, 0.0
    %v190 = vadd.f32 %v154, %v182
    %v191 = vadd.f32 %v155, %v183
    %v192 = vadd.f32 %v156, %v184
    %v193 = vadd.f32 %v157, %v185
    %v194 = vadd.f32 %v158, %v186
    %v195 = vadd.f32 %v159, %v187
    %v196 = vadd.f32 %v160, %v188
    %v197 = vadd.f32 %v161, %v189
    %s198 = sld [smem:[#allocation3 + $0x4]]
    %v199 = vstv %s198
    %v200 = vmul.f32 %v44, %v199
    %v201 = vmul.f32 %v45, %v199
    %v202 = vmul.f32 %v46, %v199
    %v203 = vmul.f32 %v47, %v199
    %v204 = vmul.f32 %v48, %v199
    %v205 = vmul.f32 %v49, %v199
    %v206 = vmul.f32 %v50, %v199
    %v207 = vmul.f32 %v51, %v199
    %s208 = sld [smem:[#allocation6 + $0x4]]
    %v209 = vstv %s208
    %v210 = vadd.f32 %v200, %v209
    %v211 = vadd.f32 %v201, %v209
    %v212 = vadd.f32 %v202, %v209
    %v213 = vadd.f32 %v203, %v209
    %v214 = vadd.f32 %v204, %v209
    %v215 = vadd.f32 %v205, %v209
    %v216 = vadd.f32 %v206, %v209
    %v217 = vadd.f32 %v207, %v209
    %v218 = vmax.f32 %v210, 0.0
    %v219 = vmax.f32 %v211, 0.0
    %v220 = vmax.f32 %v212, 0.0
    %v221 = vmax.f32 %v213, 0.0
    %v222 = vmax.f32 %v214, 0.0
    %v223 = vmax.f32 %v215, 0.0
    %v224 = vmax.f32 %v216, 0.0
    %v225 = vmax.f32 %v217, 0.0
    %v226 = vadd.f32 %v190, %v218
    %v227 = vadd.f32 %v191, %v219
    %v228 = vadd.f32 %v192, %v220
    %v229 = vadd.f32 %v193, %v221
    %v230 = vadd.f32 %v194, %v222
    %v231 = vadd.f32 %v195, %v223
    %v232 = vadd.f32 %v196, %v224
    %v233 = vadd.f32 %v197, %v225
    %s234 = sld [smem:[#allocation3 + $0x5]]
    %v235 = vstv %s234
    %v236 = vmul.f32 %v44, %v235
    %v237 = vmul.f32 %v45, %v235
    %v238 = vmul.f32 %v46, %v235
    %v239 = vmul.f32 %v47, %v235
    %v240 = vmul.f32 %v48, %v235
    %v241 = vmul.f32 %v49, %v235
    %v242 = vmul.f32 %v50, %v235
    %v243 = vmul.f32 %v51, %v235
    %s244 = sld [smem:[#allocation6 + $0x5]]
    %v245 = vstv %s244
    %v246 = vadd.f32 %v236, %v245
    %v247 = vadd.f32 %v237, %v245
    %v248 = vadd.f32 %v238, %v245
    %v249 = vadd.f32 %v239, %v245
    %v250 = vadd.f32 %v240, %v245
    %v251 = vadd.f32 %v241, %v245
    %v252 = vadd.f32 %v242, %v245
    %v253 = vadd.f32 %v243, %v245
    %v254 = vmax.f32 %v246, 0.0
    %v255 = vmax.f32 %v247, 0.0
    %v256 = vmax.f32 %v248, 0.0
    %v257 = vmax.f32 %v249, 0.0
    %v258 = vmax.f32 %v250, 0.0
    %v259 = vmax.f32 %v251, 0.0
    %v260 = vmax.f32 %v252, 0.0
    %v261 = vmax.f32 %v253, 0.0
    %v262 = vadd.f32 %v226, %v254
    %v263 = vadd.f32 %v227, %v255
    %v264 = vadd.f32 %v228, %v256
    %v265 = vadd.f32 %v229, %v257
    %v266 = vadd.f32 %v230, %v258
    %v267 = vadd.f32 %v231, %v259
    %v268 = vadd.f32 %v232, %v260
    %v269 = vadd.f32 %v233, %v261
    %s270 = sld [smem:[#allocation3 + $0x6]]
    %v271 = vstv %s270
    %v272 = vmul.f32 %v44, %v271
    %v273 = vmul.f32 %v45, %v271
    %v274 = vmul.f32 %v46, %v271
    %v275 = vmul.f32 %v47, %v271
    %v276 = vmul.f32 %v48, %v271
    %v277 = vmul.f32 %v49, %v271
    %v278 = vmul.f32 %v50, %v271
    %v279 = vmul.f32 %v51, %v271
    %s280 = sld [smem:[#allocation6 + $0x6]]
    %v281 = vstv %s280
    %v282 = vadd.f32 %v272, %v281
    %v283 = vadd.f32 %v273, %v281
    %v284 = vadd.f32 %v274, %v281
    %v285 = vadd.f32 %v275, %v281
    %v286 = vadd.f32 %v276, %v281
    %v287 = vadd.f32 %v277, %v281
    %v288 = vadd.f32 %v278, %v281
    %v289 = vadd.f32 %v279, %v281
    %v290 = vmax.f32 %v282, 0.0
    %v291 = vmax.f32 %v283, 0.0
    %v292 = vmax.f32 %v284, 0.0
    %v293 = vmax.f32 %v285, 0.0
    %v294 = vmax.f32 %v286, 0.0
    %v295 = vmax.f32 %v287, 0.0
    %v296 = vmax.f32 %v288, 0.0
    %v297 = vmax.f32 %v289, 0.0
    %v298 = vadd.f32 %v262, %v290
    %v299 = vadd.f32 %v263, %v291
    %v300 = vadd.f32 %v264, %v292
    %v301 = vadd.f32 %v265, %v293
    %v302 = vadd.f32 %v266, %v294
    %v303 = vadd.f32 %v267, %v295
    %v304 = vadd.f32 %v268, %v296
    %v305 = vadd.f32 %v269, %v297
    %s306 = sld [smem:[#allocation3 + $0x7]]
    %v307 = vstv %s306
    %v308 = vmul.f32 %v44, %v307
    %v309 = vmul.f32 %v45, %v307
    %v310 = vmul.f32 %v46, %v307
    %v311 = vmul.f32 %v47, %v307
    %v312 = vmul.f32 %v48, %v307
    %v313 = vmul.f32 %v49, %v307
    %v314 = vmul.f32 %v50, %v307
    %v315 = vmul.f32 %v51, %v307
    %s316 = sld [smem:[#allocation6 + $0x7]]
    %v317 = vstv %s316
    %v318 = vadd.f32 %v308, %v317
    %v319 = vadd.f32 %v309, %v317
    %v320 = vadd.f32 %v310, %v317
    %v321 = vadd.f32 %v311, %v317
    %v322 = vadd.f32 %v312, %v317
    %v323 = vadd.f32 %v313, %v317
    %v324 = vadd.f32 %v314, %v317
    %v325 = vadd.f32 %v315, %v317
    %v326 = vmax.f32 %v318, 0.0
    %v327 = vmax.f32 %v319, 0.0
    %v328 = vmax.f32 %v320, 0.0
    %v329 = vmax.f32 %v321, 0.0
    %v330 = vmax.f32 %v322, 0.0
    %v331 = vmax.f32 %v323, 0.0
    %v332 = vmax.f32 %v324, 0.0
    %v333 = vmax.f32 %v325, 0.0
    %v334 = vadd.f32 %v298, %v326
    %v335 = vadd.f32 %v299, %v327
    %v336 = vadd.f32 %v300, %v328
    %v337 = vadd.f32 %v301, %v329
    %v338 = vadd.f32 %v302, %v330
    %v339 = vadd.f32 %v303, %v331
    %v340 = vadd.f32 %v304, %v332
    %v341 = vadd.f32 %v305, %v333
    %s342 = sld [smem:[#allocation3 + $0x8]]
    %v343 = vstv %s342
    %v344 = vmul.f32 %v44, %v343
    %v345 = vmul.f32 %v45, %v343
    %v346 = vmul.f32 %v46, %v343
    %v347 = vmul.f32 %v47, %v343
    %v348 = vmul.f32 %v48, %v343
    %v349 = vmul.f32 %v49, %v343
    %v350 = vmul.f32 %v50, %v343
    %v351 = vmul.f32 %v51, %v343
    %s352 = sld [smem:[#allocation6 + $0x8]]
    %v353 = vstv %s352
    %v354 = vadd.f32 %v344, %v353
    %v355 = vadd.f32 %v345, %v353
    %v356 = vadd.f32 %v346, %v353
    %v357 = vadd.f32 %v347, %v353
    %v358 = vadd.f32 %v348, %v353
    %v359 = vadd.f32 %v349, %v353
    %v360 = vadd.f32 %v350, %v353
    %v361 = vadd.f32 %v351, %v353
    %v362 = vmax.f32 %v354, 0.0
    %v363 = vmax.f32 %v355, 0.0
    %v364 = vmax.f32 %v356, 0.0
    %v365 = vmax.f32 %v357, 0.0
    %v366 = vmax.f32 %v358, 0.0
    %v367 = vmax.f32 %v359, 0.0
    %v368 = vmax.f32 %v360, 0.0
    %v369 = vmax.f32 %v361, 0.0
    %v370 = vadd.f32 %v334, %v362
    %v371 = vadd.f32 %v335, %v363
    %v372 = vadd.f32 %v336, %v364
    %v373 = vadd.f32 %v337, %v365
    %v374 = vadd.f32 %v338, %v366
    %v375 = vadd.f32 %v339, %v367
    %v376 = vadd.f32 %v340, %v368
    %v377 = vadd.f32 %v341, %v369
    %s378 = sld [smem:[#allocation3 + $0x9]]
    %v379 = vstv %s378
    %v380 = vmul.f32 %v44, %v379
    %v381 = vmul.f32 %v45, %v379
    %v382 = vmul.f32 %v46, %v379
    %v383 = vmul.f32 %v47, %v379
    %v384 = vmul.f32 %v48, %v379
    %v385 = vmul.f32 %v49, %v379
    %v386 = vmul.f32 %v50, %v379
    %v387 = vmul.f32 %v51, %v379
    %s388 = sld [smem:[#allocation6 + $0x9]]
    %v389 = vstv %s388
    %v390 = vadd.f32 %v380, %v389
    %v391 = vadd.f32 %v381, %v389
    %v392 = vadd.f32 %v382, %v389
    %v393 = vadd.f32 %v383, %v389
    %v394 = vadd.f32 %v384, %v389
    %v395 = vadd.f32 %v385, %v389
    %v396 = vadd.f32 %v386, %v389
    %v397 = vadd.f32 %v387, %v389
    %v398 = vmax.f32 %v390, 0.0
    %v399 = vmax.f32 %v391, 0.0
    %v400 = vmax.f32 %v392, 0.0
    %v401 = vmax.f32 %v393, 0.0
    %v402 = vmax.f32 %v394, 0.0
    %v403 = vmax.f32 %v395, 0.0
    %v404 = vmax.f32 %v396, 0.0
    %v405 = vmax.f32 %v397, 0.0
    %v406 = vadd.f32 %v370, %v398
    %v407 = vadd.f32 %v371, %v399
    %v408 = vadd.f32 %v372, %v400
    %v409 = vadd.f32 %v373, %v401
    %v410 = vadd.f32 %v374, %v402
    %v411 = vadd.f32 %v375, %v403
    %v412 = vadd.f32 %v376, %v404
    %v413 = vadd.f32 %v377, %v405
    %s414 = sld [smem:[#allocation3 + $0xa]]
    %v415 = vstv %s414
    %v416 = vmul.f32 %v44, %v415
    %v417 = vmul.f32 %v45, %v415
    %v418 = vmul.f32 %v46, %v415
    %v419 = vmul.f32 %v47, %v415
    %v420 = vmul.f32 %v48, %v415
    %v421 = vmul.f32 %v49, %v415
    %v422 = vmul.f32 %v50, %v415
    %v423 = vmul.f32 %v51, %v415
    %s424 = sld [smem:[#allocation6 + $0xa]]
    %v425 = vstv %s424
    %v426 = vadd.f32 %v416, %v425
    %v427 = vadd.f32 %v417, %v425
    %v428 = vadd.f32 %v418, %v425
    %v429 = vadd.f32 %v419, %v425
    %v430 = vadd.f32 %v420, %v425
    %v431 = vadd.f32 %v421, %v425
    %v432 = vadd.f32 %v422, %v425
    %v433 = vadd.f32 %v423, %v425
    %v434 = vmax.f32 %v426, 0.0
    %v435 = vmax.f32 %v427, 0.0
    %v436 = vmax.f32 %v428, 0.0
    %v437 = vmax.f32 %v429, 0.0
    %v438 = vmax.f32 %v430, 0.0
    %v439 = vmax.f32 %v431, 0.0
    %v440 = vmax.f32 %v432, 0.0
    %v441 = vmax.f32 %v433, 0.0
    %v442 = vadd.f32 %v406, %v434
    %v443 = vadd.f32 %v407, %v435
    %v444 = vadd.f32 %v408, %v436
    %v445 = vadd.f32 %v409, %v437
    %v446 = vadd.f32 %v410, %v438
    %v447 = vadd.f32 %v411, %v439
    %v448 = vadd.f32 %v412, %v440
    %v449 = vadd.f32 %v413, %v441
    %s450 = sld [smem:[#allocation3 + $0xb]]
    %v451 = vstv %s450
    %v452 = vmul.f32 %v44, %v451
    %v453 = vmul.f32 %v45, %v451
    %v454 = vmul.f32 %v46, %v451
    %v455 = vmul.f32 %v47, %v451
    %v456 = vmul.f32 %v48, %v451
    %v457 = vmul.f32 %v49, %v451
    %v458 = vmul.f32 %v50, %v451
    %v459 = vmul.f32 %v51, %v451
    %s460 = sld [smem:[#allocation6 + $0xb]]
    %v461 = vstv %s460
    %v462 = vadd.f32 %v452, %v461
    %v463 = vadd.f32 %v453, %v461
    %v464 = vadd.f32 %v454, %v461
    %v465 = vadd.f32 %v455, %v461
    %v466 = vadd.f32 %v456, %v461
    %v467 = vadd.f32 %v457, %v461
    %v468 = vadd.f32 %v458, %v461
    %v469 = vadd.f32 %v459, %v461
    %v470 = vmax.f32 %v462, 0.0
    %v471 = vmax.f32 %v463, 0.0
    %v472 = vmax.f32 %v464, 0.0
    %v473 = vmax.f32 %v465, 0.0
    %v474 = vmax.f32 %v466, 0.0
    %v475 = vmax.f32 %v467, 0.0
    %v476 = vmax.f32 %v468, 0.0
    %v477 = vmax.f32 %v469, 0.0
    %v478 = vadd.f32 %v442, %v470
    %v479 = vadd.f32 %v443, %v471
    %v480 = vadd.f32 %v444, %v472
    %v481 = vadd.f32 %v445, %v473
    %v482 = vadd.f32 %v446, %v474
    %v483 = vadd.f32 %v447, %v475
    %v484 = vadd.f32 %v448, %v476
    %v485 = vadd.f32 %v449, %v477
    %s486 = sld [smem:[#allocation3 + $0xc]]
    %v487 = vstv %s486
    %v488 = vmul.f32 %v44, %v487
    %v489 = vmul.f32 %v45, %v487
    %v490 = vmul.f32 %v46, %v487
    %v491 = vmul.f32 %v47, %v487
    %v492 = vmul.f32 %v48, %v487
    %v493 = vmul.f32 %v49, %v487
    %v494 = vmul.f32 %v50, %v487
    %v495 = vmul.f32 %v51, %v487
    %s496 = sld [smem:[#allocation6 + $0xc]]
    %v497 = vstv %s496
    %v498 = vadd.f32 %v488, %v497
    %v499 = vadd.f32 %v489, %v497
    %v500 = vadd.f32 %v490, %v497
    %v501 = vadd.f32 %v491, %v497
    %v502 = vadd.f32 %v492, %v497
    %v503 = vadd.f32 %v493, %v497
    %v504 = vadd.f32 %v494, %v497
    %v505 = vadd.f32 %v495, %v497
    %v506 = vmax.f32 %v498, 0.0
    %v507 = vmax.f32 %v499, 0.0
    %v508 = vmax.f32 %v500, 0.0
    %v509 = vmax.f32 %v501, 0.0
    %v510 = vmax.f32 %v502, 0.0
    %v511 = vmax.f32 %v503, 0.0
    %v512 = vmax.f32 %v504, 0.0
    %v513 = vmax.f32 %v505, 0.0
    %v514 = vadd.f32 %v478, %v506
    %v515 = vadd.f32 %v479, %v507
    %v516 = vadd.f32 %v480, %v508
    %v517 = vadd.f32 %v481, %v509
    %v518 = vadd.f32 %v482, %v510
    %v519 = vadd.f32 %v483, %v511
    %v520 = vadd.f32 %v484, %v512
    %v521 = vadd.f32 %v485, %v513
    %s522 = sld [smem:[#allocation3 + $0xd]]
    %v523 = vstv %s522
    %v524 = vmul.f32 %v44, %v523
    %v525 = vmul.f32 %v45, %v523
    %v526 = vmul.f32 %v46, %v523
    %v527 = vmul.f32 %v47, %v523
    %v528 = vmul.f32 %v48, %v523
    %v529 = vmul.f32 %v49, %v523
    %v530 = vmul.f32 %v50, %v523
    %v531 = vmul.f32 %v51, %v523
    %s532 = sld [smem:[#allocation6 + $0xd]]
    %v533 = vstv %s532
    %v534 = vadd.f32 %v524, %v533
    %v535 = vadd.f32 %v525, %v533
    %v536 = vadd.f32 %v526, %v533
    %v537 = vadd.f32 %v527, %v533
    %v538 = vadd.f32 %v528, %v533
    %v539 = vadd.f32 %v529, %v533
    %v540 = vadd.f32 %v530, %v533
    %v541 = vadd.f32 %v531, %v533
    %v542 = vmax.f32 %v534, 0.0
    %v543 = vmax.f32 %v535, 0.0
    %v544 = vmax.f32 %v536, 0.0
    %v545 = vmax.f32 %v537, 0.0
    %v546 = vmax.f32 %v538, 0.0
    %v547 = vmax.f32 %v539, 0.0
    %v548 = vmax.f32 %v540, 0.0
    %v549 = vmax.f32 %v541, 0.0
    %v550 = vadd.f32 %v514, %v542
    %v551 = vadd.f32 %v515, %v543
    %v552 = vadd.f32 %v516, %v544
    %v553 = vadd.f32 %v517, %v545
    %v554 = vadd.f32 %v518, %v546
    %v555 = vadd.f32 %v519, %v547
    %v556 = vadd.f32 %v520, %v548
    %v557 = vadd.f32 %v521, %v549
    %s558 = sld [smem:[#allocation3 + $0xe]]
    %v559 = vstv %s558
    %v560 = vmul.f32 %v44, %v559
    %v561 = vmul.f32 %v45, %v559
    %v562 = vmul.f32 %v46, %v559
    %v563 = vmul.f32 %v47, %v559
    %v564 = vmul.f32 %v48, %v559
    %v565 = vmul.f32 %v49, %v559
    %v566 = vmul.f32 %v50, %v559
    %v567 = vmul.f32 %v51, %v559
    %s568 = sld [smem:[#allocation6 + $0xe]]
    %v569 = vstv %s568
    %v570 = vadd.f32 %v560, %v569
    %v571 = vadd.f32 %v561, %v569
    %v572 = vadd.f32 %v562, %v569
    %v573 = vadd.f32 %v563, %v569
    %v574 = vadd.f32 %v564, %v569
    %v575 = vadd.f32 %v565, %v569
    %v576 = vadd.f32 %v566, %v569
    %v577 = vadd.f32 %v567, %v569
    %v578 = vmax.f32 %v570, 0.0
    %v579 = vmax.f32 %v571, 0.0
    %v580 = vmax.f32 %v572, 0.0
    %v581 = vmax.f32 %v573, 0.0
    %v582 = vmax.f32 %v574, 0.0
    %v583 = vmax.f32 %v575, 0.0
    %v584 = vmax.f32 %v576, 0.0
    %v585 = vmax.f32 %v577, 0.0
    %v586 = vadd.f32 %v550, %v578
    %v587 = vadd.f32 %v551, %v579
    %v588 = vadd.f32 %v552, %v580
    %v589 = vadd.f32 %v553, %v581
    %v590 = vadd.f32 %v554, %v582
    %v591 = vadd.f32 %v555, %v583
    %v592 = vadd.f32 %v556, %v584
    %v593 = vadd.f32 %v557, %v585
    %s594 = sld [smem:[#allocation3 + $0xf]]
    %v595 = vstv %s594
    %v596 = vmul.f32 %v44, %v595
    %v597 = vmul.f32 %v45, %v595
    %v598 = vmul.f32 %v46, %v595
    %v599 = vmul.f32 %v47, %v595
    %v600 = vmul.f32 %v48, %v595
    %v601 = vmul.f32 %v49, %v595
    %v602 = vmul.f32 %v50, %v595
    %v603 = vmul.f32 %v51, %v595
    %s604 = sld [smem:[#allocation6 + $0xf]]
    %v605 = vstv %s604
    %v606 = vadd.f32 %v596, %v605
    %v607 = vadd.f32 %v597, %v605
    %v608 = vadd.f32 %v598, %v605
    %v609 = vadd.f32 %v599, %v605
    %v610 = vadd.f32 %v600, %v605
    %v611 = vadd.f32 %v601, %v605
    %v612 = vadd.f32 %v602, %v605
    %v613 = vadd.f32 %v603, %v605
    %v614 = vmax.f32 %v606, 0.0
    %v615 = vmax.f32 %v607, 0.0
    %v616 = vmax.f32 %v608, 0.0
    %v617 = vmax.f32 %v609, 0.0
    %v618 = vmax.f32 %v610, 0.0
    %v619 = vmax.f32 %v611, 0.0
    %v620 = vmax.f32 %v612, 0.0
    %v621 = vmax.f32 %v613, 0.0
    %v622 = vadd.f32 %v586, %v614
    %v623 = vadd.f32 %v587, %v615
    %v624 = vadd.f32 %v588, %v616
    %v625 = vadd.f32 %v589, %v617
    %v626 = vadd.f32 %v590, %v618
    %v627 = vadd.f32 %v591, %v619
    %v628 = vadd.f32 %v592, %v620
    %v629 = vadd.f32 %v593, %v621
    %s630 = sld [smem:[#allocation3 + $0x10]]
    %v631 = vstv %s630
    %v632 = vmul.f32 %v44, %v631
    %v633 = vmul.f32 %v45, %v631
    %v634 = vmul.f32 %v46, %v631
    %v635 = vmul.f32 %v47, %v631
    %v636 = vmul.f32 %v48, %v631
    %v637 = vmul.f32 %v49, %v631
    %v638 = vmul.f32 %v50, %v631
    %v639 = vmul.f32 %v51, %v631
    %s640 = sld [smem:[#allocation6 + $0x10]]
    %v641 = vstv %s640
    %v642 = vadd.f32 %v632, %v641
    %v643 = vadd.f32 %v633, %v641
    %v644 = vadd.f32 %v634, %v641
    %v645 = vadd.f32 %v635, %v641
    %v646 = vadd.f32 %v636, %v641
    %v647 = vadd.f32 %v637, %v641
    %v648 = vadd.f32 %v638, %v641
    %v649 = vadd.f32 %v639, %v641
    %v650 = vmax.f32 %v642, 0.0
    %v651 = vmax.f32 %v643, 0.0
    %v652 = vmax.f32 %v644, 0.0
    %v653 = vmax.f32 %v645, 0.0
    %v654 = vmax.f32 %v646, 0.0
    %v655 = vmax.f32 %v647, 0.0
    %v656 = vmax.f32 %v648, 0.0
    %v657 = vmax.f32 %v649, 0.0
    %v658 = vadd.f32 %v622, %v650
    %v659 = vadd.f32 %v623, %v651
    %v660 = vadd.f32 %v624, %v652
    %v661 = vadd.f32 %v625, %v653
    %v662 = vadd.f32 %v626, %v654
    %v663 = vadd.f32 %v627, %v655
    %v664 = vadd.f32 %v628, %v656
    %v665 = vadd.f32 %v629, %v657
    %s666 = sld [smem:[#allocation3 + $0x11]]
    %v667 = vstv %s666
    %v668 = vmul.f32 %v44, %v667
    %v669 = vmul.f32 %v45, %v667
    %v670 = vmul.f32 %v46, %v667
    %v671 = vmul.f32 %v47, %v667
    %v672 = vmul.f32 %v48, %v667
    %v673 = vmul.f32 %v49, %v667
    %v674 = vmul.f32 %v50, %v667
    %v675 = vmul.f32 %v51, %v667
    %s676 = sld [smem:[#allocation6 + $0x11]]
    %v677 = vstv %s676
    %v678 = vadd.f32 %v668, %v677
    %v679 = vadd.f32 %v669, %v677
    %v680 = vadd.f32 %v670, %v677
    %v681 = vadd.f32 %v671, %v677
    %v682 = vadd.f32 %v672, %v677
    %v683 = vadd.f32 %v673, %v677
    %v684 = vadd.f32 %v674, %v677
    %v685 = vadd.f32 %v675, %v677
    %v686 = vmax.f32 %v678, 0.0
    %v687 = vmax.f32 %v679, 0.0
    %v688 = vmax.f32 %v680, 0.0
    %v689 = vmax.f32 %v681, 0.0
    %v690 = vmax.f32 %v682, 0.0
    %v691 = vmax.f32 %v683, 0.0
    %v692 = vmax.f32 %v684, 0.0
    %v693 = vmax.f32 %v685, 0.0
    %v694 = vadd.f32 %v658, %v686
    %v695 = vadd.f32 %v659, %v687
    %v696 = vadd.f32 %v660, %v688
    %v697 = vadd.f32 %v661, %v689
    %v698 = vadd.f32 %v662, %v690
    %v699 = vadd.f32 %v663, %v691
    %v700 = vadd.f32 %v664, %v692
    %v701 = vadd.f32 %v665, %v693
    %s702 = sld [smem:[#allocation3 + $0x12]]
    %v703 = vstv %s702
    %v704 = vmul.f32 %v44, %v703
    %v705 = vmul.f32 %v45, %v703
    %v706 = vmul.f32 %v46, %v703
    %v707 = vmul.f32 %v47, %v703
    %v708 = vmul.f32 %v48, %v703
    %v709 = vmul.f32 %v49, %v703
    %v710 = vmul.f32 %v50, %v703
    %v711 = vmul.f32 %v51, %v703
    %s712 = sld [smem:[#allocation6 + $0x12]]
    %v713 = vstv %s712
    %v714 = vadd.f32 %v704, %v713
    %v715 = vadd.f32 %v705, %v713
    %v716 = vadd.f32 %v706, %v713
    %v717 = vadd.f32 %v707, %v713
    %v718 = vadd.f32 %v708, %v713
    %v719 = vadd.f32 %v709, %v713
    %v720 = vadd.f32 %v710, %v713
    %v721 = vadd.f32 %v711, %v713
    %v722 = vmax.f32 %v714, 0.0
    %v723 = vmax.f32 %v715, 0.0
    %v724 = vmax.f32 %v716, 0.0
    %v725 = vmax.f32 %v717, 0.0
    %v726 = vmax.f32 %v718, 0.0
    %v727 = vmax.f32 %v719, 0.0
    %v728 = vmax.f32 %v720, 0.0
    %v729 = vmax.f32 %v721, 0.0
    %v730 = vadd.f32 %v694, %v722
    %v731 = vadd.f32 %v695, %v723
    %v732 = vadd.f32 %v696, %v724
    %v733 = vadd.f32 %v697, %v725
    %v734 = vadd.f32 %v698, %v726
    %v735 = vadd.f32 %v699, %v727
    %v736 = vadd.f32 %v700, %v728
    %v737 = vadd.f32 %v701, %v729
    %s738 = sld [smem:[#allocation3 + $0x13]]
    %v739 = vstv %s738
    %v740 = vmul.f32 %v44, %v739
    %v741 = vmul.f32 %v45, %v739
    %v742 = vmul.f32 %v46, %v739
    %v743 = vmul.f32 %v47, %v739
    %v744 = vmul.f32 %v48, %v739
    %v745 = vmul.f32 %v49, %v739
    %v746 = vmul.f32 %v50, %v739
    %v747 = vmul.f32 %v51, %v739
    %s748 = sld [smem:[#allocation6 + $0x13]]
    %v749 = vstv %s748
    %v750 = vadd.f32 %v740, %v749
    %v751 = vadd.f32 %v741, %v749
    %v752 = vadd.f32 %v742, %v749
    %v753 = vadd.f32 %v743, %v749
    %v754 = vadd.f32 %v744, %v749
    %v755 = vadd.f32 %v745, %v749
    %v756 = vadd.f32 %v746, %v749
    %v757 = vadd.f32 %v747, %v749
    %v758 = vmax.f32 %v750, 0.0
    %v759 = vmax.f32 %v751, 0.0
    %v760 = vmax.f32 %v752, 0.0
    %v761 = vmax.f32 %v753, 0.0
    %v762 = vmax.f32 %v754, 0.0
    %v763 = vmax.f32 %v755, 0.0
    %v764 = vmax.f32 %v756, 0.0
    %v765 = vmax.f32 %v757, 0.0
    %v766 = vadd.f32 %v730, %v758
    %v767 = vadd.f32 %v731, %v759
    %v768 = vadd.f32 %v732, %v760
    %v769 = vadd.f32 %v733, %v761
    %v770 = vadd.f32 %v734, %v762
    %v771 = vadd.f32 %v735, %v763
    %v772 = vadd.f32 %v736, %v764
    %v773 = vadd.f32 %v737, %v765
    %s774 = sld [smem:[#allocation3 + $0x14]]
    %v775 = vstv %s774
    %v776 = vmul.f32 %v44, %v775
    %v777 = vmul.f32 %v45, %v775
    %v778 = vmul.f32 %v46, %v775
    %v779 = vmul.f32 %v47, %v775
    %v780 = vmul.f32 %v48, %v775
    %v781 = vmul.f32 %v49, %v775
    %v782 = vmul.f32 %v50, %v775
    %v783 = vmul.f32 %v51, %v775
    %s784 = sld [smem:[#allocation6 + $0x14]]
    %v785 = vstv %s784
    %v786 = vadd.f32 %v776, %v785
    %v787 = vadd.f32 %v777, %v785
    %v788 = vadd.f32 %v778, %v785
    %v789 = vadd.f32 %v779, %v785
    %v790 = vadd.f32 %v780, %v785
    %v791 = vadd.f32 %v781, %v785
    %v792 = vadd.f32 %v782, %v785
    %v793 = vadd.f32 %v783, %v785
    %v794 = vmax.f32 %v786, 0.0
    %v795 = vmax.f32 %v787, 0.0
    %v796 = vmax.f32 %v788, 0.0
    %v797 = vmax.f32 %v789, 0.0
    %v798 = vmax.f32 %v790, 0.0
    %v799 = vmax.f32 %v791, 0.0
    %v800 = vmax.f32 %v792, 0.0
    %v801 = vmax.f32 %v793, 0.0
    %v802 = vadd.f32 %v766, %v794
    %v803 = vadd.f32 %v767, %v795
    %v804 = vadd.f32 %v768, %v796
    %v805 = vadd.f32 %v769, %v797
    %v806 = vadd.f32 %v770, %v798
    %v807 = vadd.f32 %v771, %v799
    %v808 = vadd.f32 %v772, %v800
    %v809 = vadd.f32 %v773, %v801
    %s810 = sld [smem:[#allocation3 + $0x15]]
    %v811 = vstv %s810
    %v812 = vmul.f32 %v44, %v811
    %v813 = vmul.f32 %v45, %v811
    %v814 = vmul.f32 %v46, %v811
    %v815 = vmul.f32 %v47, %v811
    %v816 = vmul.f32 %v48, %v811
    %v817 = vmul.f32 %v49, %v811
    %v818 = vmul.f32 %v50, %v811
    %v819 = vmul.f32 %v51, %v811
    %s820 = sld [smem:[#allocation6 + $0x15]]
    %v821 = vstv %s820
    %v822 = vadd.f32 %v812, %v821
    %v823 = vadd.f32 %v813, %v821
    %v824 = vadd.f32 %v814, %v821
    %v825 = vadd.f32 %v815, %v821
    %v826 = vadd.f32 %v816, %v821
    %v827 = vadd.f32 %v817, %v821
    %v828 = vadd.f32 %v818, %v821
    %v829 = vadd.f32 %v819, %v821
    %v830 = vmax.f32 %v822, 0.0
    %v831 = vmax.f32 %v823, 0.0
    %v832 = vmax.f32 %v824, 0.0
    %v833 = vmax.f32 %v825, 0.0
    %v834 = vmax.f32 %v826, 0.0
    %v835 = vmax.f32 %v827, 0.0
    %v836 = vmax.f32 %v828, 0.0
    %v837 = vmax.f32 %v829, 0.0
    %v838 = vadd.f32 %v802, %v830
    %v839 = vadd.f32 %v803, %v831
    %v840 = vadd.f32 %v804, %v832
    %v841 = vadd.f32 %v805, %v833
    %v842 = vadd.f32 %v806, %v834
    %v843 = vadd.f32 %v807, %v835
    %v844 = vadd.f32 %v808, %v836
    %v845 = vadd.f32 %v809, %v837
    %s846 = sld [smem:[#allocation3 + $0x16]]
    %v847 = vstv %s846
    %v848 = vmul.f32 %v44, %v847
    %v849 = vmul.f32 %v45, %v847
    %v850 = vmul.f32 %v46, %v847
    %v851 = vmul.f32 %v47, %v847
    %v852 = vmul.f32 %v48, %v847
    %v853 = vmul.f32 %v49, %v847
    %v854 = vmul.f32 %v50, %v847
    %v855 = vmul.f32 %v51, %v847
    %s856 = sld [smem:[#allocation6 + $0x16]]
    %v857 = vstv %s856
    %v858 = vadd.f32 %v848, %v857
    %v859 = vadd.f32 %v849, %v857
    %v860 = vadd.f32 %v850, %v857
    %v861 = vadd.f32 %v851, %v857
    %v862 = vadd.f32 %v852, %v857
    %v863 = vadd.f32 %v853, %v857
    %v864 = vadd.f32 %v854, %v857
    %v865 = vadd.f32 %v855, %v857
    %v866 = vmax.f32 %v858, 0.0
    %v867 = vmax.f32 %v859, 0.0
    %v868 = vmax.f32 %v860, 0.0
    %v869 = vmax.f32 %v861, 0.0
    %v870 = vmax.f32 %v862, 0.0
    %v871 = vmax.f32 %v863, 0.0
    %v872 = vmax.f32 %v864, 0.0
    %v873 = vmax.f32 %v865, 0.0
    %v874 = vadd.f32 %v838, %v866
    %v875 = vadd.f32 %v839, %v867
    %v876 = vadd.f32 %v840, %v868
    %v877 = vadd.f32 %v841, %v869
    %v878 = vadd.f32 %v842, %v870
    %v879 = vadd.f32 %v843, %v871
    %v880 = vadd.f32 %v844, %v872
    %v881 = vadd.f32 %v845, %v873
    %s882 = sld [smem:[#allocation3 + $0x17]]
    %v883 = vstv %s882
    %v884 = vmul.f32 %v44, %v883
    %v885 = vmul.f32 %v45, %v883
    %v886 = vmul.f32 %v46, %v883
    %v887 = vmul.f32 %v47, %v883
    %v888 = vmul.f32 %v48, %v883
    %v889 = vmul.f32 %v49, %v883
    %v890 = vmul.f32 %v50, %v883
    %v891 = vmul.f32 %v51, %v883
    %s892 = sld [smem:[#allocation6 + $0x17]]
    %v893 = vstv %s892
    %v894 = vadd.f32 %v884, %v893
    %v895 = vadd.f32 %v885, %v893
    %v896 = vadd.f32 %v886, %v893
    %v897 = vadd.f32 %v887, %v893
    %v898 = vadd.f32 %v888, %v893
    %v899 = vadd.f32 %v889, %v893
    %v900 = vadd.f32 %v890, %v893
    %v901 = vadd.f32 %v891, %v893
    %v902 = vmax.f32 %v894, 0.0
    %v903 = vmax.f32 %v895, 0.0
    %v904 = vmax.f32 %v896, 0.0
    %v905 = vmax.f32 %v897, 0.0
    %v906 = vmax.f32 %v898, 0.0
    %v907 = vmax.f32 %v899, 0.0
    %v908 = vmax.f32 %v900, 0.0
    %v909 = vmax.f32 %v901, 0.0
    %v910 = vadd.f32 %v874, %v902
    %v911 = vadd.f32 %v875, %v903
    %v912 = vadd.f32 %v876, %v904
    %v913 = vadd.f32 %v877, %v905
    %v914 = vadd.f32 %v878, %v906
    %v915 = vadd.f32 %v879, %v907
    %v916 = vadd.f32 %v880, %v908
    %v917 = vadd.f32 %v881, %v909
    %s918 = sld [smem:[#allocation3 + $0x18]]
    %v919 = vstv %s918
    %v920 = vmul.f32 %v44, %v919
    %v921 = vmul.f32 %v45, %v919
    %v922 = vmul.f32 %v46, %v919
    %v923 = vmul.f32 %v47, %v919
    %v924 = vmul.f32 %v48, %v919
    %v925 = vmul.f32 %v49, %v919
    %v926 = vmul.f32 %v50, %v919
    %v927 = vmul.f32 %v51, %v919
    %s928 = sld [smem:[#allocation6 + $0x18]]
    %v929 = vstv %s928
    %v930 = vadd.f32 %v920, %v929
    %v931 = vadd.f32 %v921, %v929
    %v932 = vadd.f32 %v922, %v929
    %v933 = vadd.f32 %v923, %v929
    %v934 = vadd.f32 %v924, %v929
    %v935 = vadd.f32 %v925, %v929
    %v936 = vadd.f32 %v926, %v929
    %v937 = vadd.f32 %v927, %v929
    %v938 = vmax.f32 %v930, 0.0
    %v939 = vmax.f32 %v931, 0.0
    %v940 = vmax.f32 %v932, 0.0
    %v941 = vmax.f32 %v933, 0.0
    %v942 = vmax.f32 %v934, 0.0
    %v943 = vmax.f32 %v935, 0.0
    %v944 = vmax.f32 %v936, 0.0
    %v945 = vmax.f32 %v937, 0.0
    %v946 = vadd.f32 %v910, %v938
    %v947 = vadd.f32 %v911, %v939
    %v948 = vadd.f32 %v912, %v940
    %v949 = vadd.f32 %v913, %v941
    %v950 = vadd.f32 %v914, %v942
    %v951 = vadd.f32 %v915, %v943
    %v952 = vadd.f32 %v916, %v944
    %v953 = vadd.f32 %v917, %v945
    %s954 = sld [smem:[#allocation3 + $0x19]]
    %v955 = vstv %s954
    %v956 = vmul.f32 %v44, %v955
    %v957 = vmul.f32 %v45, %v955
    %v958 = vmul.f32 %v46, %v955
    %v959 = vmul.f32 %v47, %v955
    %v960 = vmul.f32 %v48, %v955
    %v961 = vmul.f32 %v49, %v955
    %v962 = vmul.f32 %v50, %v955
    %v963 = vmul.f32 %v51, %v955
    %s964 = sld [smem:[#allocation6 + $0x19]]
    %v965 = vstv %s964
    %v966 = vadd.f32 %v956, %v965
    %v967 = vadd.f32 %v957, %v965
    %v968 = vadd.f32 %v958, %v965
    %v969 = vadd.f32 %v959, %v965
    %v970 = vadd.f32 %v960, %v965
    %v971 = vadd.f32 %v961, %v965
    %v972 = vadd.f32 %v962, %v965
    %v973 = vadd.f32 %v963, %v965
    %v974 = vmax.f32 %v966, 0.0
    %v975 = vmax.f32 %v967, 0.0
    %v976 = vmax.f32 %v968, 0.0
    %v977 = vmax.f32 %v969, 0.0
    %v978 = vmax.f32 %v970, 0.0
    %v979 = vmax.f32 %v971, 0.0
    %v980 = vmax.f32 %v972, 0.0
    %v981 = vmax.f32 %v973, 0.0
    %v982 = vadd.f32 %v946, %v974
    %v983 = vadd.f32 %v947, %v975
    %v984 = vadd.f32 %v948, %v976
    %v985 = vadd.f32 %v949, %v977
    %v986 = vadd.f32 %v950, %v978
    %v987 = vadd.f32 %v951, %v979
    %v988 = vadd.f32 %v952, %v980
    %v989 = vadd.f32 %v953, %v981
    %s990 = sld [smem:[#allocation3 + $0x1a]]
    %v991 = vstv %s990
    %v992 = vmul.f32 %v44, %v991
    %v993 = vmul.f32 %v45, %v991
    %v994 = vmul.f32 %v46, %v991
    %v995 = vmul.f32 %v47, %v991
    %v996 = vmul.f32 %v48, %v991
    %v997 = vmul.f32 %v49, %v991
    %v998 = vmul.f32 %v50, %v991
    %v999 = vmul.f32 %v51, %v991
    %s1000 = sld [smem:[#allocation6 + $0x1a]]
    %v1001 = vstv %s1000
    %v1002 = vadd.f32 %v992, %v1001
    %v1003 = vadd.f32 %v993, %v1001
    %v1004 = vadd.f32 %v994, %v1001
    %v1005 = vadd.f32 %v995, %v1001
    %v1006 = vadd.f32 %v996, %v1001
    %v1007 = vadd.f32 %v997, %v1001
    %v1008 = vadd.f32 %v998, %v1001
    %v1009 = vadd.f32 %v999, %v1001
    %v1010 = vmax.f32 %v1002, 0.0
    %v1011 = vmax.f32 %v1003, 0.0
    %v1012 = vmax.f32 %v1004, 0.0
    %v1013 = vmax.f32 %v1005, 0.0
    %v1014 = vmax.f32 %v1006, 0.0
    %v1015 = vmax.f32 %v1007, 0.0
    %v1016 = vmax.f32 %v1008, 0.0
    %v1017 = vmax.f32 %v1009, 0.0
    %v1018 = vadd.f32 %v982, %v1010
    %v1019 = vadd.f32 %v983, %v1011
    %v1020 = vadd.f32 %v984, %v1012
    %v1021 = vadd.f32 %v985, %v1013
    %v1022 = vadd.f32 %v986, %v1014
    %v1023 = vadd.f32 %v987, %v1015
    %v1024 = vadd.f32 %v988, %v1016
    %v1025 = vadd.f32 %v989, %v1017
    %s1026 = sld [smem:[#allocation3 + $0x1b]]
    %v1027 = vstv %s1026
    %v1028 = vmul.f32 %v44, %v1027
    %v1029 = vmul.f32 %v45, %v1027
    %v1030 = vmul.f32 %v46, %v1027
    %v1031 = vmul.f32 %v47, %v1027
    %v1032 = vmul.f32 %v48, %v1027
    %v1033 = vmul.f32 %v49, %v1027
    %v1034 = vmul.f32 %v50, %v1027
    %v1035 = vmul.f32 %v51, %v1027
    %s1036 = sld [smem:[#allocation6 + $0x1b]]
    %v1037 = vstv %s1036
    %v1038 = vadd.f32 %v1028, %v1037
    %v1039 = vadd.f32 %v1029, %v1037
    %v1040 = vadd.f32 %v1030, %v1037
    %v1041 = vadd.f32 %v1031, %v1037
    %v1042 = vadd.f32 %v1032, %v1037
    %v1043 = vadd.f32 %v1033, %v1037
    %v1044 = vadd.f32 %v1034, %v1037
    %v1045 = vadd.f32 %v1035, %v1037
    %v1046 = vmax.f32 %v1038, 0.0
    %v1047 = vmax.f32 %v1039, 0.0
    %v1048 = vmax.f32 %v1040, 0.0
    %v1049 = vmax.f32 %v1041, 0.0
    %v1050 = vmax.f32 %v1042, 0.0
    %v1051 = vmax.f32 %v1043, 0.0
    %v1052 = vmax.f32 %v1044, 0.0
    %v1053 = vmax.f32 %v1045, 0.0
    %v1054 = vadd.f32 %v1018, %v1046
    %v1055 = vadd.f32 %v1019, %v1047
    %v1056 = vadd.f32 %v1020, %v1048
    %v1057 = vadd.f32 %v1021, %v1049
    %v1058 = vadd.f32 %v1022, %v1050
    %v1059 = vadd.f32 %v1023, %v1051
    %v1060 = vadd.f32 %v1024, %v1052
    %v1061 = vadd.f32 %v1025, %v1053
    %s1062 = sld [smem:[#allocation3 + $0x1c]]
    %v1063 = vstv %s1062
    %v1064 = vmul.f32 %v44, %v1063
    %v1065 = vmul.f32 %v45, %v1063
    %v1066 = vmul.f32 %v46, %v1063
    %v1067 = vmul.f32 %v47, %v1063
    %v1068 = vmul.f32 %v48, %v1063
    %v1069 = vmul.f32 %v49, %v1063
    %v1070 = vmul.f32 %v50, %v1063
    %v1071 = vmul.f32 %v51, %v1063
    %s1072 = sld [smem:[#allocation6 + $0x1c]]
    %v1073 = vstv %s1072
    %v1074 = vadd.f32 %v1064, %v1073
    %v1075 = vadd.f32 %v1065, %v1073
    %v1076 = vadd.f32 %v1066, %v1073
    %v1077 = vadd.f32 %v1067, %v1073
    %v1078 = vadd.f32 %v1068, %v1073
    %v1079 = vadd.f32 %v1069, %v1073
    %v1080 = vadd.f32 %v1070, %v1073
    %v1081 = vadd.f32 %v1071, %v1073
    %v1082 = vmax.f32 %v1074, 0.0
    %v1083 = vmax.f32 %v1075, 0.0
    %v1084 = vmax.f32 %v1076, 0.0
    %v1085 = vmax.f32 %v1077, 0.0
    %v1086 = vmax.f32 %v1078, 0.0
    %v1087 = vmax.f32 %v1079, 0.0
    %v1088 = vmax.f32 %v1080, 0.0
    %v1089 = vmax.f32 %v1081, 0.0
    %v1090 = vadd.f32 %v1054, %v1082
    %v1091 = vadd.f32 %v1055, %v1083
    %v1092 = vadd.f32 %v1056, %v1084
    %v1093 = vadd.f32 %v1057, %v1085
    %v1094 = vadd.f32 %v1058, %v1086
    %v1095 = vadd.f32 %v1059, %v1087
    %v1096 = vadd.f32 %v1060, %v1088
    %v1097 = vadd.f32 %v1061, %v1089
    %s1098 = sld [smem:[#allocation3 + $0x1d]]
    %v1099 = vstv %s1098
    %v1100 = vmul.f32 %v44, %v1099
    %v1101 = vmul.f32 %v45, %v1099
    %v1102 = vmul.f32 %v46, %v1099
    %v1103 = vmul.f32 %v47, %v1099
    %v1104 = vmul.f32 %v48, %v1099
    %v1105 = vmul.f32 %v49, %v1099
    %v1106 = vmul.f32 %v50, %v1099
    %v1107 = vmul.f32 %v51, %v1099
    %s1108 = sld [smem:[#allocation6 + $0x1d]]
    %v1109 = vstv %s1108
    %v1110 = vadd.f32 %v1100, %v1109
    %v1111 = vadd.f32 %v1101, %v1109
    %v1112 = vadd.f32 %v1102, %v1109
    %v1113 = vadd.f32 %v1103, %v1109
    %v1114 = vadd.f32 %v1104, %v1109
    %v1115 = vadd.f32 %v1105, %v1109
    %v1116 = vadd.f32 %v1106, %v1109
    %v1117 = vadd.f32 %v1107, %v1109
    %v1118 = vmin.f32 %v1110, 0.0
    %v1119 = vmin.f32 %v1111, 0.0
    %v1120 = vmin.f32 %v1112, 0.0
    %v1121 = vmin.f32 %v1113, 0.0
    %v1122 = vmin.f32 %v1114, 0.0
    %v1123 = vmin.f32 %v1115, 0.0
    %v1124 = vmin.f32 %v1116, 0.0
    %v1125 = vmin.f32 %v1117, 0.0
    %v1126 = vadd.f32 %v1090, %v1118
    %v1127 = vadd.f32 %v1091, %v1119
    %v1128 = vadd.f32 %v1092, %v1120
    %v1129 = vadd.f32 %v1093, %v1121
    %v1130 = vadd.f32 %v1094, %v1122
    %v1131 = vadd.f32 %v1095, %v1123
    %v1132 = vadd.f32 %v1096, %v1124
    %v1133 = vadd.f32 %v1097, %v1125
    %s1134 = sld [smem:[#allocation3 + $0x1e]]
    %v1135 = vstv %s1134
    %v1136 = vmul.f32 %v44, %v1135
    %v1137 = vmul.f32 %v45, %v1135
    %v1138 = vmul.f32 %v46, %v1135
    %v1139 = vmul.f32 %v47, %v1135
    %v1140 = vmul.f32 %v48, %v1135
    %v1141 = vmul.f32 %v49, %v1135
    %v1142 = vmul.f32 %v50, %v1135
    %v1143 = vmul.f32 %v51, %v1135
    %s1144 = sld [smem:[#allocation6 + $0x1e]]
    %v1145 = vstv %s1144
    %v1146 = vadd.f32 %v1136, %v1145
    %v1147 = vadd.f32 %v1137, %v1145
    %v1148 = vadd.f32 %v1138, %v1145
    %v1149 = vadd.f32 %v1139, %v1145
    %v1150 = vadd.f32 %v1140, %v1145
    %v1151 = vadd.f32 %v1141, %v1145
    %v1152 = vadd.f32 %v1142, %v1145
    %v1153 = vadd.f32 %v1143, %v1145
    %v1154 = vmin.f32 %v1146, 0.0
    %v1155 = vmin.f32 %v1147, 0.0
    %v1156 = vmin.f32 %v1148, 0.0
    %v1157 = vmin.f32 %v1149, 0.0
    %v1158 = vmin.f32 %v1150, 0.0
    %v1159 = vmin.f32 %v1151, 0.0
    %v1160 = vmin.f32 %v1152, 0.0
    %v1161 = vmin.f32 %v1153, 0.0
    %v1162 = vadd.f32 %v1126, %v1154
    %v1163 = vadd.f32 %v1127, %v1155
    %v1164 = vadd.f32 %v1128, %v1156
    %v1165 = vadd.f32 %v1129, %v1157
    %v1166 = vadd.f32 %v1130, %v1158
    %v1167 = vadd.f32 %v1131, %v1159
    %v1168 = vadd.f32 %v1132, %v1160
    %v1169 = vadd.f32 %v1133, %v1161
    %s1170 = sld [smem:[#allocation3 + $0x1f]]
    %v1171 = vstv %s1170
    %v1172 = vmul.f32 %v44, %v1171
    %v1173 = vmul.f32 %v45, %v1171
    %v1174 = vmul.f32 %v46, %v1171
    %v1175 = vmul.f32 %v47, %v1171
    %v1176 = vmul.f32 %v48, %v1171
    %v1177 = vmul.f32 %v49, %v1171
    %v1178 = vmul.f32 %v50, %v1171
    %v1179 = vmul.f32 %v51, %v1171
    %s1180 = sld [smem:[#allocation6 + $0x1f]]
    %v1181 = vstv %s1180
    %v1182 = vadd.f32 %v1172, %v1181
    %v1183 = vadd.f32 %v1173, %v1181
    %v1184 = vadd.f32 %v1174, %v1181
    %v1185 = vadd.f32 %v1175, %v1181
    %v1186 = vadd.f32 %v1176, %v1181
    %v1187 = vadd.f32 %v1177, %v1181
    %v1188 = vadd.f32 %v1178, %v1181
    %v1189 = vadd.f32 %v1179, %v1181
    %v1190 = vmin.f32 %v1182, 0.0
    %v1191 = vmin.f32 %v1183, 0.0
    %v1192 = vmin.f32 %v1184, 0.0
    %v1193 = vmin.f32 %v1185, 0.0
    %v1194 = vmin.f32 %v1186, 0.0
    %v1195 = vmin.f32 %v1187, 0.0
    %v1196 = vmin.f32 %v1188, 0.0
    %v1197 = vmin.f32 %v1189, 0.0
    %v1198 = vadd.f32 %v1162, %v1190
    %v1199 = vadd.f32 %v1163, %v1191
    %v1200 = vadd.f32 %v1164, %v1192
    %v1201 = vadd.f32 %v1165, %v1193
    %v1202 = vadd.f32 %v1166, %v1194
    %v1203 = vadd.f32 %v1167, %v1195
    %v1204 = vadd.f32 %v1168, %v1196
    %v1205 = vadd.f32 %v1169, %v1197
    %s1206 = sld [smem:[#allocation3 + $0x20]]
    %v1207 = vstv %s1206
    %v1208 = vmul.f32 %v44, %v1207
    %v1209 = vmul.f32 %v45, %v1207
    %v1210 = vmul.f32 %v46, %v1207
    %v1211 = vmul.f32 %v47, %v1207
    %v1212 = vmul.f32 %v48, %v1207
    %v1213 = vmul.f32 %v49, %v1207
    %v1214 = vmul.f32 %v50, %v1207
    %v1215 = vmul.f32 %v51, %v1207
    %s1216 = sld [smem:[#allocation6 + $0x20]]
    %v1217 = vstv %s1216
    %v1218 = vadd.f32 %v1208, %v1217
    %v1219 = vadd.f32 %v1209, %v1217
    %v1220 = vadd.f32 %v1210, %v1217
    %v1221 = vadd.f32 %v1211, %v1217
    %v1222 = vadd.f32 %v1212, %v1217
    %v1223 = vadd.f32 %v1213, %v1217
    %v1224 = vadd.f32 %v1214, %v1217
    %v1225 = vadd.f32 %v1215, %v1217
    %v1226 = vmin.f32 %v1218, 0.0
    %v1227 = vmin.f32 %v1219, 0.0
    %v1228 = vmin.f32 %v1220, 0.0
    %v1229 = vmin.f32 %v1221, 0.0
    %v1230 = vmin.f32 %v1222, 0.0
    %v1231 = vmin.f32 %v1223, 0.0
    %v1232 = vmin.f32 %v1224, 0.0
    %v1233 = vmin.f32 %v1225, 0.0
    %v1234 = vadd.f32 %v1198, %v1226
    %v1235 = vadd.f32 %v1199, %v1227
    %v1236 = vadd.f32 %v1200, %v1228
    %v1237 = vadd.f32 %v1201, %v1229
    %v1238 = vadd.f32 %v1202, %v1230
    %v1239 = vadd.f32 %v1203, %v1231
    %v1240 = vadd.f32 %v1204, %v1232
    %v1241 = vadd.f32 %v1205, %v1233
    %s1242 = sld [smem:[#allocation3 + $0x21]]
    %v1243 = vstv %s1242
    %v1244 = vmul.f32 %v44, %v1243
    %v1245 = vmul.f32 %v45, %v1243
    %v1246 = vmul.f32 %v46, %v1243
    %v1247 = vmul.f32 %v47, %v1243
    %v1248 = vmul.f32 %v48, %v1243
    %v1249 = vmul.f32 %v49, %v1243
    %v1250 = vmul.f32 %v50, %v1243
    %v1251 = vmul.f32 %v51, %v1243
    %s1252 = sld [smem:[#allocation6 + $0x21]]
    %v1253 = vstv %s1252
    %v1254 = vadd.f32 %v1244, %v1253
    %v1255 = vadd.f32 %v1245, %v1253
    %v1256 = vadd.f32 %v1246, %v1253
    %v1257 = vadd.f32 %v1247, %v1253
    %v1258 = vadd.f32 %v1248, %v1253
    %v1259 = vadd.f32 %v1249, %v1253
    %v1260 = vadd.f32 %v1250, %v1253
    %v1261 = vadd.f32 %v1251, %v1253
    %v1262 = vmin.f32 %v1254, 0.0
    %v1263 = vmin.f32 %v1255, 0.0
    %v1264 = vmin.f32 %v1256, 0.0
    %v1265 = vmin.f32 %v1257, 0.0
    %v1266 = vmin.f32 %v1258, 0.0
    %v1267 = vmin.f32 %v1259, 0.0
    %v1268 = vmin.f32 %v1260, 0.0
    %v1269 = vmin.f32 %v1261, 0.0
    %v1270 = vadd.f32 %v1234, %v1262
    %v1271 = vadd.f32 %v1235, %v1263
    %v1272 = vadd.f32 %v1236, %v1264
    %v1273 = vadd.f32 %v1237, %v1265
    %v1274 = vadd.f32 %v1238, %v1266
    %v1275 = vadd.f32 %v1239, %v1267
    %v1276 = vadd.f32 %v1240, %v1268
    %v1277 = vadd.f32 %v1241, %v1269
    %s1278 = sld [smem:[#allocation3 + $0x22]]
    %v1279 = vstv %s1278
    %v1280 = vmul.f32 %v44, %v1279
    %v1281 = vmul.f32 %v45, %v1279
    %v1282 = vmul.f32 %v46, %v1279
    %v1283 = vmul.f32 %v47, %v1279
    %v1284 = vmul.f32 %v48, %v1279
    %v1285 = vmul.f32 %v49, %v1279
    %v1286 = vmul.f32 %v50, %v1279
    %v1287 = vmul.f32 %v51, %v1279
    %s1288 = sld [smem:[#allocation6 + $0x22]]
    %v1289 = vstv %s1288
    %v1290 = vadd.f32 %v1280, %v1289
    %v1291 = vadd.f32 %v1281, %v1289
    %v1292 = vadd.f32 %v1282, %v1289
    %v1293 = vadd.f32 %v1283, %v1289
    %v1294 = vadd.f32 %v1284, %v1289
    %v1295 = vadd.f32 %v1285, %v1289
    %v1296 = vadd.f32 %v1286, %v1289
    %v1297 = vadd.f32 %v1287, %v1289
    %v1298 = vmin.f32 %v1290, 0.0
    %v1299 = vmin.f32 %v1291, 0.0
    %v1300 = vmin.f32 %v1292, 0.0
    %v1301 = vmin.f32 %v1293, 0.0
    %v1302 = vmin.f32 %v1294, 0.0
    %v1303 = vmin.f32 %v1295, 0.0
    %v1304 = vmin.f32 %v1296, 0.0
    %v1305 = vmin.f32 %v1297, 0.0
    %v1306 = vadd.f32 %v1270, %v1298
    %v1307 = vadd.f32 %v1271, %v1299
    %v1308 = vadd.f32 %v1272, %v1300
    %v1309 = vadd.f32 %v1273, %v1301
    %v1310 = vadd.f32 %v1274, %v1302
    %v1311 = vadd.f32 %v1275, %v1303
    %v1312 = vadd.f32 %v1276, %v1304
    %v1313 = vadd.f32 %v1277, %v1305
    %s1314 = sld [smem:[#allocation3 + $0x23]]
    %v1315 = vstv %s1314
    %v1316 = vmul.f32 %v44, %v1315
    %v1317 = vmul.f32 %v45, %v1315
    %v1318 = vmul.f32 %v46, %v1315
    %v1319 = vmul.f32 %v47, %v1315
    %v1320 = vmul.f32 %v48, %v1315
    %v1321 = vmul.f32 %v49, %v1315
    %v1322 = vmul.f32 %v50, %v1315
    %v1323 = vmul.f32 %v51, %v1315
    %s1324 = sld [smem:[#allocation6 + $0x23]]
    %v1325 = vstv %s1324
    %v1326 = vadd.f32 %v1316, %v1325
    %v1327 = vadd.f32 %v1317, %v1325
    %v1328 = vadd.f32 %v1318, %v1325
    %v1329 = vadd.f32 %v1319, %v1325
    %v1330 = vadd.f32 %v1320, %v1325
    %v1331 = vadd.f32 %v1321, %v1325
    %v1332 = vadd.f32 %v1322, %v1325
    %v1333 = vadd.f32 %v1323, %v1325
    %v1334 = vmin.f32 %v1326, 0.0
    %v1335 = vmin.f32 %v1327, 0.0
    %v1336 = vmin.f32 %v1328, 0.0
    %v1337 = vmin.f32 %v1329, 0.0
    %v1338 = vmin.f32 %v1330, 0.0
    %v1339 = vmin.f32 %v1331, 0.0
    %v1340 = vmin.f32 %v1332, 0.0
    %v1341 = vmin.f32 %v1333, 0.0
    %v1342 = vadd.f32 %v1306, %v1334
    %v1343 = vadd.f32 %v1307, %v1335
    %v1344 = vadd.f32 %v1308, %v1336
    %v1345 = vadd.f32 %v1309, %v1337
    %v1346 = vadd.f32 %v1310, %v1338
    %v1347 = vadd.f32 %v1311, %v1339
    %v1348 = vadd.f32 %v1312, %v1340
    %v1349 = vadd.f32 %v1313, %v1341
    %s1350 = sld [smem:[#allocation3 + $0x24]]
    %v1351 = vstv %s1350
    %v1352 = vmul.f32 %v44, %v1351
    %v1353 = vmul.f32 %v45, %v1351
    %v1354 = vmul.f32 %v46, %v1351
    %v1355 = vmul.f32 %v47, %v1351
    %v1356 = vmul.f32 %v48, %v1351
    %v1357 = vmul.f32 %v49, %v1351
    %v1358 = vmul.f32 %v50, %v1351
    %v1359 = vmul.f32 %v51, %v1351
    %s1360 = sld [smem:[#allocation6 + $0x24]]
    %v1361 = vstv %s1360
    %v1362 = vadd.f32 %v1352, %v1361
    %v1363 = vadd.f32 %v1353, %v1361
    %v1364 = vadd.f32 %v1354, %v1361
    %v1365 = vadd.f32 %v1355, %v1361
    %v1366 = vadd.f32 %v1356, %v1361
    %v1367 = vadd.f32 %v1357, %v1361
    %v1368 = vadd.f32 %v1358, %v1361
    %v1369 = vadd.f32 %v1359, %v1361
    %v1370 = vmin.f32 %v1362, 0.0
    %v1371 = vmin.f32 %v1363, 0.0
    %v1372 = vmin.f32 %v1364, 0.0
    %v1373 = vmin.f32 %v1365, 0.0
    %v1374 = vmin.f32 %v1366, 0.0
    %v1375 = vmin.f32 %v1367, 0.0
    %v1376 = vmin.f32 %v1368, 0.0
    %v1377 = vmin.f32 %v1369, 0.0
    %v1378 = vadd.f32 %v1342, %v1370
    %v1379 = vadd.f32 %v1343, %v1371
    %v1380 = vadd.f32 %v1344, %v1372
    %v1381 = vadd.f32 %v1345, %v1373
    %v1382 = vadd.f32 %v1346, %v1374
    %v1383 = vadd.f32 %v1347, %v1375
    %v1384 = vadd.f32 %v1348, %v1376
    %v1385 = vadd.f32 %v1349, %v1377
    %s1386 = sld [smem:[#allocation3 + $0x25]]
    %v1387 = vstv %s1386
    %v1388 = vmul.f32 %v44, %v1387
    %v1389 = vmul.f32 %v45, %v1387
    %v1390 = vmul.f32 %v46, %v1387
    %v1391 = vmul.f32 %v47, %v1387
    %v1392 = vmul.f32 %v48, %v1387
    %v1393 = vmul.f32 %v49, %v1387
    %v1394 = vmul.f32 %v50, %v1387
    %v1395 = vmul.f32 %v51, %v1387
    %s1396 = sld [smem:[#allocation6 + $0x25]]
    %v1397 = vstv %s1396
    %v1398 = vadd.f32 %v1388, %v1397
    %v1399 = vadd.f32 %v1389, %v1397
    %v1400 = vadd.f32 %v1390, %v1397
    %v1401 = vadd.f32 %v1391, %v1397
    %v1402 = vadd.f32 %v1392, %v1397
    %v1403 = vadd.f32 %v1393, %v1397
    %v1404 = vadd.f32 %v1394, %v1397
    %v1405 = vadd.f32 %v1395, %v1397
    %v1406 = vmin.f32 %v1398, 0.0
    %v1407 = vmin.f32 %v1399, 0.0
    %v1408 = vmin.f32 %v1400, 0.0
    %v1409 = vmin.f32 %v1401, 0.0
    %v1410 = vmin.f32 %v1402, 0.0
    %v1411 = vmin.f32 %v1403, 0.0
    %v1412 = vmin.f32 %v1404, 0.0
    %v1413 = vmin.f32 %v1405, 0.0
    %v1414 = vadd.f32 %v1378, %v1406
    %v1415 = vadd.f32 %v1379, %v1407
    %v1416 = vadd.f32 %v1380, %v1408
    %v1417 = vadd.f32 %v1381, %v1409
    %v1418 = vadd.f32 %v1382, %v1410
    %v1419 = vadd.f32 %v1383, %v1411
    %v1420 = vadd.f32 %v1384, %v1412
    %v1421 = vadd.f32 %v1385, %v1413
    %s1422 = sld [smem:[#allocation3 + $0x26]]
    %v1423 = vstv %s1422
    %v1424 = vmul.f32 %v44, %v1423
    %v1425 = vmul.f32 %v45, %v1423
    %v1426 = vmul.f32 %v46, %v1423
    %v1427 = vmul.f32 %v47, %v1423
    %v1428 = vmul.f32 %v48, %v1423
    %v1429 = vmul.f32 %v49, %v1423
    %v1430 = vmul.f32 %v50, %v1423
    %v1431 = vmul.f32 %v51, %v1423
    %s1432 = sld [smem:[#allocation6 + $0x26]]
    %v1433 = vstv %s1432
    %v1434 = vadd.f32 %v1424, %v1433
    %v1435 = vadd.f32 %v1425, %v1433
    %v1436 = vadd.f32 %v1426, %v1433
    %v1437 = vadd.f32 %v1427, %v1433
    %v1438 = vadd.f32 %v1428, %v1433
    %v1439 = vadd.f32 %v1429, %v1433
    %v1440 = vadd.f32 %v1430, %v1433
    %v1441 = vadd.f32 %v1431, %v1433
    %v1442 = vmin.f32 %v1434, 0.0
    %v1443 = vmin.f32 %v1435, 0.0
    %v1444 = vmin.f32 %v1436, 0.0
    %v1445 = vmin.f32 %v1437, 0.0
    %v1446 = vmin.f32 %v1438, 0.0
    %v1447 = vmin.f32 %v1439, 0.0
    %v1448 = vmin.f32 %v1440, 0.0
    %v1449 = vmin.f32 %v1441, 0.0
    %v1450 = vadd.f32 %v1414, %v1442
    %v1451 = vadd.f32 %v1415, %v1443
    %v1452 = vadd.f32 %v1416, %v1444
    %v1453 = vadd.f32 %v1417, %v1445
    %v1454 = vadd.f32 %v1418, %v1446
    %v1455 = vadd.f32 %v1419, %v1447
    %v1456 = vadd.f32 %v1420, %v1448
    %v1457 = vadd.f32 %v1421, %v1449
    %s1458 = sld [smem:[#allocation3 + $0x27]]
    %v1459 = vstv %s1458
    %v1460 = vmul.f32 %v44, %v1459
    %v1461 = vmul.f32 %v45, %v1459
    %v1462 = vmul.f32 %v46, %v1459
    %v1463 = vmul.f32 %v47, %v1459
    %v1464 = vmul.f32 %v48, %v1459
    %v1465 = vmul.f32 %v49, %v1459
    %v1466 = vmul.f32 %v50, %v1459
    %v1467 = vmul.f32 %v51, %v1459
    %s1468 = sld [smem:[#allocation6 + $0x27]]
    %v1469 = vstv %s1468
    %v1470 = vadd.f32 %v1460, %v1469
    %v1471 = vadd.f32 %v1461, %v1469
    %v1472 = vadd.f32 %v1462, %v1469
    %v1473 = vadd.f32 %v1463, %v1469
    %v1474 = vadd.f32 %v1464, %v1469
    %v1475 = vadd.f32 %v1465, %v1469
    %v1476 = vadd.f32 %v1466, %v1469
    %v1477 = vadd.f32 %v1467, %v1469
    %v1478 = vmin.f32 %v1470, 0.0
    %v1479 = vmin.f32 %v1471, 0.0
    %v1480 = vmin.f32 %v1472, 0.0
    %v1481 = vmin.f32 %v1473, 0.0
    %v1482 = vmin.f32 %v1474, 0.0
    %v1483 = vmin.f32 %v1475, 0.0
    %v1484 = vmin.f32 %v1476, 0.0
    %v1485 = vmin.f32 %v1477, 0.0
    %v1486 = vadd.f32 %v1450, %v1478
    %v1487 = vadd.f32 %v1451, %v1479
    %v1488 = vadd.f32 %v1452, %v1480
    %v1489 = vadd.f32 %v1453, %v1481
    %v1490 = vadd.f32 %v1454, %v1482
    %v1491 = vadd.f32 %v1455, %v1483
    %v1492 = vadd.f32 %v1456, %v1484
    %v1493 = vadd.f32 %v1457, %v1485
    %s1494 = sld [smem:[#allocation3 + $0x28]]
    %v1495 = vstv %s1494
    %v1496 = vmul.f32 %v44, %v1495
    %v1497 = vmul.f32 %v45, %v1495
    %v1498 = vmul.f32 %v46, %v1495
    %v1499 = vmul.f32 %v47, %v1495
    %v1500 = vmul.f32 %v48, %v1495
    %v1501 = vmul.f32 %v49, %v1495
    %v1502 = vmul.f32 %v50, %v1495
    %v1503 = vmul.f32 %v51, %v1495
    %s1504 = sld [smem:[#allocation6 + $0x28]]
    %v1505 = vstv %s1504
    %v1506 = vadd.f32 %v1496, %v1505
    %v1507 = vadd.f32 %v1497, %v1505
    %v1508 = vadd.f32 %v1498, %v1505
    %v1509 = vadd.f32 %v1499, %v1505
    %v1510 = vadd.f32 %v1500, %v1505
    %v1511 = vadd.f32 %v1501, %v1505
    %v1512 = vadd.f32 %v1502, %v1505
    %v1513 = vadd.f32 %v1503, %v1505
    %v1514 = vmin.f32 %v1506, 0.0
    %v1515 = vmin.f32 %v1507, 0.0
    %v1516 = vmin.f32 %v1508, 0.0
    %v1517 = vmin.f32 %v1509, 0.0
    %v1518 = vmin.f32 %v1510, 0.0
    %v1519 = vmin.f32 %v1511, 0.0
    %v1520 = vmin.f32 %v1512, 0.0
    %v1521 = vmin.f32 %v1513, 0.0
    %v1522 = vadd.f32 %v1486, %v1514
    %v1523 = vadd.f32 %v1487, %v1515
    %v1524 = vadd.f32 %v1488, %v1516
    %v1525 = vadd.f32 %v1489, %v1517
    %v1526 = vadd.f32 %v1490, %v1518
    %v1527 = vadd.f32 %v1491, %v1519
    %v1528 = vadd.f32 %v1492, %v1520
    %v1529 = vadd.f32 %v1493, %v1521
    %s1530 = sld [smem:[#allocation3 + $0x29]]
    %v1531 = vstv %s1530
    %v1532 = vmul.f32 %v44, %v1531
    %v1533 = vmul.f32 %v45, %v1531
    %v1534 = vmul.f32 %v46, %v1531
    %v1535 = vmul.f32 %v47, %v1531
    %v1536 = vmul.f32 %v48, %v1531
    %v1537 = vmul.f32 %v49, %v1531
    %v1538 = vmul.f32 %v50, %v1531
    %v1539 = vmul.f32 %v51, %v1531
    %s1540 = sld [smem:[#allocation6 + $0x29]]
    %v1541 = vstv %s1540
    %v1542 = vadd.f32 %v1532, %v1541
    %v1543 = vadd.f32 %v1533, %v1541
    %v1544 = vadd.f32 %v1534, %v1541
    %v1545 = vadd.f32 %v1535, %v1541
    %v1546 = vadd.f32 %v1536, %v1541
    %v1547 = vadd.f32 %v1537, %v1541
    %v1548 = vadd.f32 %v1538, %v1541
    %v1549 = vadd.f32 %v1539, %v1541
    %v1550 = vmin.f32 %v1542, 0.0
    %v1551 = vmin.f32 %v1543, 0.0
    %v1552 = vmin.f32 %v1544, 0.0
    %v1553 = vmin.f32 %v1545, 0.0
    %v1554 = vmin.f32 %v1546, 0.0
    %v1555 = vmin.f32 %v1547, 0.0
    %v1556 = vmin.f32 %v1548, 0.0
    %v1557 = vmin.f32 %v1549, 0.0
    %v1558 = vadd.f32 %v1522, %v1550
    %v1559 = vadd.f32 %v1523, %v1551
    %v1560 = vadd.f32 %v1524, %v1552
    %v1561 = vadd.f32 %v1525, %v1553
    %v1562 = vadd.f32 %v1526, %v1554
    %v1563 = vadd.f32 %v1527, %v1555
    %v1564 = vadd.f32 %v1528, %v1556
    %v1565 = vadd.f32 %v1529, %v1557
    %s1566 = sld [smem:[#allocation3 + $0x2a]]
    %v1567 = vstv %s1566
    %v1568 = vmul.f32 %v44, %v1567
    %v1569 = vmul.f32 %v45, %v1567
    %v1570 = vmul.f32 %v46, %v1567
    %v1571 = vmul.f32 %v47, %v1567
    %v1572 = vmul.f32 %v48, %v1567
    %v1573 = vmul.f32 %v49, %v1567
    %v1574 = vmul.f32 %v50, %v1567
    %v1575 = vmul.f32 %v51, %v1567
    %s1576 = sld [smem:[#allocation6 + $0x2a]]
    %v1577 = vstv %s1576
    %v1578 = vadd.f32 %v1568, %v1577
    %v1579 = vadd.f32 %v1569, %v1577
    %v1580 = vadd.f32 %v1570, %v1577
    %v1581 = vadd.f32 %v1571, %v1577
    %v1582 = vadd.f32 %v1572, %v1577
    %v1583 = vadd.f32 %v1573, %v1577
    %v1584 = vadd.f32 %v1574, %v1577
    %v1585 = vadd.f32 %v1575, %v1577
    %v1586 = vmin.f32 %v1578, 0.0
    %v1587 = vmin.f32 %v1579, 0.0
    %v1588 = vmin.f32 %v1580, 0.0
    %v1589 = vmin.f32 %v1581, 0.0
    %v1590 = vmin.f32 %v1582, 0.0
    %v1591 = vmin.f32 %v1583, 0.0
    %v1592 = vmin.f32 %v1584, 0.0
    %v1593 = vmin.f32 %v1585, 0.0
    %v1594 = vadd.f32 %v1558, %v1586
    %v1595 = vadd.f32 %v1559, %v1587
    %v1596 = vadd.f32 %v1560, %v1588
    %v1597 = vadd.f32 %v1561, %v1589
    %v1598 = vadd.f32 %v1562, %v1590
    %v1599 = vadd.f32 %v1563, %v1591
    %v1600 = vadd.f32 %v1564, %v1592
    %v1601 = vadd.f32 %v1565, %v1593
    %s1602 = sld [smem:[#allocation3 + $0x2b]]
    %v1603 = vstv %s1602
    %v1604 = vmul.f32 %v44, %v1603
    %v1605 = vmul.f32 %v45, %v1603
    %v1606 = vmul.f32 %v46, %v1603
    %v1607 = vmul.f32 %v47, %v1603
    %v1608 = vmul.f32 %v48, %v1603
    %v1609 = vmul.f32 %v49, %v1603
    %v1610 = vmul.f32 %v50, %v1603
    %v1611 = vmul.f32 %v51, %v1603
    %s1612 = sld [smem:[#allocation6 + $0x2b]]
    %v1613 = vstv %s1612
    %v1614 = vadd.f32 %v1604, %v1613
    %v1615 = vadd.f32 %v1605, %v1613
    %v1616 = vadd.f32 %v1606, %v1613
    %v1617 = vadd.f32 %v1607, %v1613
    %v1618 = vadd.f32 %v1608, %v1613
    %v1619 = vadd.f32 %v1609, %v1613
    %v1620 = vadd.f32 %v1610, %v1613
    %v1621 = vadd.f32 %v1611, %v1613
    %v1622 = vmin.f32 %v1614, 0.0
    %v1623 = vmin.f32 %v1615, 0.0
    %v1624 = vmin.f32 %v1616, 0.0
    %v1625 = vmin.f32 %v1617, 0.0
    %v1626 = vmin.f32 %v1618, 0.0
    %v1627 = vmin.f32 %v1619, 0.0
    %v1628 = vmin.f32 %v1620, 0.0
    %v1629 = vmin.f32 %v1621, 0.0
    %v1630 = vadd.f32 %v1594, %v1622
    %v1631 = vadd.f32 %v1595, %v1623
    %v1632 = vadd.f32 %v1596, %v1624
    %v1633 = vadd.f32 %v1597, %v1625
    %v1634 = vadd.f32 %v1598, %v1626
    %v1635 = vadd.f32 %v1599, %v1627
    %v1636 = vadd.f32 %v1600, %v1628
    %v1637 = vadd.f32 %v1601, %v1629
    %s1638 = sld [smem:[#allocation3 + $0x2c]]
    %v1639 = vstv %s1638
    %v1640 = vmul.f32 %v44, %v1639
    %v1641 = vmul.f32 %v45, %v1639
    %v1642 = vmul.f32 %v46, %v1639
    %v1643 = vmul.f32 %v47, %v1639
    %v1644 = vmul.f32 %v48, %v1639
    %v1645 = vmul.f32 %v49, %v1639
    %v1646 = vmul.f32 %v50, %v1639
    %v1647 = vmul.f32 %v51, %v1639
    %s1648 = sld [smem:[#allocation6 + $0x2c]]
    %v1649 = vstv %s1648
    %v1650 = vadd.f32 %v1640, %v1649
    %v1651 = vadd.f32 %v1641, %v1649
    %v1652 = vadd.f32 %v1642, %v1649
    %v1653 = vadd.f32 %v1643, %v1649
    %v1654 = vadd.f32 %v1644, %v1649
    %v1655 = vadd.f32 %v1645, %v1649
    %v1656 = vadd.f32 %v1646, %v1649
    %v1657 = vadd.f32 %v1647, %v1649
    %v1658 = vmin.f32 %v1650, 0.0
    %v1659 = vmin.f32 %v1651, 0.0
    %v1660 = vmin.f32 %v1652, 0.0
    %v1661 = vmin.f32 %v1653, 0.0
    %v1662 = vmin.f32 %v1654, 0.0
    %v1663 = vmin.f32 %v1655, 0.0
    %v1664 = vmin.f32 %v1656, 0.0
    %v1665 = vmin.f32 %v1657, 0.0
    %v1666 = vadd.f32 %v1630, %v1658
    %v1667 = vadd.f32 %v1631, %v1659
    %v1668 = vadd.f32 %v1632, %v1660
    %v1669 = vadd.f32 %v1633, %v1661
    %v1670 = vadd.f32 %v1634, %v1662
    %v1671 = vadd.f32 %v1635, %v1663
    %v1672 = vadd.f32 %v1636, %v1664
    %v1673 = vadd.f32 %v1637, %v1665
    %s1674 = sld [smem:[#allocation3 + $0x2d]]
    %v1675 = vstv %s1674
    %v1676 = vmul.f32 %v44, %v1675
    %v1677 = vmul.f32 %v45, %v1675
    %v1678 = vmul.f32 %v46, %v1675
    %v1679 = vmul.f32 %v47, %v1675
    %v1680 = vmul.f32 %v48, %v1675
    %v1681 = vmul.f32 %v49, %v1675
    %v1682 = vmul.f32 %v50, %v1675
    %v1683 = vmul.f32 %v51, %v1675
    %s1684 = sld [smem:[#allocation6 + $0x2d]]
    %v1685 = vstv %s1684
    %v1686 = vadd.f32 %v1676, %v1685
    %v1687 = vadd.f32 %v1677, %v1685
    %v1688 = vadd.f32 %v1678, %v1685
    %v1689 = vadd.f32 %v1679, %v1685
    %v1690 = vadd.f32 %v1680, %v1685
    %v1691 = vadd.f32 %v1681, %v1685
    %v1692 = vadd.f32 %v1682, %v1685
    %v1693 = vadd.f32 %v1683, %v1685
    %v1694 = vmin.f32 %v1686, 0.0
    %v1695 = vmin.f32 %v1687, 0.0
    %v1696 = vmin.f32 %v1688, 0.0
    %v1697 = vmin.f32 %v1689, 0.0
    %v1698 = vmin.f32 %v1690, 0.0
    %v1699 = vmin.f32 %v1691, 0.0
    %v1700 = vmin.f32 %v1692, 0.0
    %v1701 = vmin.f32 %v1693, 0.0
    %v1702 = vadd.f32 %v1666, %v1694
    %v1703 = vadd.f32 %v1667, %v1695
    %v1704 = vadd.f32 %v1668, %v1696
    %v1705 = vadd.f32 %v1669, %v1697
    %v1706 = vadd.f32 %v1670, %v1698
    %v1707 = vadd.f32 %v1671, %v1699
    %v1708 = vadd.f32 %v1672, %v1700
    %v1709 = vadd.f32 %v1673, %v1701
    %s1710 = sld [smem:[#allocation3 + $0x2e]]
    %v1711 = vstv %s1710
    %v1712 = vmul.f32 %v44, %v1711
    %v1713 = vmul.f32 %v45, %v1711
    %v1714 = vmul.f32 %v46, %v1711
    %v1715 = vmul.f32 %v47, %v1711
    %v1716 = vmul.f32 %v48, %v1711
    %v1717 = vmul.f32 %v49, %v1711
    %v1718 = vmul.f32 %v50, %v1711
    %v1719 = vmul.f32 %v51, %v1711
    %s1720 = sld [smem:[#allocation6 + $0x2e]]
    %v1721 = vstv %s1720
    %v1722 = vadd.f32 %v1712, %v1721
    %v1723 = vadd.f32 %v1713, %v1721
    %v1724 = vadd.f32 %v1714, %v1721
    %v1725 = vadd.f32 %v1715, %v1721
    %v1726 = vadd.f32 %v1716, %v1721
    %v1727 = vadd.f32 %v1717, %v1721
    %v1728 = vadd.f32 %v1718, %v1721
    %v1729 = vadd.f32 %v1719, %v1721
    %v1730 = vmin.f32 %v1722, 0.0
    %v1731 = vmin.f32 %v1723, 0.0
    %v1732 = vmin.f32 %v1724, 0.0
    %v1733 = vmin.f32 %v1725, 0.0
    %v1734 = vmin.f32 %v1726, 0.0
    %v1735 = vmin.f32 %v1727, 0.0
    %v1736 = vmin.f32 %v1728, 0.0
    %v1737 = vmin.f32 %v1729, 0.0
    %v1738 = vadd.f32 %v1702, %v1730
    %v1739 = vadd.f32 %v1703, %v1731
    %v1740 = vadd.f32 %v1704, %v1732
    %v1741 = vadd.f32 %v1705, %v1733
    %v1742 = vadd.f32 %v1706, %v1734
    %v1743 = vadd.f32 %v1707, %v1735
    %v1744 = vadd.f32 %v1708, %v1736
    %v1745 = vadd.f32 %v1709, %v1737
    %s1746 = sld [smem:[#allocation3 + $0x2f]]
    %v1747 = vstv %s1746
    %v1748 = vmul.f32 %v44, %v1747
    %v1749 = vmul.f32 %v45, %v1747
    %v1750 = vmul.f32 %v46, %v1747
    %v1751 = vmul.f32 %v47, %v1747
    %v1752 = vmul.f32 %v48, %v1747
    %v1753 = vmul.f32 %v49, %v1747
    %v1754 = vmul.f32 %v50, %v1747
    %v1755 = vmul.f32 %v51, %v1747
    %s1756 = sld [smem:[#allocation6 + $0x2f]]
    %v1757 = vstv %s1756
    %v1758 = vadd.f32 %v1748, %v1757
    %v1759 = vadd.f32 %v1749, %v1757
    %v1760 = vadd.f32 %v1750, %v1757
    %v1761 = vadd.f32 %v1751, %v1757
    %v1762 = vadd.f32 %v1752, %v1757
    %v1763 = vadd.f32 %v1753, %v1757
    %v1764 = vadd.f32 %v1754, %v1757
    %v1765 = vadd.f32 %v1755, %v1757
    %v1766 = vmin.f32 %v1758, 0.0
    %v1767 = vmin.f32 %v1759, 0.0
    %v1768 = vmin.f32 %v1760, 0.0
    %v1769 = vmin.f32 %v1761, 0.0
    %v1770 = vmin.f32 %v1762, 0.0
    %v1771 = vmin.f32 %v1763, 0.0
    %v1772 = vmin.f32 %v1764, 0.0
    %v1773 = vmin.f32 %v1765, 0.0
    %v1774 = vadd.f32 %v1738, %v1766
    %v1775 = vadd.f32 %v1739, %v1767
    %v1776 = vadd.f32 %v1740, %v1768
    %v1777 = vadd.f32 %v1741, %v1769
    %v1778 = vadd.f32 %v1742, %v1770
    %v1779 = vadd.f32 %v1743, %v1771
    %v1780 = vadd.f32 %v1744, %v1772
    %v1781 = vadd.f32 %v1745, %v1773
    %s1782 = sld [smem:[#allocation3 + $0x30]]
    %v1783 = vstv %s1782
    %v1784 = vmul.f32 %v44, %v1783
    %v1785 = vmul.f32 %v45, %v1783
    %v1786 = vmul.f32 %v46, %v1783
    %v1787 = vmul.f32 %v47, %v1783
    %v1788 = vmul.f32 %v48, %v1783
    %v1789 = vmul.f32 %v49, %v1783
    %v1790 = vmul.f32 %v50, %v1783
    %v1791 = vmul.f32 %v51, %v1783
    %s1792 = sld [smem:[#allocation6 + $0x30]]
    %v1793 = vstv %s1792
    %v1794 = vadd.f32 %v1784, %v1793
    %v1795 = vadd.f32 %v1785, %v1793
    %v1796 = vadd.f32 %v1786, %v1793
    %v1797 = vadd.f32 %v1787, %v1793
    %v1798 = vadd.f32 %v1788, %v1793
    %v1799 = vadd.f32 %v1789, %v1793
    %v1800 = vadd.f32 %v1790, %v1793
    %v1801 = vadd.f32 %v1791, %v1793
    %v1802 = vmin.f32 %v1794, 0.0
    %v1803 = vmin.f32 %v1795, 0.0
    %v1804 = vmin.f32 %v1796, 0.0
    %v1805 = vmin.f32 %v1797, 0.0
    %v1806 = vmin.f32 %v1798, 0.0
    %v1807 = vmin.f32 %v1799, 0.0
    %v1808 = vmin.f32 %v1800, 0.0
    %v1809 = vmin.f32 %v1801, 0.0
    %v1810 = vadd.f32 %v1774, %v1802
    %v1811 = vadd.f32 %v1775, %v1803
    %v1812 = vadd.f32 %v1776, %v1804
    %v1813 = vadd.f32 %v1777, %v1805
    %v1814 = vadd.f32 %v1778, %v1806
    %v1815 = vadd.f32 %v1779, %v1807
    %v1816 = vadd.f32 %v1780, %v1808
    %v1817 = vadd.f32 %v1781, %v1809
    %s1818 = sld [smem:[#allocation3 + $0x31]]
    %v1819 = vstv %s1818
    %v1820 = vmul.f32 %v44, %v1819
    %v1821 = vmul.f32 %v45, %v1819
    %v1822 = vmul.f32 %v46, %v1819
    %v1823 = vmul.f32 %v47, %v1819
    %v1824 = vmul.f32 %v48, %v1819
    %v1825 = vmul.f32 %v49, %v1819
    %v1826 = vmul.f32 %v50, %v1819
    %v1827 = vmul.f32 %v51, %v1819
    %s1828 = sld [smem:[#allocation6 + $0x31]]
    %v1829 = vstv %s1828
    %v1830 = vadd.f32 %v1820, %v1829
    %v1831 = vadd.f32 %v1821, %v1829
    %v1832 = vadd.f32 %v1822, %v1829
    %v1833 = vadd.f32 %v1823, %v1829
    %v1834 = vadd.f32 %v1824, %v1829
    %v1835 = vadd.f32 %v1825, %v1829
    %v1836 = vadd.f32 %v1826, %v1829
    %v1837 = vadd.f32 %v1827, %v1829
    %v1838 = vmin.f32 %v1830, 0.0
    %v1839 = vmin.f32 %v1831, 0.0
    %v1840 = vmin.f32 %v1832, 0.0
    %v1841 = vmin.f32 %v1833, 0.0
    %v1842 = vmin.f32 %v1834, 0.0
    %v1843 = vmin.f32 %v1835, 0.0
    %v1844 = vmin.f32 %v1836, 0.0
    %v1845 = vmin.f32 %v1837, 0.0
    %v1846 = vadd.f32 %v1810, %v1838
    %v1847 = vadd.f32 %v1811, %v1839
    %v1848 = vadd.f32 %v1812, %v1840
    %v1849 = vadd.f32 %v1813, %v1841
    %v1850 = vadd.f32 %v1814, %v1842
    %v1851 = vadd.f32 %v1815, %v1843
    %v1852 = vadd.f32 %v1816, %v1844
    %v1853 = vadd.f32 %v1817, %v1845
    %s1854 = sld [smem:[#allocation3 + $0x32]]
    %v1855 = vstv %s1854
    %v1856 = vmul.f32 %v44, %v1855
    %v1857 = vmul.f32 %v45, %v1855
    %v1858 = vmul.f32 %v46, %v1855
    %v1859 = vmul.f32 %v47, %v1855
    %v1860 = vmul.f32 %v48, %v1855
    %v1861 = vmul.f32 %v49, %v1855
    %v1862 = vmul.f32 %v50, %v1855
    %v1863 = vmul.f32 %v51, %v1855
    %s1864 = sld [smem:[#allocation6 + $0x32]]
    %v1865 = vstv %s1864
    %v1866 = vadd.f32 %v1856, %v1865
    %v1867 = vadd.f32 %v1857, %v1865
    %v1868 = vadd.f32 %v1858, %v1865
    %v1869 = vadd.f32 %v1859, %v1865
    %v1870 = vadd.f32 %v1860, %v1865
    %v1871 = vadd.f32 %v1861, %v1865
    %v1872 = vadd.f32 %v1862, %v1865
    %v1873 = vadd.f32 %v1863, %v1865
    %v1874 = vmin.f32 %v1866, 0.0
    %v1875 = vmin.f32 %v1867, 0.0
    %v1876 = vmin.f32 %v1868, 0.0
    %v1877 = vmin.f32 %v1869, 0.0
    %v1878 = vmin.f32 %v1870, 0.0
    %v1879 = vmin.f32 %v1871, 0.0
    %v1880 = vmin.f32 %v1872, 0.0
    %v1881 = vmin.f32 %v1873, 0.0
    %v1882 = vadd.f32 %v1846, %v1874
    %v1883 = vadd.f32 %v1847, %v1875
    %v1884 = vadd.f32 %v1848, %v1876
    %v1885 = vadd.f32 %v1849, %v1877
    %v1886 = vadd.f32 %v1850, %v1878
    %v1887 = vadd.f32 %v1851, %v1879
    %v1888 = vadd.f32 %v1852, %v1880
    %v1889 = vadd.f32 %v1853, %v1881
    %s1890 = sld [smem:[#allocation3 + $0x33]]
    %v1891 = vstv %s1890
    %v1892 = vmul.f32 %v44, %v1891
    %v1893 = vmul.f32 %v45, %v1891
    %v1894 = vmul.f32 %v46, %v1891
    %v1895 = vmul.f32 %v47, %v1891
    %v1896 = vmul.f32 %v48, %v1891
    %v1897 = vmul.f32 %v49, %v1891
    %v1898 = vmul.f32 %v50, %v1891
    %v1899 = vmul.f32 %v51, %v1891
    %s1900 = sld [smem:[#allocation6 + $0x33]]
    %v1901 = vstv %s1900
    %v1902 = vadd.f32 %v1892, %v1901
    %v1903 = vadd.f32 %v1893, %v1901
    %v1904 = vadd.f32 %v1894, %v1901
    %v1905 = vadd.f32 %v1895, %v1901
    %v1906 = vadd.f32 %v1896, %v1901
    %v1907 = vadd.f32 %v1897, %v1901
    %v1908 = vadd.f32 %v1898, %v1901
    %v1909 = vadd.f32 %v1899, %v1901
    %v1910 = vmin.f32 %v1902, 0.0
    %v1911 = vmin.f32 %v1903, 0.0
    %v1912 = vmin.f32 %v1904, 0.0
    %v1913 = vmin.f32 %v1905, 0.0
    %v1914 = vmin.f32 %v1906, 0.0
    %v1915 = vmin.f32 %v1907, 0.0
    %v1916 = vmin.f32 %v1908, 0.0
    %v1917 = vmin.f32 %v1909, 0.0
    %v1918 = vadd.f32 %v1882, %v1910
    %v1919 = vadd.f32 %v1883, %v1911
    %v1920 = vadd.f32 %v1884, %v1912
    %v1921 = vadd.f32 %v1885, %v1913
    %v1922 = vadd.f32 %v1886, %v1914
    %v1923 = vadd.f32 %v1887, %v1915
    %v1924 = vadd.f32 %v1888, %v1916
    %v1925 = vadd.f32 %v1889, %v1917
    %s1926 = sld [smem:[#allocation3 + $0x34]]
    %v1927 = vstv %s1926
    %v1928 = vmul.f32 %v44, %v1927
    %v1929 = vmul.f32 %v45, %v1927
    %v1930 = vmul.f32 %v46, %v1927
    %v1931 = vmul.f32 %v47, %v1927
    %v1932 = vmul.f32 %v48, %v1927
    %v1933 = vmul.f32 %v49, %v1927
    %v1934 = vmul.f32 %v50, %v1927
    %v1935 = vmul.f32 %v51, %v1927
    %s1936 = sld [smem:[#allocation6 + $0x34]]
    %v1937 = vstv %s1936
    %v1938 = vadd.f32 %v1928, %v1937
    %v1939 = vadd.f32 %v1929, %v1937
    %v1940 = vadd.f32 %v1930, %v1937
    %v1941 = vadd.f32 %v1931, %v1937
    %v1942 = vadd.f32 %v1932, %v1937
    %v1943 = vadd.f32 %v1933, %v1937
    %v1944 = vadd.f32 %v1934, %v1937
    %v1945 = vadd.f32 %v1935, %v1937
    %v1946 = vmin.f32 %v1938, 0.0
    %v1947 = vmin.f32 %v1939, 0.0
    %v1948 = vmin.f32 %v1940, 0.0
    %v1949 = vmin.f32 %v1941, 0.0
    %v1950 = vmin.f32 %v1942, 0.0
    %v1951 = vmin.f32 %v1943, 0.0
    %v1952 = vmin.f32 %v1944, 0.0
    %v1953 = vmin.f32 %v1945, 0.0
    %v1954 = vadd.f32 %v1918, %v1946
    %v1955 = vadd.f32 %v1919, %v1947
    %v1956 = vadd.f32 %v1920, %v1948
    %v1957 = vadd.f32 %v1921, %v1949
    %v1958 = vadd.f32 %v1922, %v1950
    %v1959 = vadd.f32 %v1923, %v1951
    %v1960 = vadd.f32 %v1924, %v1952
    %v1961 = vadd.f32 %v1925, %v1953
    %s1962 = sld [smem:[#allocation3 + $0x35]]
    %v1963 = vstv %s1962
    %v1964 = vmul.f32 %v44, %v1963
    %v1965 = vmul.f32 %v45, %v1963
    %v1966 = vmul.f32 %v46, %v1963
    %v1967 = vmul.f32 %v47, %v1963
    %v1968 = vmul.f32 %v48, %v1963
    %v1969 = vmul.f32 %v49, %v1963
    %v1970 = vmul.f32 %v50, %v1963
    %v1971 = vmul.f32 %v51, %v1963
    %s1972 = sld [smem:[#allocation6 + $0x35]]
    %v1973 = vstv %s1972
    %v1974 = vadd.f32 %v1964, %v1973
    %v1975 = vadd.f32 %v1965, %v1973
    %v1976 = vadd.f32 %v1966, %v1973
    %v1977 = vadd.f32 %v1967, %v1973
    %v1978 = vadd.f32 %v1968, %v1973
    %v1979 = vadd.f32 %v1969, %v1973
    %v1980 = vadd.f32 %v1970, %v1973
    %v1981 = vadd.f32 %v1971, %v1973
    %v1982 = vmin.f32 %v1974, 0.0
    %v1983 = vmin.f32 %v1975, 0.0
    %v1984 = vmin.f32 %v1976, 0.0
    %v1985 = vmin.f32 %v1977, 0.0
    %v1986 = vmin.f32 %v1978, 0.0
    %v1987 = vmin.f32 %v1979, 0.0
    %v1988 = vmin.f32 %v1980, 0.0
    %v1989 = vmin.f32 %v1981, 0.0
    %v1990 = vadd.f32 %v1954, %v1982
    %v1991 = vadd.f32 %v1955, %v1983
    %v1992 = vadd.f32 %v1956, %v1984
    %v1993 = vadd.f32 %v1957, %v1985
    %v1994 = vadd.f32 %v1958, %v1986
    %v1995 = vadd.f32 %v1959, %v1987
    %v1996 = vadd.f32 %v1960, %v1988
    %v1997 = vadd.f32 %v1961, %v1989
    %s1998 = sld [smem:[#allocation3 + $0x36]]
    %v1999 = vstv %s1998
    %v2000 = vmul.f32 %v44, %v1999
    %v2001 = vmul.f32 %v45, %v1999
    %v2002 = vmul.f32 %v46, %v1999
    %v2003 = vmul.f32 %v47, %v1999
    %v2004 = vmul.f32 %v48, %v1999
    %v2005 = vmul.f32 %v49, %v1999
    %v2006 = vmul.f32 %v50, %v1999
    %v2007 = vmul.f32 %v51, %v1999
    %s2008 = sld [smem:[#allocation6 + $0x36]]
    %v2009 = vstv %s2008
    %v2010 = vadd.f32 %v2000, %v2009
    %v2011 = vadd.f32 %v2001, %v2009
    %v2012 = vadd.f32 %v2002, %v2009
    %v2013 = vadd.f32 %v2003, %v2009
    %v2014 = vadd.f32 %v2004, %v2009
    %v2015 = vadd.f32 %v2005, %v2009
    %v2016 = vadd.f32 %v2006, %v2009
    %v2017 = vadd.f32 %v2007, %v2009
    %v2018 = vmin.f32 %v2010, 0.0
    %v2019 = vmin.f32 %v2011, 0.0
    %v2020 = vmin.f32 %v2012, 0.0
    %v2021 = vmin.f32 %v2013, 0.0
    %v2022 = vmin.f32 %v2014, 0.0
    %v2023 = vmin.f32 %v2015, 0.0
    %v2024 = vmin.f32 %v2016, 0.0
    %v2025 = vmin.f32 %v2017, 0.0
    %v2026 = vadd.f32 %v1990, %v2018
    %v2027 = vadd.f32 %v1991, %v2019
    %v2028 = vadd.f32 %v1992, %v2020
    %v2029 = vadd.f32 %v1993, %v2021
    %v2030 = vadd.f32 %v1994, %v2022
    %v2031 = vadd.f32 %v1995, %v2023
    %v2032 = vadd.f32 %v1996, %v2024
    %v2033 = vadd.f32 %v1997, %v2025
    %s2034 = sld [smem:[#allocation3 + $0x37]]
    %v2035 = vstv %s2034
    %v2036 = vmul.f32 %v44, %v2035
    %v2037 = vmul.f32 %v45, %v2035
    %v2038 = vmul.f32 %v46, %v2035
    %v2039 = vmul.f32 %v47, %v2035
    %v2040 = vmul.f32 %v48, %v2035
    %v2041 = vmul.f32 %v49, %v2035
    %v2042 = vmul.f32 %v50, %v2035
    %v2043 = vmul.f32 %v51, %v2035
    %s2044 = sld [smem:[#allocation6 + $0x37]]
    %v2045 = vstv %s2044
    %v2046 = vadd.f32 %v2036, %v2045
    %v2047 = vadd.f32 %v2037, %v2045
    %v2048 = vadd.f32 %v2038, %v2045
    %v2049 = vadd.f32 %v2039, %v2045
    %v2050 = vadd.f32 %v2040, %v2045
    %v2051 = vadd.f32 %v2041, %v2045
    %v2052 = vadd.f32 %v2042, %v2045
    %v2053 = vadd.f32 %v2043, %v2045
    %v2054 = vmin.f32 %v2046, 0.0
    %v2055 = vmin.f32 %v2047, 0.0
    %v2056 = vmin.f32 %v2048, 0.0
    %v2057 = vmin.f32 %v2049, 0.0
    %v2058 = vmin.f32 %v2050, 0.0
    %v2059 = vmin.f32 %v2051, 0.0
    %v2060 = vmin.f32 %v2052, 0.0
    %v2061 = vmin.f32 %v2053, 0.0
    %v2062 = vadd.f32 %v2026, %v2054
    %v2063 = vadd.f32 %v2027, %v2055
    %v2064 = vadd.f32 %v2028, %v2056
    %v2065 = vadd.f32 %v2029, %v2057
    %v2066 = vadd.f32 %v2030, %v2058
    %v2067 = vadd.f32 %v2031, %v2059
    %v2068 = vadd.f32 %v2032, %v2060
    %v2069 = vadd.f32 %v2033, %v2061
    %s2070 = sld [smem:[#allocation3 + $0x38]]
    %v2071 = vstv %s2070
    %v2072 = vmul.f32 %v44, %v2071
    %v2073 = vmul.f32 %v45, %v2071
    %v2074 = vmul.f32 %v46, %v2071
    %v2075 = vmul.f32 %v47, %v2071
    %v2076 = vmul.f32 %v48, %v2071
    %v2077 = vmul.f32 %v49, %v2071
    %v2078 = vmul.f32 %v50, %v2071
    %v2079 = vmul.f32 %v51, %v2071
    %s2080 = sld [smem:[#allocation6 + $0x38]]
    %v2081 = vstv %s2080
    %v2082 = vadd.f32 %v2072, %v2081
    %v2083 = vadd.f32 %v2073, %v2081
    %v2084 = vadd.f32 %v2074, %v2081
    %v2085 = vadd.f32 %v2075, %v2081
    %v2086 = vadd.f32 %v2076, %v2081
    %v2087 = vadd.f32 %v2077, %v2081
    %v2088 = vadd.f32 %v2078, %v2081
    %v2089 = vadd.f32 %v2079, %v2081
    %v2090 = vmin.f32 %v2082, 0.0
    %v2091 = vmin.f32 %v2083, 0.0
    %v2092 = vmin.f32 %v2084, 0.0
    %v2093 = vmin.f32 %v2085, 0.0
    %v2094 = vmin.f32 %v2086, 0.0
    %v2095 = vmin.f32 %v2087, 0.0
    %v2096 = vmin.f32 %v2088, 0.0
    %v2097 = vmin.f32 %v2089, 0.0
    %v2098 = vadd.f32 %v2062, %v2090
    %v2099 = vadd.f32 %v2063, %v2091
    %v2100 = vadd.f32 %v2064, %v2092
    %v2101 = vadd.f32 %v2065, %v2093
    %v2102 = vadd.f32 %v2066, %v2094
    %v2103 = vadd.f32 %v2067, %v2095
    %v2104 = vadd.f32 %v2068, %v2096
    %v2105 = vadd.f32 %v2069, %v2097
    %s2106 = sld [smem:[#allocation3 + $0x39]]
    %v2107 = vstv %s2106
    %v2108 = vmul.f32 %v44, %v2107
    %v2109 = vmul.f32 %v45, %v2107
    %v2110 = vmul.f32 %v46, %v2107
    %v2111 = vmul.f32 %v47, %v2107
    %v2112 = vmul.f32 %v48, %v2107
    %v2113 = vmul.f32 %v49, %v2107
    %v2114 = vmul.f32 %v50, %v2107
    %v2115 = vmul.f32 %v51, %v2107
    %s2116 = sld [smem:[#allocation6 + $0x39]]
    %v2117 = vstv %s2116
    %v2118 = vadd.f32 %v2108, %v2117
    %v2119 = vadd.f32 %v2109, %v2117
    %v2120 = vadd.f32 %v2110, %v2117
    %v2121 = vadd.f32 %v2111, %v2117
    %v2122 = vadd.f32 %v2112, %v2117
    %v2123 = vadd.f32 %v2113, %v2117
    %v2124 = vadd.f32 %v2114, %v2117
    %v2125 = vadd.f32 %v2115, %v2117
    %v2126 = vmin.f32 %v2118, 0.0
    %v2127 = vmin.f32 %v2119, 0.0
    %v2128 = vmin.f32 %v2120, 0.0
    %v2129 = vmin.f32 %v2121, 0.0
    %v2130 = vmin.f32 %v2122, 0.0
    %v2131 = vmin.f32 %v2123, 0.0
    %v2132 = vmin.f32 %v2124, 0.0
    %v2133 = vmin.f32 %v2125, 0.0
    %v2134 = vadd.f32 %v2098, %v2126
    %v2135 = vadd.f32 %v2099, %v2127
    %v2136 = vadd.f32 %v2100, %v2128
    %v2137 = vadd.f32 %v2101, %v2129
    %v2138 = vadd.f32 %v2102, %v2130
    %v2139 = vadd.f32 %v2103, %v2131
    %v2140 = vadd.f32 %v2104, %v2132
    %v2141 = vadd.f32 %v2105, %v2133
    %s2142 = sld [smem:[#allocation3 + $0x3a]]
    %v2143 = vstv %s2142
    %v2144 = vmul.f32 %v44, %v2143
    %v2145 = vmul.f32 %v45, %v2143
    %v2146 = vmul.f32 %v46, %v2143
    %v2147 = vmul.f32 %v47, %v2143
    %v2148 = vmul.f32 %v48, %v2143
    %v2149 = vmul.f32 %v49, %v2143
    %v2150 = vmul.f32 %v50, %v2143
    %v2151 = vmul.f32 %v51, %v2143
    %s2152 = sld [smem:[#allocation6 + $0x3a]]
    %v2153 = vstv %s2152
    %v2154 = vadd.f32 %v2144, %v2153
    %v2155 = vadd.f32 %v2145, %v2153
    %v2156 = vadd.f32 %v2146, %v2153
    %v2157 = vadd.f32 %v2147, %v2153
    %v2158 = vadd.f32 %v2148, %v2153
    %v2159 = vadd.f32 %v2149, %v2153
    %v2160 = vadd.f32 %v2150, %v2153
    %v2161 = vadd.f32 %v2151, %v2153
    %v2162 = vmin.f32 %v2154, 0.0
    %v2163 = vmin.f32 %v2155, 0.0
    %v2164 = vmin.f32 %v2156, 0.0
    %v2165 = vmin.f32 %v2157, 0.0
    %v2166 = vmin.f32 %v2158, 0.0
    %v2167 = vmin.f32 %v2159, 0.0
    %v2168 = vmin.f32 %v2160, 0.0
    %v2169 = vmin.f32 %v2161, 0.0
    %v2170 = vadd.f32 %v2134, %v2162
    %v2171 = vadd.f32 %v2135, %v2163
    %v2172 = vadd.f32 %v2136, %v2164
    %v2173 = vadd.f32 %v2137, %v2165
    %v2174 = vadd.f32 %v2138, %v2166
    %v2175 = vadd.f32 %v2139, %v2167
    %v2176 = vadd.f32 %v2140, %v2168
    %v2177 = vadd.f32 %v2141, %v2169
    %s2178 = sld [smem:[#allocation3 + $0x3b]]
    %v2179 = vstv %s2178
    %v2180 = vmul.f32 %v44, %v2179
    %v2181 = vmul.f32 %v45, %v2179
    %v2182 = vmul.f32 %v46, %v2179
    %v2183 = vmul.f32 %v47, %v2179
    %v2184 = vmul.f32 %v48, %v2179
    %v2185 = vmul.f32 %v49, %v2179
    %v2186 = vmul.f32 %v50, %v2179
    %v2187 = vmul.f32 %v51, %v2179
    %s2188 = sld [smem:[#allocation6 + $0x3b]]
    %v2189 = vstv %s2188
    %v2190 = vadd.f32 %v2180, %v2189
    %v2191 = vadd.f32 %v2181, %v2189
    %v2192 = vadd.f32 %v2182, %v2189
    %v2193 = vadd.f32 %v2183, %v2189
    %v2194 = vadd.f32 %v2184, %v2189
    %v2195 = vadd.f32 %v2185, %v2189
    %v2196 = vadd.f32 %v2186, %v2189
    %v2197 = vadd.f32 %v2187, %v2189
    %v2198 = vmin.f32 %v2190, 0.0
    %v2199 = vmin.f32 %v2191, 0.0
    %v2200 = vmin.f32 %v2192, 0.0
    %v2201 = vmin.f32 %v2193, 0.0
    %v2202 = vmin.f32 %v2194, 0.0
    %v2203 = vmin.f32 %v2195, 0.0
    %v2204 = vmin.f32 %v2196, 0.0
    %v2205 = vmin.f32 %v2197, 0.0
    %v2206 = vadd.f32 %v2170, %v2198
    %v2207 = vadd.f32 %v2171, %v2199
    %v2208 = vadd.f32 %v2172, %v2200
    %v2209 = vadd.f32 %v2173, %v2201
    %v2210 = vadd.f32 %v2174, %v2202
    %v2211 = vadd.f32 %v2175, %v2203
    %v2212 = vadd.f32 %v2176, %v2204
    %v2213 = vadd.f32 %v2177, %v2205
    %s2214 = sld [smem:[#allocation3 + $0x3c]]
    %v2215 = vstv %s2214
    %v2216 = vmul.f32 %v44, %v2215
    %v2217 = vmul.f32 %v45, %v2215
    %v2218 = vmul.f32 %v46, %v2215
    %v2219 = vmul.f32 %v47, %v2215
    %v2220 = vmul.f32 %v48, %v2215
    %v2221 = vmul.f32 %v49, %v2215
    %v2222 = vmul.f32 %v50, %v2215
    %v2223 = vmul.f32 %v51, %v2215
    %s2224 = sld [smem:[#allocation6 + $0x3c]]
    %v2225 = vstv %s2224
    %v2226 = vadd.f32 %v2216, %v2225
    %v2227 = vadd.f32 %v2217, %v2225
    %v2228 = vadd.f32 %v2218, %v2225
    %v2229 = vadd.f32 %v2219, %v2225
    %v2230 = vadd.f32 %v2220, %v2225
    %v2231 = vadd.f32 %v2221, %v2225
    %v2232 = vadd.f32 %v2222, %v2225
    %v2233 = vadd.f32 %v2223, %v2225
    %v2234 = vmin.f32 %v2226, 0.0
    %v2235 = vmin.f32 %v2227, 0.0
    %v2236 = vmin.f32 %v2228, 0.0
    %v2237 = vmin.f32 %v2229, 0.0
    %v2238 = vmin.f32 %v2230, 0.0
    %v2239 = vmin.f32 %v2231, 0.0
    %v2240 = vmin.f32 %v2232, 0.0
    %v2241 = vmin.f32 %v2233, 0.0
    %v2242 = vadd.f32 %v2206, %v2234
    %v2243 = vadd.f32 %v2207, %v2235
    %v2244 = vadd.f32 %v2208, %v2236
    %v2245 = vadd.f32 %v2209, %v2237
    %v2246 = vadd.f32 %v2210, %v2238
    %v2247 = vadd.f32 %v2211, %v2239
    %v2248 = vadd.f32 %v2212, %v2240
    %v2249 = vadd.f32 %v2213, %v2241
    %s2250 = sld [smem:[#allocation3 + $0x3d]]
    %v2251 = vstv %s2250
    %v2252 = vmul.f32 %v44, %v2251
    %v2253 = vmul.f32 %v45, %v2251
    %v2254 = vmul.f32 %v46, %v2251
    %v2255 = vmul.f32 %v47, %v2251
    %v2256 = vmul.f32 %v48, %v2251
    %v2257 = vmul.f32 %v49, %v2251
    %v2258 = vmul.f32 %v50, %v2251
    %v2259 = vmul.f32 %v51, %v2251
    %s2260 = sld [smem:[#allocation6 + $0x3d]]
    %v2261 = vstv %s2260
    %v2262 = vadd.f32 %v2252, %v2261
    %v2263 = vadd.f32 %v2253, %v2261
    %v2264 = vadd.f32 %v2254, %v2261
    %v2265 = vadd.f32 %v2255, %v2261
    %v2266 = vadd.f32 %v2256, %v2261
    %v2267 = vadd.f32 %v2257, %v2261
    %v2268 = vadd.f32 %v2258, %v2261
    %v2269 = vadd.f32 %v2259, %v2261
    %v2270 = vmin.f32 %v2262, 0.0
    %v2271 = vmin.f32 %v2263, 0.0
    %v2272 = vmin.f32 %v2264, 0.0
    %v2273 = vmin.f32 %v2265, 0.0
    %v2274 = vmin.f32 %v2266, 0.0
    %v2275 = vmin.f32 %v2267, 0.0
    %v2276 = vmin.f32 %v2268, 0.0
    %v2277 = vmin.f32 %v2269, 0.0
    %v2278 = vadd.f32 %v2242, %v2270
    %v2279 = vadd.f32 %v2243, %v2271
    %v2280 = vadd.f32 %v2244, %v2272
    %v2281 = vadd.f32 %v2245, %v2273
    %v2282 = vadd.f32 %v2246, %v2274
    %v2283 = vadd.f32 %v2247, %v2275
    %v2284 = vadd.f32 %v2248, %v2276
    %v2285 = vadd.f32 %v2249, %v2277
    %s2286 = sld [smem:[#allocation3 + $0x3e]]
    %v2287 = vstv %s2286
    %v2288 = vmul.f32 %v44, %v2287
    %v2289 = vmul.f32 %v45, %v2287
    %v2290 = vmul.f32 %v46, %v2287
    %v2291 = vmul.f32 %v47, %v2287
    %v2292 = vmul.f32 %v48, %v2287
    %v2293 = vmul.f32 %v49, %v2287
    %v2294 = vmul.f32 %v50, %v2287
    %v2295 = vmul.f32 %v51, %v2287
    %s2296 = sld [smem:[#allocation6 + $0x3e]]
    %v2297 = vstv %s2296
    %v2298 = vadd.f32 %v2288, %v2297
    %v2299 = vadd.f32 %v2289, %v2297
    %v2300 = vadd.f32 %v2290, %v2297
    %v2301 = vadd.f32 %v2291, %v2297
    %v2302 = vadd.f32 %v2292, %v2297
    %v2303 = vadd.f32 %v2293, %v2297
    %v2304 = vadd.f32 %v2294, %v2297
    %v2305 = vadd.f32 %v2295, %v2297
    %v2306 = vmin.f32 %v2298, 0.0
    %v2307 = vmin.f32 %v2299, 0.0
    %v2308 = vmin.f32 %v2300, 0.0
    %v2309 = vmin.f32 %v2301, 0.0
    %v2310 = vmin.f32 %v2302, 0.0
    %v2311 = vmin.f32 %v2303, 0.0
    %v2312 = vmin.f32 %v2304, 0.0
    %v2313 = vmin.f32 %v2305, 0.0
    %v2314 = vadd.f32 %v2278, %v2306
    %v2315 = vadd.f32 %v2279, %v2307
    %v2316 = vadd.f32 %v2280, %v2308
    %v2317 = vadd.f32 %v2281, %v2309
    %v2318 = vadd.f32 %v2282, %v2310
    %v2319 = vadd.f32 %v2283, %v2311
    %v2320 = vadd.f32 %v2284, %v2312
    %v2321 = vadd.f32 %v2285, %v2313
    %s2322 = sld [smem:[#allocation3 + $0x3f]]
    %v2323 = vstv %s2322
    %v2324 = vmul.f32 %v44, %v2323
    %v2325 = vmul.f32 %v45, %v2323
    %v2326 = vmul.f32 %v46, %v2323
    %v2327 = vmul.f32 %v47, %v2323
    %v2328 = vmul.f32 %v48, %v2323
    %v2329 = vmul.f32 %v49, %v2323
    %v2330 = vmul.f32 %v50, %v2323
    %v2331 = vmul.f32 %v51, %v2323
    %s2332 = sld [smem:[#allocation6 + $0x3f]]
    %v2333 = vstv %s2332
    %v2334 = vadd.f32 %v2324, %v2333
    %v2335 = vadd.f32 %v2325, %v2333
    %v2336 = vadd.f32 %v2326, %v2333
    %v2337 = vadd.f32 %v2327, %v2333
    %v2338 = vadd.f32 %v2328, %v2333
    %v2339 = vadd.f32 %v2329, %v2333
    %v2340 = vadd.f32 %v2330, %v2333
    %v2341 = vadd.f32 %v2331, %v2333
    %v2342 = vmin.f32 %v2334, 0.0
    %v2343 = vmin.f32 %v2335, 0.0
    %v2344 = vmin.f32 %v2336, 0.0
    %v2345 = vmin.f32 %v2337, 0.0
    %v2346 = vmin.f32 %v2338, 0.0
    %v2347 = vmin.f32 %v2339, 0.0
    %v2348 = vmin.f32 %v2340, 0.0
    %v2349 = vmin.f32 %v2341, 0.0
    %v2350 = vadd.f32 %v2314, %v2342
    %v2351 = vadd.f32 %v2315, %v2343
    %v2352 = vadd.f32 %v2316, %v2344
    %v2353 = vadd.f32 %v2317, %v2345
    %v2354 = vadd.f32 %v2318, %v2346
    %v2355 = vadd.f32 %v2319, %v2347
    %v2356 = vadd.f32 %v2320, %v2348
    %v2357 = vadd.f32 %v2321, %v2349
    %2358 = vst [vmem:[#allocation8] sm:$0xff] %v2350
    %2359 = vst [vmem:[#allocation8 + $0x8] sm:$0xff] %v2351
    %2360 = vst [vmem:[#allocation8 + $0x10] sm:$0xff] %v2352
    %2361 = vst [vmem:[#allocation8 + $0x18] sm:$0xff] %v2353
    %2362 = vst [vmem:[#allocation8 + $0x20] sm:$0xff] %v2354
    %2363 = vst [vmem:[#allocation8 + $0x28] sm:$0xff] %v2355
    %2364 = vst [vmem:[#allocation8 + $0x30] sm:$0xff] %v2356
    %2365 = vst [vmem:[#allocation8 + $0x38] sm:$0xff] %v2357
    // Predicated region
    $region26: #{tpu_custom_call.1} parent=1 // pred_check
      _
    $region27: #{tpu_custom_call.1} parent=1 // pred_check_branch
      %2367 = sbr.rel (0) target = $region29
    $region28: #{tpu_custom_call.1} parent=1 // pred_region
      %s2369 = ssub.s32 1024, 128
      %2370 = vsyncadd [#allocation4], %s2369
      %s2371 = sshll.u32 [#allocation8], 4
      %s2372 = int_to_ptr.vmem [resolvable:$true] %s2371
      %2377 = dma.vmem_to_hbm [thread:$0]  %s2372, 128, %s4, [#allocation4], 128, 128, 8
    $region29: #{tpu_custom_call.1} parent=1 // pred_fallthru
      _
    // Predicated region
    $region30: #{tpu_custom_call.1} parent=1 // pred_check
      _
    $region31: #{tpu_custom_call.1} parent=1 // pred_check_branch
      %2379 = sbr.rel (0) target = $region33
    $region32: #{tpu_custom_call.1} parent=1 // pred_region
      %2380 = dma.done [#allocation4], 1024
    $region33: #{tpu_custom_call.1} parent=1 // pred_fallthru
      _
    %2381 = vsyncpa [#allocation4], 1
    %2382 = vsyncpa [#allocation5], 1
    %2383 = vsyncpa [#allocation7], 1

</llo_original>
